<compile_context>
chip_gen: v7x
topology: tpu7x:2x2x1
jax: 0.10.0
libtpu: 0.0.40
codegen_flags: <defaults>
</compile_context>

<pallas_src>
import numpy as np
import jax
import jax.numpy as jnp
from jax.experimental import pallas as pl
from jax.experimental.pallas import tpu as pltpu


# ----------------------------- config (static) -----------------------------
DIM = 32
HEADS = 2
HEAD_DIM = 8
INNER_DIM = HEADS * HEAD_DIM          # 16
WINDOW_SIZE = 4
WS2 = WINDOW_SIZE * WINDOW_SIZE       # 16
SHIFTED = True
RELATIVE_POS_EMBEDDING = True
SCALE = HEAD_DIM ** (-0.5)

B = 2
N_H = 8
N_W = 8
NW_H = N_H // WINDOW_SIZE             # 2
NW_W = N_W // WINDOW_SIZE             # 2
NUM_WINDOWS = NW_H * NW_W             # 4
DISP = WINDOW_SIZE // 2               # 2


def _num_grid_steps():
    # v7x has two TensorCores per chip -> keep the batch split across the grid so each
    # core takes one element; single-TC v5e/v6e -> one grid step (no per-step overhead,
    # full-height MXU pushes).  Total resident data is ~50 KB, so VMEM never binds.
    try:
        kind = jax.devices()[0].device_kind.lower()
        if "v7" in kind:
            return min(B, 2)
        return 1
    except Exception:
        return 1


NSTEPS = _num_grid_steps()
BB = B // NSTEPS                      # batch elements per grid step
NWIN = BB * NUM_WINDOWS               # (batch, window) pairs per grid step
RROWS = NWIN * WS2                    # rows per grid step


# ----------------------------- helpers (numpy) ------------------------------
def create_mask(window_size, displacement, upper_lower, left_right):
    mask = np.zeros((window_size ** 2, window_size ** 2), dtype=np.float32)
    if upper_lower:
        mask[-displacement * window_size:, :-displacement * window_size] = -np.inf
        mask[:-displacement * window_size, -displacement * window_size:] = -np.inf
    if left_right:
        mask = mask.reshape(window_size, window_size, window_size, window_size)
        mask[:, -displacement:, :, :-displacement] = -np.inf
        mask[:, :-displacement, :, -displacement:] = -np.inf
        mask = mask.reshape(window_size ** 2, window_size ** 2)
    return mask


def get_relative_distances(window_size):
    indices = np.array([[x, y] for x in range(window_size) for y in range(window_size)])
    return indices[None, :, :] - indices[:, None, :]


# ----------------------------- Pallas kernel --------------------------------
def window_attn_kernel(x_ref, wq_ref, wk_ref, wv_ref, wout_ref, bout_ref, bias_ref, o_ref):
    # x_ref:    (RROWS, DIM)                 rows ordered (batch, window, pixel)
    # wq/wk/wv: (HEADS, DIM, HEAD_DIM)       per-head projection slabs (no lane slicing)
    # wout_ref: (INNER_DIM, DIM)
    # bout_ref: (1, DIM)
    # bias_ref: (NWIN, WS2, WS2)             pos bias + shift masks, tiled over batch
    # o_ref:    (RROWS, DIM)
    x = x_ref[...]                                                   # (RROWS, 32)
    bias = bias_ref[...]                                             # (NWIN, 16, 16)

    head_outs = []
    for h in range(HEADS):                                           # static unroll (2)
        q = jnp.dot(x, wq_ref[h], preferred_element_type=jnp.float32)   # (RROWS, 8)
        k = jnp.dot(x, wk_ref[h], preferred_element_type=jnp.float32)
        v = jnp.dot(x, wv_ref[h], preferred_element_type=jnp.float32)

        qw = q.reshape(NWIN, WS2, HEAD_DIM)
        kw = k.reshape(NWIN, WS2, HEAD_DIM)
        vw = v.reshape(NWIN, WS2, HEAD_DIM)

        # Batched scores over all (batch, window) pairs of this head (no explicit k.T).
        s = jnp.einsum('wid,wjd->wij', qw, kw,
                       preferred_element_type=jnp.float32) * SCALE + bias
        # Slab softmax (one max / exp / sum / reciprocal sequence per head).
        s = s - jnp.max(s, axis=-1, keepdims=True)
        e = jnp.exp(s)
        attn = e * pl.reciprocal(jnp.sum(e, axis=-1, keepdims=True), approx=True)

        o = jnp.einsum('wij,wjd->wid', attn, vw,
                       preferred_element_type=jnp.float32)           # (NWIN, 16, 8)
        head_outs.append(o.reshape(RROWS, HEAD_DIM))

    # One output projection for everything: (RROWS, 16) @ (16, 32).
    y = jnp.concatenate(head_outs, axis=-1)                          # (RROWS, 16)
    o_ref[...] = (jnp.dot(y, wout_ref[...], preferred_element_type=jnp.float32)
                  + bout_ref[...])


def _attention_call(xw, wq, wk, wv, w_out, b_out, bias_step):
    return pl.pallas_call(
        window_attn_kernel,
        out_shape=jax.ShapeDtypeStruct((B * NUM_WINDOWS * WS2, DIM), jnp.float32),
        grid_spec=pltpu.PrefetchScalarGridSpec(
            num_scalar_prefetch=0,
            grid=(NSTEPS,),
            in_specs=[
                pl.BlockSpec((RROWS, DIM), lambda i: (i, 0)),
                pl.BlockSpec((HEADS, DIM, HEAD_DIM), lambda i: (0, 0, 0)),
                pl.BlockSpec((HEADS, DIM, HEAD_DIM), lambda i: (0, 0, 0)),
                pl.BlockSpec((HEADS, DIM, HEAD_DIM), lambda i: (0, 0, 0)),
                pl.BlockSpec((INNER_DIM, DIM), lambda i: (0, 0)),
                pl.BlockSpec((1, DIM), lambda i: (0, 0)),
                pl.BlockSpec((NWIN, WS2, WS2), lambda i: (0, 0, 0)),
            ],
            out_specs=pl.BlockSpec((RROWS, DIM), lambda i: (i, 0)),
        ),
        compiler_params=pltpu.CompilerParams(
            dimension_semantics=("parallel",)),
        cost_estimate=pl.CostEstimate(
            flops=660_000, transcendentals=4_300, bytes_accessed=50_000),
    )(xw, wq, wk, wv, w_out, b_out, bias_step)


@jax.jit
def window_attention_forward(x, wq, wk, wv, w_out, b_out, bias_step):
    # x: (B, H, W, DIM) channel-last
    if SHIFTED:
        x = jnp.roll(x, shift=(-DISP, -DISP), axis=(1, 2))

    # window partition: (B, H, W, C) -> (B*NUM_WINDOWS*WS2, C), rows = (b, wh, ww, i, j)
    xw = x.reshape(B, NW_H, WINDOW_SIZE, NW_W, WINDOW_SIZE, DIM)
    xw = xw.transpose(0, 1, 3, 2, 4, 5).reshape(B * NUM_WINDOWS * WS2, DIM)

    out = _attention_call(xw, wq, wk, wv, w_out, b_out, bias_step)

    # window merge: (B*NUM_WINDOWS*WS2, C) -> (B, H, W, C)
    out = out.reshape(B, NW_H, NW_W, WINDOW_SIZE, WINDOW_SIZE, DIM)
    out = out.transpose(0, 1, 3, 2, 4, 5).reshape(B, N_H, N_W, DIM)

    if SHIFTED:
        out = jnp.roll(out, shift=(DISP, DISP), axis=(1, 2))
    return out


# ----------------------------- parameter prep (once) -------------------------
def prepare_params(w_qkv, w_out, b_out, pos_bias, ul_mask, lr_mask):
    # Per-head projection slabs: inner dim of the Linear is (head, head_dim) head-major.
    def per_head(block):
        return jnp.transpose(block.reshape(DIM, HEADS, HEAD_DIM), (1, 0, 2))  # (H, DIM, hd)

    wq = per_head(w_qkv[:, :INNER_DIM])
    wk = per_head(w_qkv[:, INNER_DIM:2 * INNER_DIM])
    wv = per_head(w_qkv[:, 2 * INNER_DIM:])

    # Precombine per-window bias: relative-position bias + shift masks, then tile over
    # the batch elements that share a grid step (rows are batch-major then window).
    bias_list = []
    for w in range(NUM_WINDOWS):
        bw = pos_bias
        if SHIFTED:
            if w >= NUM_WINDOWS - NW_W:          # bottom row of windows
                bw = bw + ul_mask
            if (w % NW_W) == NW_W - 1:           # rightmost column of windows
                bw = bw + lr_mask
        bias_list.append(bw)
    bias_all = jnp.stack(bias_list, axis=0)                       # (NUM_WINDOWS, 16, 16)
    bias_step = jnp.tile(bias_all, (BB, 1, 1))                    # (NWIN, 16, 16)

    return wq, wk, wv, w_out, b_out, bias_step


# ----------------------------- plain-JAX reference --------------------------
def window_attention_ref(x, w_qkv, w_out, b_out, pos_bias, ul_mask, lr_mask):
    hp = jax.lax.Precision.HIGHEST
    if SHIFTED:
        x = jnp.roll(x, shift=(-DISP, -DISP), axis=(1, 2))
    qkv = jnp.dot(x, w_qkv, precision=hp)                        # (B,H,W,3*INNER)

    def to_windows(t):
        t = t.reshape(B, NW_H, WINDOW_SIZE, NW_W, WINDOW_SIZE, HEADS, HEAD_DIM)
        t = t.transpose(0, 5, 1, 3, 2, 4, 6)
        return t.reshape(B, HEADS, NUM_WINDOWS, WS2, HEAD_DIM)

    q = to_windows(qkv[..., :INNER_DIM])
    k = to_windows(qkv[..., INNER_DIM:2 * INNER_DIM])
    v = to_windows(qkv[..., 2 * INNER_DIM:])

    dots = jnp.einsum('bhwid,bhwjd->bhwij', q, k, precision=hp) * SCALE
    dots = dots + pos_bias
    if SHIFTED:
        dots = dots.at[:, :, -NW_W:].add(ul_mask)
        dots = dots.at[:, :, NW_W - 1::NW_W].add(lr_mask)
    attn = jax.nn.softmax(dots, axis=-1)
    out = jnp.einsum('bhwij,bhwjd->bhwid', attn, v, precision=hp)

    out = out.reshape(B, HEADS, NW_H, NW_W, WINDOW_SIZE, WINDOW_SIZE, HEAD_DIM)
    out = out.transpose(0, 2, 4, 3, 5, 1, 6).reshape(B, N_H, N_W, INNER_DIM)
    out = jnp.dot(out, w_out, precision=hp) + b_out[0]
    if SHIFTED:
        out = jnp.roll(out, shift=(DISP, DISP), axis=(1, 2))
    return out


# ----------------------------- main ------------------------------------------
if __name__ == "__main__":
    key = jax.random.PRNGKey(0)
    k_x, k_qkv, k_out_w, k_out_b, k_pos = jax.random.split(key, 5)

    x = jax.random.normal(k_x, (B, N_H, N_W, DIM), dtype=jnp.float32)

    # deterministic parameter init (shapes follow the nn.Module __init__)
    w_qkv = jax.random.normal(k_qkv, (DIM, 3 * INNER_DIM), dtype=jnp.float32) * 0.1
    w_out = jax.random.normal(k_out_w, (INNER_DIM, DIM), dtype=jnp.float32) * 0.1
    b_out = jax.random.normal(k_out_b, (1, DIM), dtype=jnp.float32) * 0.1

    if RELATIVE_POS_EMBEDDING:
        pos_embedding = jax.random.normal(
            k_pos, (2 * WINDOW_SIZE - 1, 2 * WINDOW_SIZE - 1), dtype=jnp.float32)
        rel = get_relative_distances(WINDOW_SIZE) + WINDOW_SIZE - 1     # (WS2, WS2, 2)
        pos_bias = pos_embedding[rel[:, :, 0], rel[:, :, 1]]            # (WS2, WS2)
    else:
        pos_bias = jax.random.normal(k_pos, (WS2, WS2), dtype=jnp.float32)
    pos_bias = jnp.asarray(pos_bias, dtype=jnp.float32)

    if SHIFTED:
        ul_mask = jnp.asarray(create_mask(WINDOW_SIZE, DISP, True, False))
        lr_mask = jnp.asarray(create_mask(WINDOW_SIZE, DISP, False, True))
    else:
        ul_mask = jnp.zeros((WS2, WS2), jnp.float32)
        lr_mask = jnp.zeros((WS2, WS2), jnp.float32)

    # Parameter-only prep done once, outside the forward path.
    wq, wk, wv, w_out_p, b_out_p, bias_step = prepare_params(
        w_qkv, w_out, b_out, pos_bias, ul_mask, lr_mask)

    out = window_attention_forward(x, wq, wk, wv, w_out_p, b_out_p, bias_step)
    out = jax.block_until_ready(out)

    ref = window_attention_ref(x, w_qkv, w_out, b_out, pos_bias, ul_mask, lr_mask)
    ref = jax.block_until_ready(ref)

    assert out.shape == (B, N_H, N_W, DIM)
    np.testing.assert_allclose(np.asarray(out), np.asarray(ref), rtol=2e-2, atol=2e-2)

    print("KERNEL_OK")
</pallas_src>

<mosaic_0001>
module attributes {stable_mosaic.version = 11 : i64} {
  func.func @window_attn_kernel(%arg0: i32, %arg1: memref<128x32xf32, #tpu.memory_space<vmem>>, %arg2: memref<2x32x8xf32, #tpu.memory_space<vmem>>, %arg3: memref<2x32x8xf32, #tpu.memory_space<vmem>>, %arg4: memref<2x32x8xf32, #tpu.memory_space<vmem>>, %arg5: memref<16x32xf32, #tpu.memory_space<vmem>>, %arg6: memref<1x32xf32, #tpu.memory_space<vmem>>, %arg7: memref<8x16x16xf32, #tpu.memory_space<vmem>>, %arg8: memref<128x32xf32, #tpu.memory_space<vmem>>) attributes {dimension_semantics = [#tpu.dimension_semantics<parallel>], iteration_bounds = array<i64: 1>, scalar_prefetch = 0 : i64, scratch_operands = 0 : i64, tpu.core_type = #tpu.core_type<tc>, window_params = [{transform_indices = @transform_0, window_bounds = array<i64: 128, 32>}, {pipeline_mode = #tpu.pipeline_mode<synchronous>, transform_indices = @transform_1, window_bounds = array<i64: 2, 32, 8>}, {pipeline_mode = #tpu.pipeline_mode<synchronous>, transform_indices = @transform_2, window_bounds = array<i64: 2, 32, 8>}, {pipeline_mode = #tpu.pipeline_mode<synchronous>, transform_indices = @transform_3, window_bounds = array<i64: 2, 32, 8>}, {pipeline_mode = #tpu.pipeline_mode<synchronous>, transform_indices = @transform_4, window_bounds = array<i64: 16, 32>}, {pipeline_mode = #tpu.pipeline_mode<synchronous>, transform_indices = @transform_5, window_bounds = array<i64: 1, 32>}, {pipeline_mode = #tpu.pipeline_mode<synchronous>, transform_indices = @transform_6, window_bounds = array<i64: 8, 16, 16>}, {transform_indices = @transform_7, window_bounds = array<i64: 128, 32>}]} {
    %c0 = arith.constant 0 : index
    %c0_0 = arith.constant 0 : index
    %0 = vector.load %arg1[%c0, %c0_0] : memref<128x32xf32, #tpu.memory_space<vmem>>, vector<128x32xf32>
    %c0_1 = arith.constant 0 : index
    %c0_2 = arith.constant 0 : index
    %c0_3 = arith.constant 0 : index
    %1 = vector.load %arg7[%c0_1, %c0_2, %c0_3] : memref<8x16x16xf32, #tpu.memory_space<vmem>>, vector<8x16x16xf32>
    %c0_4 = arith.constant 0 : index
    %c0_5 = arith.constant 0 : index
    %c0_6 = arith.constant 0 : index
    %2 = vector.load %arg2[%c0_4, %c0_5, %c0_6] : memref<2x32x8xf32, #tpu.memory_space<vmem>>, vector<1x32x8xf32>
    %3 = vector.shape_cast %2 : vector<1x32x8xf32> to vector<32x8xf32>
    %cst = arith.constant dense<0.000000e+00> : vector<128x8xf32>
    %4 = tpu.matmul %0, %3, %cst {dimension_numbers = #tpu.dot_dimension_numbers<[1], [0], [0], [1], [0, 0, 1, 1], [], []>} : vector<128x32xf32>, vector<32x8xf32>, vector<128x8xf32> -> vector<128x8xf32>
    %c0_7 = arith.constant 0 : index
    %c0_8 = arith.constant 0 : index
    %c0_9 = arith.constant 0 : index
    %5 = vector.load %arg3[%c0_7, %c0_8, %c0_9] : memref<2x32x8xf32, #tpu.memory_space<vmem>>, vector<1x32x8xf32>
    %6 = vector.shape_cast %5 : vector<1x32x8xf32> to vector<32x8xf32>
    %cst_10 = arith.constant dense<0.000000e+00> : vector<128x8xf32>
    %7 = tpu.matmul %0, %6, %cst_10 {dimension_numbers = #tpu.dot_dimension_numbers<[1], [0], [0], [1], [0, 0, 1, 1], [], []>} : vector<128x32xf32>, vector<32x8xf32>, vector<128x8xf32> -> vector<128x8xf32>
    %c0_11 = arith.constant 0 : index
    %c0_12 = arith.constant 0 : index
    %c0_13 = arith.constant 0 : index
    %8 = vector.load %arg4[%c0_11, %c0_12, %c0_13] : memref<2x32x8xf32, #tpu.memory_space<vmem>>, vector<1x32x8xf32>
    %9 = vector.shape_cast %8 : vector<1x32x8xf32> to vector<32x8xf32>
    %cst_14 = arith.constant dense<0.000000e+00> : vector<128x8xf32>
    %10 = tpu.matmul %0, %9, %cst_14 {dimension_numbers = #tpu.dot_dimension_numbers<[1], [0], [0], [1], [0, 0, 1, 1], [], []>} : vector<128x32xf32>, vector<32x8xf32>, vector<128x8xf32> -> vector<128x8xf32>
    %11 = vector.shape_cast %4 : vector<128x8xf32> to vector<8x16x8xf32>
    %12 = vector.shape_cast %7 : vector<128x8xf32> to vector<8x16x8xf32>
    %13 = vector.shape_cast %10 : vector<128x8xf32> to vector<8x16x8xf32>
    "tpu.trace_start"() <{level = 10 : i32, message = "wid,wjd->wij"}> : () -> ()
    %cst_15 = arith.constant dense<0.000000e+00> : vector<8x16x16xf32>
    %14 = tpu.matmul %11, %12, %cst_15 {dimension_numbers = #tpu.dot_dimension_numbers<[2], [2], [1], [1], [0, 0, 0, 1, 1, 1], [0], [0]>} : vector<8x16x8xf32>, vector<8x16x8xf32>, vector<8x16x16xf32> -> vector<8x16x16xf32>
    "tpu.trace_stop"() : () -> ()
    %cst_16 = arith.constant 0.353553385 : f32
    %15 = vector.broadcast %cst_16 : f32 to vector<8x16x16xf32>
    %16 = arith.mulf %14, %15 : vector<8x16x16xf32>
    %17 = arith.addf %16, %1 : vector<8x16x16xf32>
    %cst_17 = arith.constant dense<0xFF800000> : vector<8x16xf32>
    %18 = vector.multi_reduction <maximumf>, %17, %cst_17 [2] : vector<8x16x16xf32> to vector<8x16xf32>
    %19 = vector.shape_cast %18 : vector<8x16xf32> to vector<8x16x1xf32>
    %20 = vector.broadcast %19 : vector<8x16x1xf32> to vector<8x16x16xf32>
    %21 = arith.subf %17, %20 : vector<8x16x16xf32>
    %22 = math.exp %21 : vector<8x16x16xf32>
    %cst_18 = arith.constant dense<0.000000e+00> : vector<8x16xf32>
    %23 = vector.multi_reduction <add>, %22, %cst_18 [2] : vector<8x16x16xf32> to vector<8x16xf32>
    %24 = vector.shape_cast %23 : vector<8x16xf32> to vector<8x16x1xf32>
    %25 = tpu.reciprocal %24 {approx = true} : vector<8x16x1xf32> -> vector<8x16x1xf32>
    %26 = vector.broadcast %25 : vector<8x16x1xf32> to vector<8x16x16xf32>
    %27 = arith.mulf %22, %26 : vector<8x16x16xf32>
    "tpu.trace_start"() <{level = 10 : i32, message = "wij,wjd->wid"}> : () -> ()
    %cst_19 = arith.constant dense<0.000000e+00> : vector<8x16x8xf32>
    %28 = tpu.matmul %27, %13, %cst_19 {dimension_numbers = #tpu.dot_dimension_numbers<[2], [1], [1], [2], [0, 0, 0, 1, 1, 2], [0], [0]>} : vector<8x16x16xf32>, vector<8x16x8xf32>, vector<8x16x8xf32> -> vector<8x16x8xf32>
    "tpu.trace_stop"() : () -> ()
    %29 = vector.shape_cast %28 : vector<8x16x8xf32> to vector<128x8xf32>
    %c1 = arith.constant 1 : index
    %c0_20 = arith.constant 0 : index
    %c0_21 = arith.constant 0 : index
    %30 = vector.load %arg2[%c1, %c0_20, %c0_21] : memref<2x32x8xf32, #tpu.memory_space<vmem>>, vector<1x32x8xf32>
    %31 = vector.shape_cast %30 : vector<1x32x8xf32> to vector<32x8xf32>
    %cst_22 = arith.constant dense<0.000000e+00> : vector<128x8xf32>
    %32 = tpu.matmul %0, %31, %cst_22 {dimension_numbers = #tpu.dot_dimension_numbers<[1], [0], [0], [1], [0, 0, 1, 1], [], []>} : vector<128x32xf32>, vector<32x8xf32>, vector<128x8xf32> -> vector<128x8xf32>
    %c1_23 = arith.constant 1 : index
    %c0_24 = arith.constant 0 : index
    %c0_25 = arith.constant 0 : index
    %33 = vector.load %arg3[%c1_23, %c0_24, %c0_25] : memref<2x32x8xf32, #tpu.memory_space<vmem>>, vector<1x32x8xf32>
    %34 = vector.shape_cast %33 : vector<1x32x8xf32> to vector<32x8xf32>
    %cst_26 = arith.constant dense<0.000000e+00> : vector<128x8xf32>
    %35 = tpu.matmul %0, %34, %cst_26 {dimension_numbers = #tpu.dot_dimension_numbers<[1], [0], [0], [1], [0, 0, 1, 1], [], []>} : vector<128x32xf32>, vector<32x8xf32>, vector<128x8xf32> -> vector<128x8xf32>
    %c1_27 = arith.constant 1 : index
    %c0_28 = arith.constant 0 : index
    %c0_29 = arith.constant 0 : index
    %36 = vector.load %arg4[%c1_27, %c0_28, %c0_29] : memref<2x32x8xf32, #tpu.memory_space<vmem>>, vector<1x32x8xf32>
    %37 = vector.shape_cast %36 : vector<1x32x8xf32> to vector<32x8xf32>
    %cst_30 = arith.constant dense<0.000000e+00> : vector<128x8xf32>
    %38 = tpu.matmul %0, %37, %cst_30 {dimension_numbers = #tpu.dot_dimension_numbers<[1], [0], [0], [1], [0, 0, 1, 1], [], []>} : vector<128x32xf32>, vector<32x8xf32>, vector<128x8xf32> -> vector<128x8xf32>
    %39 = vector.shape_cast %32 : vector<128x8xf32> to vector<8x16x8xf32>
    %40 = vector.shape_cast %35 : vector<128x8xf32> to vector<8x16x8xf32>
    %41 = vector.shape_cast %38 : vector<128x8xf32> to vector<8x16x8xf32>
    "tpu.trace_start"() <{level = 10 : i32, message = "wid,wjd->wij"}> : () -> ()
    %cst_31 = arith.constant dense<0.000000e+00> : vector<8x16x16xf32>
    %42 = tpu.matmul %39, %40, %cst_31 {dimension_numbers = #tpu.dot_dimension_numbers<[2], [2], [1], [1], [0, 0, 0, 1, 1, 1], [0], [0]>} : vector<8x16x8xf32>, vector<8x16x8xf32>, vector<8x16x16xf32> -> vector<8x16x16xf32>
    "tpu.trace_stop"() : () -> ()
    %cst_32 = arith.constant 0.353553385 : f32
    %43 = vector.broadcast %cst_32 : f32 to vector<8x16x16xf32>
    %44 = arith.mulf %42, %43 : vector<8x16x16xf32>
    %45 = arith.addf %44, %1 : vector<8x16x16xf32>
    %cst_33 = arith.constant dense<0xFF800000> : vector<8x16xf32>
    %46 = vector.multi_reduction <maximumf>, %45, %cst_33 [2] : vector<8x16x16xf32> to vector<8x16xf32>
    %47 = vector.shape_cast %46 : vector<8x16xf32> to vector<8x16x1xf32>
    %48 = vector.broadcast %47 : vector<8x16x1xf32> to vector<8x16x16xf32>
    %49 = arith.subf %45, %48 : vector<8x16x16xf32>
    %50 = math.exp %49 : vector<8x16x16xf32>
    %cst_34 = arith.constant dense<0.000000e+00> : vector<8x16xf32>
    %51 = vector.multi_reduction <add>, %50, %cst_34 [2] : vector<8x16x16xf32> to vector<8x16xf32>
    %52 = vector.shape_cast %51 : vector<8x16xf32> to vector<8x16x1xf32>
    %53 = tpu.reciprocal %52 {approx = true} : vector<8x16x1xf32> -> vector<8x16x1xf32>
    %54 = vector.broadcast %53 : vector<8x16x1xf32> to vector<8x16x16xf32>
    %55 = arith.mulf %50, %54 : vector<8x16x16xf32>
    "tpu.trace_start"() <{level = 10 : i32, message = "wij,wjd->wid"}> : () -> ()
    %cst_35 = arith.constant dense<0.000000e+00> : vector<8x16x8xf32>
    %56 = tpu.matmul %55, %41, %cst_35 {dimension_numbers = #tpu.dot_dimension_numbers<[2], [1], [1], [2], [0, 0, 0, 1, 1, 2], [0], [0]>} : vector<8x16x16xf32>, vector<8x16x8xf32>, vector<8x16x8xf32> -> vector<8x16x8xf32>
    "tpu.trace_stop"() : () -> ()
    %57 = vector.shape_cast %56 : vector<8x16x8xf32> to vector<128x8xf32>
    %58 = tpu.concatenate %29, %57 in 1 : vector<128x8xf32>, vector<128x8xf32> -> vector<128x16xf32>
    %c0_36 = arith.constant 0 : index
    %c0_37 = arith.constant 0 : index
    %59 = vector.load %arg5[%c0_36, %c0_37] : memref<16x32xf32, #tpu.memory_space<vmem>>, vector<16x32xf32>
    %cst_38 = arith.constant dense<0.000000e+00> : vector<128x32xf32>
    %60 = tpu.matmul %58, %59, %cst_38 {dimension_numbers = #tpu.dot_dimension_numbers<[1], [0], [0], [1], [0, 0, 1, 1], [], []>} : vector<128x16xf32>, vector<16x32xf32>, vector<128x32xf32> -> vector<128x32xf32>
    %c0_39 = arith.constant 0 : index
    %c0_40 = arith.constant 0 : index
    %61 = vector.load %arg6[%c0_39, %c0_40] : memref<1x32xf32, #tpu.memory_space<vmem>>, vector<1x32xf32>
    %62 = vector.broadcast %61 : vector<1x32xf32> to vector<128x32xf32>
    %63 = arith.addf %60, %62 : vector<128x32xf32>
    %c0_41 = arith.constant 0 : index
    %c0_42 = arith.constant 0 : index
    %64 = vector.load %arg8[%c0_41, %c0_42] : memref<128x32xf32, #tpu.memory_space<vmem>>, vector<128x32xf32>
    tpu.vector_store %arg8[%c0_41, %c0_42], %63 {strides = array<i32>} : memref<128x32xf32, #tpu.memory_space<vmem>>, vector<128x32xf32>,
    return
  }
  func.func @transform_0(%arg0: i32) -> (i32, i32) {
    %c0_i32 = arith.constant 0 : i32
    %c0_i32_0 = arith.constant 0 : i32
    return %arg0, %c0_i32 : i32, i32
  }
  func.func @transform_1(%arg0: i32) -> (i32, i32, i32) {
    %c0_i32 = arith.constant 0 : i32
    %c0_i32_0 = arith.constant 0 : i32
    %c0_i32_1 = arith.constant 0 : i32
    %c0_i32_2 = arith.constant 0 : i32
    return %c0_i32, %c0_i32_0, %c0_i32_1 : i32, i32, i32
  }
  func.func @transform_2(%arg0: i32) -> (i32, i32, i32) {
    %c0_i32 = arith.constant 0 : i32
    %c0_i32_0 = arith.constant 0 : i32
    %c0_i32_1 = arith.constant 0 : i32
    %c0_i32_2 = arith.constant 0 : i32
    return %c0_i32, %c0_i32_0, %c0_i32_1 : i32, i32, i32
  }
  func.func @transform_3(%arg0: i32) -> (i32, i32, i32) {
    %c0_i32 = arith.constant 0 : i32
    %c0_i32_0 = arith.constant 0 : i32
    %c0_i32_1 = arith.constant 0 : i32
    %c0_i32_2 = arith.constant 0 : i32
    return %c0_i32, %c0_i32_0, %c0_i32_1 : i32, i32, i32
  }
  func.func @transform_4(%arg0: i32) -> (i32, i32) {
    %c0_i32 = arith.constant 0 : i32
    %c0_i32_0 = arith.constant 0 : i32
    %c0_i32_1 = arith.constant 0 : i32
    return %c0_i32, %c0_i32_0 : i32, i32
  }
  func.func @transform_5(%arg0: i32) -> (i32, i32) {
    %c0_i32 = arith.constant 0 : i32
    %c0_i32_0 = arith.constant 0 : i32
    %c0_i32_1 = arith.constant 0 : i32
    return %c0_i32, %c0_i32_0 : i32, i32
  }
  func.func @transform_6(%arg0: i32) -> (i32, i32, i32) {
    %c0_i32 = arith.constant 0 : i32
    %c0_i32_0 = arith.constant 0 : i32
    %c0_i32_1 = arith.constant 0 : i32
    %c0_i32_2 = arith.constant 0 : i32
    return %c0_i32, %c0_i32_0, %c0_i32_1 : i32, i32, i32
  }
  func.func @transform_7(%arg0: i32) -> (i32, i32) {
    %c0_i32 = arith.constant 0 : i32
    %c0_i32_0 = arith.constant 0 : i32
    return %arg0, %c0_i32 : i32, i32
  }
}

</mosaic_0001>

<llo_original>
// kernel: window_attention_forward.1
$region0: #{window_attention_forward.1}
  #allocation0 [shape = 'u32[]', space=smem, size = 0x4, offset = 0x4, fixed_abs, tag = 'smem constant byte address 0x4 - core index']
  #allocation1 [shape = 'u32[144,128]{1,0:T(1,128)}', space=vmem, size = 0x12000, scoped, tag = 'internal scratch']
  %s0 = inlined_call_operand.vmem [shape: f32[128,32], index: 0, kind: input, shape index: {}]
  %s1 = inlined_call_operand.vmem [shape: f32[2,32,8], index: 1, kind: input, shape index: {}]
  %s2 = inlined_call_operand.vmem [shape: f32[2,32,8], index: 2, kind: input, shape index: {}]
  %s3 = inlined_call_operand.vmem [shape: f32[2,32,8], index: 3, kind: input, shape index: {}]
  %s4 = inlined_call_operand.vmem [shape: f32[16,32], index: 4, kind: input, shape index: {}]
  %s5 = inlined_call_operand.vmem [shape: f32[1,32], index: 5, kind: input, shape index: {}]
  %s6 = inlined_call_operand.vmem [shape: f32[8,16,16], index: 6, kind: input, shape index: {}]
  %s7 = inlined_call_operand.vmem [shape: f32[128,32], index: 7, kind: output, shape index: {}]
  %s8 = sld [smem:[#allocation0]]
  $region38: #{window_attention_forward.1} parent=0
    _
  %s10 = ssub.s32 1, %s8
  %s11 = scalar_select 0, %s10, %s8
  // Predicated region
  $region2: #{window_attention_forward.1} parent=0 // pred_check
    _
  $region3: #{window_attention_forward.1} parent=0 // pred_check_branch
    %13 = sbr.rel (0) target = $region5
  $region4: #{window_attention_forward.1} parent=0 // pred_region
    _
  $region5: #{window_attention_forward.1} parent=0 // pred_fallthru
    _
  // Predicated region
  $region6: #{window_attention_forward.1} parent=0 // pred_check
    _
  $region7: #{window_attention_forward.1} parent=0 // pred_check_branch
    %15 = sbr.rel (0) target = $region9
  $region8: #{window_attention_forward.1} parent=0 // pred_region
    _
  $region9: #{window_attention_forward.1} parent=0 // pred_fallthru
    _
  // Predicated region
  $region10: #{window_attention_forward.1} parent=0 // pred_check
    _
  $region11: #{window_attention_forward.1} parent=0 // pred_check_branch
    %17 = sbr.rel (0) target = $region13
  $region12: #{window_attention_forward.1} parent=0 // pred_region
    _
  $region13: #{window_attention_forward.1} parent=0 // pred_fallthru
    _
  // Predicated region
  $region14: #{window_attention_forward.1} parent=0 // pred_check
    _
  $region15: #{window_attention_forward.1} parent=0 // pred_check_branch
    %19 = sbr.rel (0) target = $region17
  $region16: #{window_attention_forward.1} parent=0 // pred_region
    _
  $region17: #{window_attention_forward.1} parent=0 // pred_fallthru
    _
  // Predicated region
  $region18: #{window_attention_forward.1} parent=0 // pred_check
    _
  $region19: #{window_attention_forward.1} parent=0 // pred_check_branch
    %21 = sbr.rel (0) target = $region21
  $region20: #{window_attention_forward.1} parent=0 // pred_region
    _
  $region21: #{window_attention_forward.1} parent=0 // pred_fallthru
    _
  // Predicated region
  $region22: #{window_attention_forward.1} parent=0 // pred_check
    _
  $region23: #{window_attention_forward.1} parent=0 // pred_check_branch
    %23 = sbr.rel (0) target = $region25
  $region24: #{window_attention_forward.1} parent=0 // pred_region
    _
  $region25: #{window_attention_forward.1} parent=0 // pred_fallthru
    _
  // Predicated region
  $region26: #{window_attention_forward.1} parent=0 // pred_check
    _
  $region27: #{window_attention_forward.1} parent=0 // pred_check_branch
    %25 = sbr.rel (0) target = $region29
  $region28: #{window_attention_forward.1} parent=0 // pred_region
    _
  $region29: #{window_attention_forward.1} parent=0 // pred_fallthru
    _
  %v26 = vld [vmem:[%s0] sm:$0xff]
  %v27 = vld [vmem:[%s0 + $0x8] sm:$0xff]
  %v28 = vld [vmem:[%s0 + $0x10] sm:$0xff]
  %v29 = vld [vmem:[%s0 + $0x18] sm:$0xff]
  %v30 = vld [vmem:[%s0 + $0x20] sm:$0xff]
  %v31 = vld [vmem:[%s0 + $0x28] sm:$0xff]
  %v32 = vld [vmem:[%s0 + $0x30] sm:$0xff]
  %v33 = vld [vmem:[%s0 + $0x38] sm:$0xff]
  %v34 = vld [vmem:[%s0 + $0x40] sm:$0xff]
  %v35 = vld [vmem:[%s0 + $0x48] sm:$0xff]
  %v36 = vld [vmem:[%s0 + $0x50] sm:$0xff]
  %v37 = vld [vmem:[%s0 + $0x58] sm:$0xff]
  %v38 = vld [vmem:[%s0 + $0x60] sm:$0xff]
  %v39 = vld [vmem:[%s0 + $0x68] sm:$0xff]
  %v40 = vld [vmem:[%s0 + $0x70] sm:$0xff]
  %v41 = vld [vmem:[%s0 + $0x78] sm:$0xff]
  %v42 = vld [vmem:[%s6] sm:$0xff]
  %v43 = vld [vmem:[%s6 + $0x8] sm:$0xff]
  %v44 = vld [vmem:[%s6 + $0x10] sm:$0xff]
  %v45 = vld [vmem:[%s6 + $0x18] sm:$0xff]
  %v46 = vld [vmem:[%s6 + $0x20] sm:$0xff]
  %v47 = vld [vmem:[%s6 + $0x28] sm:$0xff]
  %v48 = vld [vmem:[%s6 + $0x30] sm:$0xff]
  %v49 = vld [vmem:[%s6 + $0x38] sm:$0xff]
  %v50 = vld [vmem:[%s6 + $0x40] sm:$0xff]
  %v51 = vld [vmem:[%s6 + $0x48] sm:$0xff]
  %v52 = vld [vmem:[%s6 + $0x50] sm:$0xff]
  %v53 = vld [vmem:[%s6 + $0x58] sm:$0xff]
  %v54 = vld [vmem:[%s6 + $0x60] sm:$0xff]
  %v55 = vld [vmem:[%s6 + $0x68] sm:$0xff]
  %v56 = vld [vmem:[%s6 + $0x70] sm:$0xff]
  %v57 = vld [vmem:[%s6 + $0x78] sm:$0xff]
  %v58 = vld [vmem:[%s1] sm:$0xff]
  %v59 = vld [vmem:[%s1 + $0x8] sm:$0xff]
  %v60 = vld [vmem:[%s1 + $0x10] sm:$0xff]
  %v61 = vld [vmem:[%s1 + $0x18] sm:$0xff]
  %vm62 = vcmask 261120
  %v64 = vsel %vm62, %v26, 0
  %v67 = vsel %vm62, %v27, 0
  %v70 = vsel %vm62, %v28, 0
  %v73 = vsel %vm62, %v29, 0
  %v76 = vsel %vm62, %v30, 0
  %v79 = vsel %vm62, %v31, 0
  %v82 = vsel %vm62, %v32, 0
  %v85 = vsel %vm62, %v33, 0
  %v88 = vsel %vm62, %v34, 0
  %v91 = vsel %vm62, %v35, 0
  %v94 = vsel %vm62, %v36, 0
  %v97 = vsel %vm62, %v37, 0
  %v100 = vsel %vm62, %v38, 0
  %v103 = vsel %vm62, %v39, 0
  %v106 = vsel %vm62, %v40, 0
  %v109 = vsel %vm62, %v41, 0
  %111 = vmatprep.subr.mxu0 0.0
  %112 = vmatpush1.msra.mxu0 %v58
  %113 = vmatprep.subr.mxu0 0.0
  %114 = vmatpush1.msra.mxu0 %v59
  %115 = vmatprep.subr.mxu0 0.0
  %116 = vmatpush1.msra.mxu0 %v60
  %117 = vmatprep.subr.mxu0 0.0
  %118 = vmatpush1.msra.mxu0 %v61
  %119 = vmatprep.subr.mxu0 0.0
  %120 = vmatpush1.msra.mxu0 0.0
  %121 = vmatprep.subr.mxu0 0.0
  %122 = vmatpush1.msra.mxu0 0.0
  %123 = vmatprep.subr.mxu0 0.0
  %124 = vmatpush1.msra.mxu0 0.0
  %125 = vmatprep.subr.mxu0 0.0
  %126 = vmatpush1.msra.mxu0 0.0
  %127 = vmatprep.subr.mxu0 0.0
  %128 = vmatpush1.msra.mxu0 0.0
  %129 = vmatprep.subr.mxu0 0.0
  %130 = vmatpush1.msra.mxu0 0.0
  %131 = vmatprep.subr.mxu0 0.0
  %132 = vmatpush1.msra.mxu0 0.0
  %133 = vmatprep.subr.mxu0 0.0
  %134 = vmatpush1.msra.mxu0 0.0
  %135 = vmatprep.subr.mxu0 0.0
  %136 = vmatpush1.msra.mxu0 0.0
  %137 = vmatprep.subr.mxu0 0.0
  %138 = vmatpush1.msra.mxu0 0.0
  %139 = vmatprep.subr.mxu0 0.0
  %140 = vmatpush1.msra.mxu0 0.0
  %141 = vmatprep.subr.mxu0 0.0
  %142 = vmatpush1.msra.mxu0 0.0
  %143 = vmatprep.subr.mxu0 0.0
  %144 = vmatpush1.msra.mxu0 0.0
  %145 = vmatprep.subr.mxu0 0.0
  %146 = vmatpush1.msra.mxu0 0.0
  %147 = vmatprep.subr.mxu0 0.0
  %148 = vmatpush1.msra.mxu0 0.0
  %149 = vmatprep.subr.mxu0 0.0
  %150 = vmatpush1.msra.mxu0 0.0
  %151 = vmatprep.subr.mxu0 0.0
  %152 = vmatpush1.msra.mxu0 0.0
  %153 = vmatprep.subr.mxu0 0.0
  %154 = vmatpush1.msra.mxu0 0.0
  %155 = vmatprep.subr.mxu0 0.0
  %156 = vmatpush1.msra.mxu0 0.0
  %157 = vmatprep.subr.mxu0 0.0
  %158 = vmatpush1.msra.mxu0 0.0
  %159 = vmatprep.subr.mxu0 0.0
  %160 = vmatpush1.msra.mxu0 0.0
  %161 = vmatprep.subr.mxu0 0.0
  %162 = vmatpush1.msra.mxu0 0.0
  %163 = vmatprep.subr.mxu0 0.0
  %164 = vmatpush1.msra.mxu0 0.0
  %165 = vmatprep.subr.mxu0 0.0
  %166 = vmatpush1.msra.mxu0 0.0
  %167 = vmatprep.subr.mxu0 0.0
  %168 = vmatpush1.msra.mxu0 0.0
  %169 = vmatprep.subr.mxu0 0.0
  %170 = vmatpush1.msra.mxu0 0.0
  %171 = vmatprep.subr.mxu0 0.0
  %172 = vmatpush1.msra.mxu0 0.0
  %173 = vmatprep.subr.mxu0 0.0
  %174 = vmatpush1.msra.mxu0 0.0
  %175 = vmatprep.mubr.f32.mxu0 0.0
  %176 = vmatmul.mubr.f32.gmra.mrb[0].mxu0 %v64
  %v177 = vpop.f32.mrb[0].mxu0
  %v178 = vadd.f32 0.0, %v177
  %v179 = vpop.f32.mrb[0].mxu0
  %180 = vmatprep.mubr.f32.mxu0 0.0
  %181 = vmatmul.mubr.f32.gmra.mrb[0].mxu0 %v67
  %v182 = vpop.f32.mrb[0].mxu0
  %v183 = vadd.f32 0.0, %v182
  %v184 = vpop.f32.mrb[0].mxu0
  %185 = vmatprep.mubr.f32.mxu0 0.0
  %186 = vmatmul.mubr.f32.gmra.mrb[0].mxu0 %v70
  %v187 = vpop.f32.mrb[0].mxu0
  %v188 = vadd.f32 0.0, %v187
  %v189 = vpop.f32.mrb[0].mxu0
  %190 = vmatprep.mubr.f32.mxu0 0.0
  %191 = vmatmul.mubr.f32.gmra.mrb[0].mxu0 %v73
  %v192 = vpop.f32.mrb[0].mxu0
  %v193 = vadd.f32 0.0, %v192
  %v194 = vpop.f32.mrb[0].mxu0
  %195 = vmatprep.mubr.f32.mxu0 0.0
  %196 = vmatmul.mubr.f32.gmra.mrb[0].mxu0 %v76
  %v197 = vpop.f32.mrb[0].mxu0
  %v198 = vadd.f32 0.0, %v197
  %v199 = vpop.f32.mrb[0].mxu0
  %200 = vmatprep.mubr.f32.mxu0 0.0
  %201 = vmatmul.mubr.f32.gmra.mrb[0].mxu0 %v79
  %v202 = vpop.f32.mrb[0].mxu0
  %v203 = vadd.f32 0.0, %v202
  %v204 = vpop.f32.mrb[0].mxu0
  %205 = vmatprep.mubr.f32.mxu0 0.0
  %206 = vmatmul.mubr.f32.gmra.mrb[0].mxu0 %v82
  %v207 = vpop.f32.mrb[0].mxu0
  %v208 = vadd.f32 0.0, %v207
  %v209 = vpop.f32.mrb[0].mxu0
  %210 = vmatprep.mubr.f32.mxu0 0.0
  %211 = vmatmul.mubr.f32.gmra.mrb[0].mxu0 %v85
  %v212 = vpop.f32.mrb[0].mxu0
  %v213 = vadd.f32 0.0, %v212
  %v214 = vpop.f32.mrb[0].mxu0
  %215 = vmatprep.mubr.f32.mxu0 0.0
  %216 = vmatmul.mubr.f32.gmra.mrb[0].mxu0 %v88
  %v217 = vpop.f32.mrb[0].mxu0
  %v218 = vadd.f32 0.0, %v217
  %v219 = vpop.f32.mrb[0].mxu0
  %220 = vmatprep.mubr.f32.mxu0 0.0
  %221 = vmatmul.mubr.f32.gmra.mrb[0].mxu0 %v91
  %v222 = vpop.f32.mrb[0].mxu0
  %v223 = vadd.f32 0.0, %v222
  %v224 = vpop.f32.mrb[0].mxu0
  %225 = vmatprep.mubr.f32.mxu0 0.0
  %226 = vmatmul.mubr.f32.gmra.mrb[0].mxu0 %v94
  %v227 = vpop.f32.mrb[0].mxu0
  %v228 = vadd.f32 0.0, %v227
  %v229 = vpop.f32.mrb[0].mxu0
  %230 = vmatprep.mubr.f32.mxu0 0.0
  %231 = vmatmul.mubr.f32.gmra.mrb[0].mxu0 %v97
  %v232 = vpop.f32.mrb[0].mxu0
  %v233 = vadd.f32 0.0, %v232
  %v234 = vpop.f32.mrb[0].mxu0
  %235 = vmatprep.mubr.f32.mxu0 0.0
  %236 = vmatmul.mubr.f32.gmra.mrb[0].mxu0 %v100
  %v237 = vpop.f32.mrb[0].mxu0
  %v238 = vadd.f32 0.0, %v237
  %v239 = vpop.f32.mrb[0].mxu0
  %240 = vmatprep.mubr.f32.mxu0 0.0
  %241 = vmatmul.mubr.f32.gmra.mrb[0].mxu0 %v103
  %v242 = vpop.f32.mrb[0].mxu0
  %v243 = vadd.f32 0.0, %v242
  %v244 = vpop.f32.mrb[0].mxu0
  %245 = vmatprep.mubr.f32.mxu0 0.0
  %246 = vmatmul.mubr.f32.gmra.mrb[0].mxu0 %v106
  %v247 = vpop.f32.mrb[0].mxu0
  %v248 = vadd.f32 0.0, %v247
  %v249 = vpop.f32.mrb[0].mxu0
  %250 = vmatprep.mubr.f32.mxu0 0.0
  %251 = vmatmul.mubr.f32.gmra.mrb[0].mxu0 %v109
  %v252 = vpop.f32.mrb[0].mxu0
  %v253 = vadd.f32 0.0, %v252
  %v254 = vpop.f32.mrb[0].mxu0
  %255 = vdwg.mxu0
  %v256 = vld [vmem:[%s2] sm:$0xff]
  %v257 = vld [vmem:[%s2 + $0x8] sm:$0xff]
  %v258 = vld [vmem:[%s2 + $0x10] sm:$0xff]
  %v259 = vld [vmem:[%s2 + $0x18] sm:$0xff]
  %260 = vmatprep.subr.mxu0 0.0
  %261 = vmatpush1.msra.mxu0 %v256
  %262 = vmatprep.subr.mxu0 0.0
  %263 = vmatpush1.msra.mxu0 %v257
  %264 = vmatprep.subr.mxu0 0.0
  %265 = vmatpush1.msra.mxu0 %v258
  %266 = vmatprep.subr.mxu0 0.0
  %267 = vmatpush1.msra.mxu0 %v259
  %268 = vmatprep.subr.mxu0 0.0
  %269 = vmatpush1.msra.mxu0 0.0
  %270 = vmatprep.subr.mxu0 0.0
  %271 = vmatpush1.msra.mxu0 0.0
  %272 = vmatprep.subr.mxu0 0.0
  %273 = vmatpush1.msra.mxu0 0.0
  %274 = vmatprep.subr.mxu0 0.0
  %275 = vmatpush1.msra.mxu0 0.0
  %276 = vmatprep.subr.mxu0 0.0
  %277 = vmatpush1.msra.mxu0 0.0
  %278 = vmatprep.subr.mxu0 0.0
  %279 = vmatpush1.msra.mxu0 0.0
  %280 = vmatprep.subr.mxu0 0.0
  %281 = vmatpush1.msra.mxu0 0.0
  %282 = vmatprep.subr.mxu0 0.0
  %283 = vmatpush1.msra.mxu0 0.0
  %284 = vmatprep.subr.mxu0 0.0
  %285 = vmatpush1.msra.mxu0 0.0
  %286 = vmatprep.subr.mxu0 0.0
  %287 = vmatpush1.msra.mxu0 0.0
  %288 = vmatprep.subr.mxu0 0.0
  %289 = vmatpush1.msra.mxu0 0.0
  %290 = vmatprep.subr.mxu0 0.0
  %291 = vmatpush1.msra.mxu0 0.0
  %292 = vmatprep.subr.mxu0 0.0
  %293 = vmatpush1.msra.mxu0 0.0
  %294 = vmatprep.subr.mxu0 0.0
  %295 = vmatpush1.msra.mxu0 0.0
  %296 = vmatprep.subr.mxu0 0.0
  %297 = vmatpush1.msra.mxu0 0.0
  %298 = vmatprep.subr.mxu0 0.0
  %299 = vmatpush1.msra.mxu0 0.0
  %300 = vmatprep.subr.mxu0 0.0
  %301 = vmatpush1.msra.mxu0 0.0
  %302 = vmatprep.subr.mxu0 0.0
  %303 = vmatpush1.msra.mxu0 0.0
  %304 = vmatprep.subr.mxu0 0.0
  %305 = vmatpush1.msra.mxu0 0.0
  %306 = vmatprep.subr.mxu0 0.0
  %307 = vmatpush1.msra.mxu0 0.0
  %308 = vmatprep.subr.mxu0 0.0
  %309 = vmatpush1.msra.mxu0 0.0
  %310 = vmatprep.subr.mxu0 0.0
  %311 = vmatpush1.msra.mxu0 0.0
  %312 = vmatprep.subr.mxu0 0.0
  %313 = vmatpush1.msra.mxu0 0.0
  %314 = vmatprep.subr.mxu0 0.0
  %315 = vmatpush1.msra.mxu0 0.0
  %316 = vmatprep.subr.mxu0 0.0
  %317 = vmatpush1.msra.mxu0 0.0
  %318 = vmatprep.subr.mxu0 0.0
  %319 = vmatpush1.msra.mxu0 0.0
  %320 = vmatprep.subr.mxu0 0.0
  %321 = vmatpush1.msra.mxu0 0.0
  %322 = vmatprep.subr.mxu0 0.0
  %323 = vmatpush1.msra.mxu0 0.0
  %324 = vmatprep.mubr.f32.mxu0 0.0
  %325 = vmatmul.mubr.f32.gmra.mrb[0].mxu0 %v64
  %v326 = vpop.f32.mrb[0].mxu0
  %v327 = vadd.f32 0.0, %v326
  %v328 = vpop.f32.mrb[0].mxu0
  %329 = vmatprep.mubr.f32.mxu0 0.0
  %330 = vmatmul.mubr.f32.gmra.mrb[0].mxu0 %v67
  %v331 = vpop.f32.mrb[0].mxu0
  %v332 = vadd.f32 0.0, %v331
  %v333 = vpop.f32.mrb[0].mxu0
  %334 = vmatprep.mubr.f32.mxu0 0.0
  %335 = vmatmul.mubr.f32.gmra.mrb[0].mxu0 %v70
  %v336 = vpop.f32.mrb[0].mxu0
  %v337 = vadd.f32 0.0, %v336
  %v338 = vpop.f32.mrb[0].mxu0
  %339 = vmatprep.mubr.f32.mxu0 0.0
  %340 = vmatmul.mubr.f32.gmra.mrb[0].mxu0 %v73
  %v341 = vpop.f32.mrb[0].mxu0
  %v342 = vadd.f32 0.0, %v341
  %v343 = vpop.f32.mrb[0].mxu0
  %344 = vmatprep.mubr.f32.mxu0 0.0
  %345 = vmatmul.mubr.f32.gmra.mrb[0].mxu0 %v76
  %v346 = vpop.f32.mrb[0].mxu0
  %v347 = vadd.f32 0.0, %v346
  %v348 = vpop.f32.mrb[0].mxu0
  %349 = vmatprep.mubr.f32.mxu0 0.0
  %350 = vmatmul.mubr.f32.gmra.mrb[0].mxu0 %v79
  %v351 = vpop.f32.mrb[0].mxu0
  %v352 = vadd.f32 0.0, %v351
  %v353 = vpop.f32.mrb[0].mxu0
  %354 = vmatprep.mubr.f32.mxu0 0.0
  %355 = vmatmul.mubr.f32.gmra.mrb[0].mxu0 %v82
  %v356 = vpop.f32.mrb[0].mxu0
  %v357 = vadd.f32 0.0, %v356
  %v358 = vpop.f32.mrb[0].mxu0
  %359 = vmatprep.mubr.f32.mxu0 0.0
  %360 = vmatmul.mubr.f32.gmra.mrb[0].mxu0 %v85
  %v361 = vpop.f32.mrb[0].mxu0
  %v362 = vadd.f32 0.0, %v361
  %v363 = vpop.f32.mrb[0].mxu0
  %364 = vmatprep.mubr.f32.mxu0 0.0
  %365 = vmatmul.mubr.f32.gmra.mrb[0].mxu0 %v88
  %v366 = vpop.f32.mrb[0].mxu0
  %v367 = vadd.f32 0.0, %v366
  %v368 = vpop.f32.mrb[0].mxu0
  %369 = vmatprep.mubr.f32.mxu0 0.0
  %370 = vmatmul.mubr.f32.gmra.mrb[0].mxu0 %v91
  %v371 = vpop.f32.mrb[0].mxu0
  %v372 = vadd.f32 0.0, %v371
  %v373 = vpop.f32.mrb[0].mxu0
  %374 = vmatprep.mubr.f32.mxu0 0.0
  %375 = vmatmul.mubr.f32.gmra.mrb[0].mxu0 %v94
  %v376 = vpop.f32.mrb[0].mxu0
  %v377 = vadd.f32 0.0, %v376
  %v378 = vpop.f32.mrb[0].mxu0
  %379 = vmatprep.mubr.f32.mxu0 0.0
  %380 = vmatmul.mubr.f32.gmra.mrb[0].mxu0 %v97
  %v381 = vpop.f32.mrb[0].mxu0
  %v382 = vadd.f32 0.0, %v381
  %v383 = vpop.f32.mrb[0].mxu0
  %384 = vmatprep.mubr.f32.mxu0 0.0
  %385 = vmatmul.mubr.f32.gmra.mrb[0].mxu0 %v100
  %v386 = vpop.f32.mrb[0].mxu0
  %v387 = vadd.f32 0.0, %v386
  %v388 = vpop.f32.mrb[0].mxu0
  %389 = vmatprep.mubr.f32.mxu0 0.0
  %390 = vmatmul.mubr.f32.gmra.mrb[0].mxu0 %v103
  %v391 = vpop.f32.mrb[0].mxu0
  %v392 = vadd.f32 0.0, %v391
  %v393 = vpop.f32.mrb[0].mxu0
  %394 = vmatprep.mubr.f32.mxu0 0.0
  %395 = vmatmul.mubr.f32.gmra.mrb[0].mxu0 %v106
  %v396 = vpop.f32.mrb[0].mxu0
  %v397 = vadd.f32 0.0, %v396
  %v398 = vpop.f32.mrb[0].mxu0
  %399 = vmatprep.mubr.f32.mxu0 0.0
  %400 = vmatmul.mubr.f32.gmra.mrb[0].mxu0 %v109
  %v401 = vpop.f32.mrb[0].mxu0
  %v402 = vadd.f32 0.0, %v401
  %v403 = vpop.f32.mrb[0].mxu0
  %404 = vdwg.mxu0
  %v405 = vld [vmem:[%s3] sm:$0xff]
  %v406 = vld [vmem:[%s3 + $0x8] sm:$0xff]
  %v407 = vld [vmem:[%s3 + $0x10] sm:$0xff]
  %v408 = vld [vmem:[%s3 + $0x18] sm:$0xff]
  %409 = vmatprep.subr.mxu0 0.0
  %410 = vmatpush1.msra.mxu0 %v405
  %411 = vmatprep.subr.mxu0 0.0
  %412 = vmatpush1.msra.mxu0 %v406
  %413 = vmatprep.subr.mxu0 0.0
  %414 = vmatpush1.msra.mxu0 %v407
  %415 = vmatprep.subr.mxu0 0.0
  %416 = vmatpush1.msra.mxu0 %v408
  %417 = vmatprep.subr.mxu0 0.0
  %418 = vmatpush1.msra.mxu0 0.0
  %419 = vmatprep.subr.mxu0 0.0
  %420 = vmatpush1.msra.mxu0 0.0
  %421 = vmatprep.subr.mxu0 0.0
  %422 = vmatpush1.msra.mxu0 0.0
  %423 = vmatprep.subr.mxu0 0.0
  %424 = vmatpush1.msra.mxu0 0.0
  %425 = vmatprep.subr.mxu0 0.0
  %426 = vmatpush1.msra.mxu0 0.0
  %427 = vmatprep.subr.mxu0 0.0
  %428 = vmatpush1.msra.mxu0 0.0
  %429 = vmatprep.subr.mxu0 0.0
  %430 = vmatpush1.msra.mxu0 0.0
  %431 = vmatprep.subr.mxu0 0.0
  %432 = vmatpush1.msra.mxu0 0.0
  %433 = vmatprep.subr.mxu0 0.0
  %434 = vmatpush1.msra.mxu0 0.0
  %435 = vmatprep.subr.mxu0 0.0
  %436 = vmatpush1.msra.mxu0 0.0
  %437 = vmatprep.subr.mxu0 0.0
  %438 = vmatpush1.msra.mxu0 0.0
  %439 = vmatprep.subr.mxu0 0.0
  %440 = vmatpush1.msra.mxu0 0.0
  %441 = vmatprep.subr.mxu0 0.0
  %442 = vmatpush1.msra.mxu0 0.0
  %443 = vmatprep.subr.mxu0 0.0
  %444 = vmatpush1.msra.mxu0 0.0
  %445 = vmatprep.subr.mxu0 0.0
  %446 = vmatpush1.msra.mxu0 0.0
  %447 = vmatprep.subr.mxu0 0.0
  %448 = vmatpush1.msra.mxu0 0.0
  %449 = vmatprep.subr.mxu0 0.0
  %450 = vmatpush1.msra.mxu0 0.0
  %451 = vmatprep.subr.mxu0 0.0
  %452 = vmatpush1.msra.mxu0 0.0
  %453 = vmatprep.subr.mxu0 0.0
  %454 = vmatpush1.msra.mxu0 0.0
  %455 = vmatprep.subr.mxu0 0.0
  %456 = vmatpush1.msra.mxu0 0.0
  %457 = vmatprep.subr.mxu0 0.0
  %458 = vmatpush1.msra.mxu0 0.0
  %459 = vmatprep.subr.mxu0 0.0
  %460 = vmatpush1.msra.mxu0 0.0
  %461 = vmatprep.subr.mxu0 0.0
  %462 = vmatpush1.msra.mxu0 0.0
  %463 = vmatprep.subr.mxu0 0.0
  %464 = vmatpush1.msra.mxu0 0.0
  %465 = vmatprep.subr.mxu0 0.0
  %466 = vmatpush1.msra.mxu0 0.0
  %467 = vmatprep.subr.mxu0 0.0
  %468 = vmatpush1.msra.mxu0 0.0
  %469 = vmatprep.subr.mxu0 0.0
  %470 = vmatpush1.msra.mxu0 0.0
  %471 = vmatprep.subr.mxu0 0.0
  %472 = vmatpush1.msra.mxu0 0.0
  %473 = vmatprep.mubr.f32.mxu0 0.0
  %474 = vmatmul.mubr.f32.gmra.mrb[0].mxu0 %v64
  %v475 = vpop.f32.mrb[0].mxu0
  %v476 = vadd.f32 0.0, %v475
  %v477 = vpop.f32.mrb[0].mxu0
  %478 = vmatprep.mubr.f32.mxu0 0.0
  %479 = vmatmul.mubr.f32.gmra.mrb[0].mxu0 %v67
  %v480 = vpop.f32.mrb[0].mxu0
  %v481 = vadd.f32 0.0, %v480
  %v482 = vpop.f32.mrb[0].mxu0
  %483 = vmatprep.mubr.f32.mxu0 0.0
  %484 = vmatmul.mubr.f32.gmra.mrb[0].mxu0 %v70
  %v485 = vpop.f32.mrb[0].mxu0
  %v486 = vadd.f32 0.0, %v485
  %v487 = vpop.f32.mrb[0].mxu0
  %488 = vmatprep.mubr.f32.mxu0 0.0
  %489 = vmatmul.mubr.f32.gmra.mrb[0].mxu0 %v73
  %v490 = vpop.f32.mrb[0].mxu0
  %v491 = vadd.f32 0.0, %v490
  %v492 = vpop.f32.mrb[0].mxu0
  %493 = vmatprep.mubr.f32.mxu0 0.0
  %494 = vmatmul.mubr.f32.gmra.mrb[0].mxu0 %v76
  %v495 = vpop.f32.mrb[0].mxu0
  %v496 = vadd.f32 0.0, %v495
  %v497 = vpop.f32.mrb[0].mxu0
  %498 = vmatprep.mubr.f32.mxu0 0.0
  %499 = vmatmul.mubr.f32.gmra.mrb[0].mxu0 %v79
  %v500 = vpop.f32.mrb[0].mxu0
  %v501 = vadd.f32 0.0, %v500
  %v502 = vpop.f32.mrb[0].mxu0
  %503 = vmatprep.mubr.f32.mxu0 0.0
  %504 = vmatmul.mubr.f32.gmra.mrb[0].mxu0 %v82
  %v505 = vpop.f32.mrb[0].mxu0
  %v506 = vadd.f32 0.0, %v505
  %v507 = vpop.f32.mrb[0].mxu0
  %508 = vmatprep.mubr.f32.mxu0 0.0
  %509 = vmatmul.mubr.f32.gmra.mrb[0].mxu0 %v85
  %v510 = vpop.f32.mrb[0].mxu0
  %v511 = vadd.f32 0.0, %v510
  %v512 = vpop.f32.mrb[0].mxu0
  %513 = vmatprep.mubr.f32.mxu0 0.0
  %514 = vmatmul.mubr.f32.gmra.mrb[0].mxu0 %v88
  %v515 = vpop.f32.mrb[0].mxu0
  %v516 = vadd.f32 0.0, %v515
  %v517 = vpop.f32.mrb[0].mxu0
  %518 = vmatprep.mubr.f32.mxu0 0.0
  %519 = vmatmul.mubr.f32.gmra.mrb[0].mxu0 %v91
  %v520 = vpop.f32.mrb[0].mxu0
  %v521 = vadd.f32 0.0, %v520
  %v522 = vpop.f32.mrb[0].mxu0
  %523 = vmatprep.mubr.f32.mxu0 0.0
  %524 = vmatmul.mubr.f32.gmra.mrb[0].mxu0 %v94
  %v525 = vpop.f32.mrb[0].mxu0
  %v526 = vadd.f32 0.0, %v525
  %v527 = vpop.f32.mrb[0].mxu0
  %528 = vmatprep.mubr.f32.mxu0 0.0
  %529 = vmatmul.mubr.f32.gmra.mrb[0].mxu0 %v97
  %v530 = vpop.f32.mrb[0].mxu0
  %v531 = vadd.f32 0.0, %v530
  %v532 = vpop.f32.mrb[0].mxu0
  %533 = vmatprep.mubr.f32.mxu0 0.0
  %534 = vmatmul.mubr.f32.gmra.mrb[0].mxu0 %v100
  %v535 = vpop.f32.mrb[0].mxu0
  %v536 = vadd.f32 0.0, %v535
  %v537 = vpop.f32.mrb[0].mxu0
  %538 = vmatprep.mubr.f32.mxu0 0.0
  %539 = vmatmul.mubr.f32.gmra.mrb[0].mxu0 %v103
  %v540 = vpop.f32.mrb[0].mxu0
  %v541 = vadd.f32 0.0, %v540
  %v542 = vpop.f32.mrb[0].mxu0
  %543 = vmatprep.mubr.f32.mxu0 0.0
  %544 = vmatmul.mubr.f32.gmra.mrb[0].mxu0 %v106
  %v545 = vpop.f32.mrb[0].mxu0
  %v546 = vadd.f32 0.0, %v545
  %v547 = vpop.f32.mrb[0].mxu0
  %548 = vmatprep.mubr.f32.mxu0 0.0
  %549 = vmatmul.mubr.f32.gmra.mrb[0].mxu0 %v109
  %v550 = vpop.f32.mrb[0].mxu0
  %v551 = vadd.f32 0.0, %v550
  %v552 = vpop.f32.mrb[0].mxu0
  %553 = vdwg.mxu0
  %vm554 = vcmask 64512
  %v556 = vsel %vm554, %v178, 0
  %v559 = vsel %vm554, %v183, 0
  %v562 = vsel %vm554, %v327, 0
  %v565 = vsel %vm554, %v332, 0
  %567 = vmatprep.subr.mxu0 0.0
  %568 = vmatpush1.xpose.msra.mxu0 %v562
  %569 = vmatprep.subr.mxu0 0.0
  %570 = vmatpush1.xpose.msra.mxu0 %v565
  %571 = vmatprep.subr.mxu0 0.0
  %572 = vmatpush1.xpose.msra.mxu0 0.0
  %573 = vmatprep.subr.mxu0 0.0
  %574 = vmatpush1.xpose.msra.mxu0 0.0
  %575 = vmatprep.subr.mxu0 0.0
  %576 = vmatpush1.xpose.msra.mxu0 0.0
  %577 = vmatprep.subr.mxu0 0.0
  %578 = vmatpush1.xpose.msra.mxu0 0.0
  %579 = vmatprep.subr.mxu0 0.0
  %580 = vmatpush1.xpose.msra.mxu0 0.0
  %581 = vmatprep.subr.mxu0 0.0
  %582 = vmatpush1.xpose.msra.mxu0 0.0
  %583 = vmatprep.subr.mxu0 0.0
  %584 = vmatpush1.xpose.msra.mxu0 0.0
  %585 = vmatprep.subr.mxu0 0.0
  %586 = vmatpush1.xpose.msra.mxu0 0.0
  %587 = vmatprep.subr.mxu0 0.0
  %588 = vmatpush1.xpose.msra.mxu0 0.0
  %589 = vmatprep.subr.mxu0 0.0
  %590 = vmatpush1.xpose.msra.mxu0 0.0
  %591 = vmatprep.subr.mxu0 0.0
  %592 = vmatpush1.xpose.msra.mxu0 0.0
  %593 = vmatprep.subr.mxu0 0.0
  %594 = vmatpush1.xpose.msra.mxu0 0.0
  %595 = vmatprep.subr.mxu0 0.0
  %596 = vmatpush1.xpose.msra.mxu0 0.0
  %597 = vmatprep.subr.mxu0 0.0
  %598 = vmatpush1.xpose.msra.mxu0 0.0
  %599 = vmatprep.subr.mxu0 0.0
  %600 = vmatpush1.xpose.msra.mxu0 0.0
  %601 = vmatprep.subr.mxu0 0.0
  %602 = vmatpush1.xpose.msra.mxu0 0.0
  %603 = vmatprep.subr.mxu0 0.0
  %604 = vmatpush1.xpose.msra.mxu0 0.0
  %605 = vmatprep.subr.mxu0 0.0
  %606 = vmatpush1.xpose.msra.mxu0 0.0
  %607 = vmatprep.subr.mxu0 0.0
  %608 = vmatpush1.xpose.msra.mxu0 0.0
  %609 = vmatprep.subr.mxu0 0.0
  %610 = vmatpush1.xpose.msra.mxu0 0.0
  %611 = vmatprep.subr.mxu0 0.0
  %612 = vmatpush1.xpose.msra.mxu0 0.0
  %613 = vmatprep.subr.mxu0 0.0
  %614 = vmatpush1.xpose.msra.mxu0 0.0
  %615 = vmatprep.subr.mxu0 0.0
  %616 = vmatpush1.xpose.msra.mxu0 0.0
  %617 = vmatprep.subr.mxu0 0.0
  %618 = vmatpush1.xpose.msra.mxu0 0.0
  %619 = vmatprep.subr.mxu0 0.0
  %620 = vmatpush1.xpose.msra.mxu0 0.0
  %621 = vmatprep.subr.mxu0 0.0
  %622 = vmatpush1.xpose.msra.mxu0 0.0
  %623 = vmatprep.subr.mxu0 0.0
  %624 = vmatpush1.xpose.msra.mxu0 0.0
  %625 = vmatprep.subr.mxu0 0.0
  %626 = vmatpush1.xpose.msra.mxu0 0.0
  %627 = vmatprep.subr.mxu0 0.0
  %628 = vmatpush1.xpose.msra.mxu0 0.0
  %629 = vmatprep.subr.mxu0 0.0
  %630 = vmatpush1.xpose.msra.mxu0 0.0
  %631 = vmatprep.mubr.f32.mxu0 0.0
  %632 = vmatmul.mubr.f32.gmra.mrb[0].mxu0 %v556
  %v633 = vpop.f32.mrb[0].mxu0
  %v634 = vadd.f32 0.0, %v633
  %v635 = vpop.f32.mrb[0].mxu0
  %636 = vmatprep.mubr.f32.mxu0 0.0
  %637 = vmatmul.mubr.f32.gmra.mrb[0].mxu0 %v559
  %v638 = vpop.f32.mrb[0].mxu0
  %v639 = vadd.f32 0.0, %v638
  %v640 = vpop.f32.mrb[0].mxu0
  %641 = vdwg.mxu0
  %v643 = vsel %vm554, %v188, 0
  %v646 = vsel %vm554, %v193, 0
  %v649 = vsel %vm554, %v337, 0
  %v652 = vsel %vm554, %v342, 0
  %654 = vmatprep.subr.mxu0 0.0
  %655 = vmatpush1.xpose.msra.mxu0 %v649
  %656 = vmatprep.subr.mxu0 0.0
  %657 = vmatpush1.xpose.msra.mxu0 %v652
  %658 = vmatprep.subr.mxu0 0.0
  %659 = vmatpush1.xpose.msra.mxu0 0.0
  %660 = vmatprep.subr.mxu0 0.0
  %661 = vmatpush1.xpose.msra.mxu0 0.0
  %662 = vmatprep.subr.mxu0 0.0
  %663 = vmatpush1.xpose.msra.mxu0 0.0
  %664 = vmatprep.subr.mxu0 0.0
  %665 = vmatpush1.xpose.msra.mxu0 0.0
  %666 = vmatprep.subr.mxu0 0.0
  %667 = vmatpush1.xpose.msra.mxu0 0.0
  %668 = vmatprep.subr.mxu0 0.0
  %669 = vmatpush1.xpose.msra.mxu0 0.0
  %670 = vmatprep.subr.mxu0 0.0
  %671 = vmatpush1.xpose.msra.mxu0 0.0
  %672 = vmatprep.subr.mxu0 0.0
  %673 = vmatpush1.xpose.msra.mxu0 0.0
  %674 = vmatprep.subr.mxu0 0.0
  %675 = vmatpush1.xpose.msra.mxu0 0.0
  %676 = vmatprep.subr.mxu0 0.0
  %677 = vmatpush1.xpose.msra.mxu0 0.0
  %678 = vmatprep.subr.mxu0 0.0
  %679 = vmatpush1.xpose.msra.mxu0 0.0
  %680 = vmatprep.subr.mxu0 0.0
  %681 = vmatpush1.xpose.msra.mxu0 0.0
  %682 = vmatprep.subr.mxu0 0.0
  %683 = vmatpush1.xpose.msra.mxu0 0.0
  %684 = vmatprep.subr.mxu0 0.0
  %685 = vmatpush1.xpose.msra.mxu0 0.0
  %686 = vmatprep.subr.mxu0 0.0
  %687 = vmatpush1.xpose.msra.mxu0 0.0
  %688 = vmatprep.subr.mxu0 0.0
  %689 = vmatpush1.xpose.msra.mxu0 0.0
  %690 = vmatprep.subr.mxu0 0.0
  %691 = vmatpush1.xpose.msra.mxu0 0.0
  %692 = vmatprep.subr.mxu0 0.0
  %693 = vmatpush1.xpose.msra.mxu0 0.0
  %694 = vmatprep.subr.mxu0 0.0
  %695 = vmatpush1.xpose.msra.mxu0 0.0
  %696 = vmatprep.subr.mxu0 0.0
  %697 = vmatpush1.xpose.msra.mxu0 0.0
  %698 = vmatprep.subr.mxu0 0.0
  %699 = vmatpush1.xpose.msra.mxu0 0.0
  %700 = vmatprep.subr.mxu0 0.0
  %701 = vmatpush1.xpose.msra.mxu0 0.0
  %702 = vmatprep.subr.mxu0 0.0
  %703 = vmatpush1.xpose.msra.mxu0 0.0
  %704 = vmatprep.subr.mxu0 0.0
  %705 = vmatpush1.xpose.msra.mxu0 0.0
  %706 = vmatprep.subr.mxu0 0.0
  %707 = vmatpush1.xpose.msra.mxu0 0.0
  %708 = vmatprep.subr.mxu0 0.0
  %709 = vmatpush1.xpose.msra.mxu0 0.0
  %710 = vmatprep.subr.mxu0 0.0
  %711 = vmatpush1.xpose.msra.mxu0 0.0
  %712 = vmatprep.subr.mxu0 0.0
  %713 = vmatpush1.xpose.msra.mxu0 0.0
  %714 = vmatprep.subr.mxu0 0.0
  %715 = vmatpush1.xpose.msra.mxu0 0.0
  %716 = vmatprep.subr.mxu0 0.0
  %717 = vmatpush1.xpose.msra.mxu0 0.0
  %718 = vmatprep.mubr.f32.mxu0 0.0
  %719 = vmatmul.mubr.f32.gmra.mrb[0].mxu0 %v643
  %v720 = vpop.f32.mrb[0].mxu0
  %v721 = vadd.f32 0.0, %v720
  %v722 = vpop.f32.mrb[0].mxu0
  %723 = vmatprep.mubr.f32.mxu0 0.0
  %724 = vmatmul.mubr.f32.gmra.mrb[0].mxu0 %v646
  %v725 = vpop.f32.mrb[0].mxu0
  %v726 = vadd.f32 0.0, %v725
  %v727 = vpop.f32.mrb[0].mxu0
  %728 = vdwg.mxu0
  %v730 = vsel %vm554, %v198, 0
  %v733 = vsel %vm554, %v203, 0
  %v736 = vsel %vm554, %v347, 0
  %v739 = vsel %vm554, %v352, 0
  %741 = vmatprep.subr.mxu0 0.0
  %742 = vmatpush1.xpose.msra.mxu0 %v736
  %743 = vmatprep.subr.mxu0 0.0
  %744 = vmatpush1.xpose.msra.mxu0 %v739
  %745 = vmatprep.subr.mxu0 0.0
  %746 = vmatpush1.xpose.msra.mxu0 0.0
  %747 = vmatprep.subr.mxu0 0.0
  %748 = vmatpush1.xpose.msra.mxu0 0.0
  %749 = vmatprep.subr.mxu0 0.0
  %750 = vmatpush1.xpose.msra.mxu0 0.0
  %751 = vmatprep.subr.mxu0 0.0
  %752 = vmatpush1.xpose.msra.mxu0 0.0
  %753 = vmatprep.subr.mxu0 0.0
  %754 = vmatpush1.xpose.msra.mxu0 0.0
  %755 = vmatprep.subr.mxu0 0.0
  %756 = vmatpush1.xpose.msra.mxu0 0.0
  %757 = vmatprep.subr.mxu0 0.0
  %758 = vmatpush1.xpose.msra.mxu0 0.0
  %759 = vmatprep.subr.mxu0 0.0
  %760 = vmatpush1.xpose.msra.mxu0 0.0
  %761 = vmatprep.subr.mxu0 0.0
  %762 = vmatpush1.xpose.msra.mxu0 0.0
  %763 = vmatprep.subr.mxu0 0.0
  %764 = vmatpush1.xpose.msra.mxu0 0.0
  %765 = vmatprep.subr.mxu0 0.0
  %766 = vmatpush1.xpose.msra.mxu0 0.0
  %767 = vmatprep.subr.mxu0 0.0
  %768 = vmatpush1.xpose.msra.mxu0 0.0
  %769 = vmatprep.subr.mxu0 0.0
  %770 = vmatpush1.xpose.msra.mxu0 0.0
  %771 = vmatprep.subr.mxu0 0.0
  %772 = vmatpush1.xpose.msra.mxu0 0.0
  %773 = vmatprep.subr.mxu0 0.0
  %774 = vmatpush1.xpose.msra.mxu0 0.0
  %775 = vmatprep.subr.mxu0 0.0
  %776 = vmatpush1.xpose.msra.mxu0 0.0
  %777 = vmatprep.subr.mxu0 0.0
  %778 = vmatpush1.xpose.msra.mxu0 0.0
  %779 = vmatprep.subr.mxu0 0.0
  %780 = vmatpush1.xpose.msra.mxu0 0.0
  %781 = vmatprep.subr.mxu0 0.0
  %782 = vmatpush1.xpose.msra.mxu0 0.0
  %783 = vmatprep.subr.mxu0 0.0
  %784 = vmatpush1.xpose.msra.mxu0 0.0
  %785 = vmatprep.subr.mxu0 0.0
  %786 = vmatpush1.xpose.msra.mxu0 0.0
  %787 = vmatprep.subr.mxu0 0.0
  %788 = vmatpush1.xpose.msra.mxu0 0.0
  %789 = vmatprep.subr.mxu0 0.0
  %790 = vmatpush1.xpose.msra.mxu0 0.0
  %791 = vmatprep.subr.mxu0 0.0
  %792 = vmatpush1.xpose.msra.mxu0 0.0
  %793 = vmatprep.subr.mxu0 0.0
  %794 = vmatpush1.xpose.msra.mxu0 0.0
  %795 = vmatprep.subr.mxu0 0.0
  %796 = vmatpush1.xpose.msra.mxu0 0.0
  %797 = vmatprep.subr.mxu0 0.0
  %798 = vmatpush1.xpose.msra.mxu0 0.0
  %799 = vmatprep.subr.mxu0 0.0
  %800 = vmatpush1.xpose.msra.mxu0 0.0
  %801 = vmatprep.subr.mxu0 0.0
  %802 = vmatpush1.xpose.msra.mxu0 0.0
  %803 = vmatprep.subr.mxu0 0.0
  %804 = vmatpush1.xpose.msra.mxu0 0.0
  %805 = vmatprep.mubr.f32.mxu0 0.0
  %806 = vmatmul.mubr.f32.gmra.mrb[0].mxu0 %v730
  %v807 = vpop.f32.mrb[0].mxu0
  %v808 = vadd.f32 0.0, %v807
  %v809 = vpop.f32.mrb[0].mxu0
  %810 = vmatprep.mubr.f32.mxu0 0.0
  %811 = vmatmul.mubr.f32.gmra.mrb[0].mxu0 %v733
  %v812 = vpop.f32.mrb[0].mxu0
  %v813 = vadd.f32 0.0, %v812
  %v814 = vpop.f32.mrb[0].mxu0
  %815 = vdwg.mxu0
  %v817 = vsel %vm554, %v208, 0
  %v820 = vsel %vm554, %v213, 0
  %v823 = vsel %vm554, %v357, 0
  %v826 = vsel %vm554, %v362, 0
  %828 = vmatprep.subr.mxu0 0.0
  %829 = vmatpush1.xpose.msra.mxu0 %v823
  %830 = vmatprep.subr.mxu0 0.0
  %831 = vmatpush1.xpose.msra.mxu0 %v826
  %832 = vmatprep.subr.mxu0 0.0
  %833 = vmatpush1.xpose.msra.mxu0 0.0
  %834 = vmatprep.subr.mxu0 0.0
  %835 = vmatpush1.xpose.msra.mxu0 0.0
  %836 = vmatprep.subr.mxu0 0.0
  %837 = vmatpush1.xpose.msra.mxu0 0.0
  %838 = vmatprep.subr.mxu0 0.0
  %839 = vmatpush1.xpose.msra.mxu0 0.0
  %840 = vmatprep.subr.mxu0 0.0
  %841 = vmatpush1.xpose.msra.mxu0 0.0
  %842 = vmatprep.subr.mxu0 0.0
  %843 = vmatpush1.xpose.msra.mxu0 0.0
  %844 = vmatprep.subr.mxu0 0.0
  %845 = vmatpush1.xpose.msra.mxu0 0.0
  %846 = vmatprep.subr.mxu0 0.0
  %847 = vmatpush1.xpose.msra.mxu0 0.0
  %848 = vmatprep.subr.mxu0 0.0
  %849 = vmatpush1.xpose.msra.mxu0 0.0
  %850 = vmatprep.subr.mxu0 0.0
  %851 = vmatpush1.xpose.msra.mxu0 0.0
  %852 = vmatprep.subr.mxu0 0.0
  %853 = vmatpush1.xpose.msra.mxu0 0.0
  %854 = vmatprep.subr.mxu0 0.0
  %855 = vmatpush1.xpose.msra.mxu0 0.0
  %856 = vmatprep.subr.mxu0 0.0
  %857 = vmatpush1.xpose.msra.mxu0 0.0
  %858 = vmatprep.subr.mxu0 0.0
  %859 = vmatpush1.xpose.msra.mxu0 0.0
  %860 = vmatprep.subr.mxu0 0.0
  %861 = vmatpush1.xpose.msra.mxu0 0.0
  %862 = vmatprep.subr.mxu0 0.0
  %863 = vmatpush1.xpose.msra.mxu0 0.0
  %864 = vmatprep.subr.mxu0 0.0
  %865 = vmatpush1.xpose.msra.mxu0 0.0
  %866 = vmatprep.subr.mxu0 0.0
  %867 = vmatpush1.xpose.msra.mxu0 0.0
  %868 = vmatprep.subr.mxu0 0.0
  %869 = vmatpush1.xpose.msra.mxu0 0.0
  %870 = vmatprep.subr.mxu0 0.0
  %871 = vmatpush1.xpose.msra.mxu0 0.0
  %872 = vmatprep.subr.mxu0 0.0
  %873 = vmatpush1.xpose.msra.mxu0 0.0
  %874 = vmatprep.subr.mxu0 0.0
  %875 = vmatpush1.xpose.msra.mxu0 0.0
  %876 = vmatprep.subr.mxu0 0.0
  %877 = vmatpush1.xpose.msra.mxu0 0.0
  %878 = vmatprep.subr.mxu0 0.0
  %879 = vmatpush1.xpose.msra.mxu0 0.0
  %880 = vmatprep.subr.mxu0 0.0
  %881 = vmatpush1.xpose.msra.mxu0 0.0
  %882 = vmatprep.subr.mxu0 0.0
  %883 = vmatpush1.xpose.msra.mxu0 0.0
  %884 = vmatprep.subr.mxu0 0.0
  %885 = vmatpush1.xpose.msra.mxu0 0.0
  %886 = vmatprep.subr.mxu0 0.0
  %887 = vmatpush1.xpose.msra.mxu0 0.0
  %888 = vmatprep.subr.mxu0 0.0
  %889 = vmatpush1.xpose.msra.mxu0 0.0
  %890 = vmatprep.subr.mxu0 0.0
  %891 = vmatpush1.xpose.msra.mxu0 0.0
  %892 = vmatprep.mubr.f32.mxu0 0.0
  %893 = vmatmul.mubr.f32.gmra.mrb[0].mxu0 %v817
  %v894 = vpop.f32.mrb[0].mxu0
  %v895 = vadd.f32 0.0, %v894
  %v896 = vpop.f32.mrb[0].mxu0
  %897 = vmatprep.mubr.f32.mxu0 0.0
  %898 = vmatmul.mubr.f32.gmra.mrb[0].mxu0 %v820
  %v899 = vpop.f32.mrb[0].mxu0
  %v900 = vadd.f32 0.0, %v899
  %v901 = vpop.f32.mrb[0].mxu0
  %902 = vdwg.mxu0
  %v904 = vsel %vm554, %v218, 0
  %v907 = vsel %vm554, %v223, 0
  %v910 = vsel %vm554, %v367, 0
  %v913 = vsel %vm554, %v372, 0
  %915 = vmatprep.subr.mxu0 0.0
  %916 = vmatpush1.xpose.msra.mxu0 %v910
  %917 = vmatprep.subr.mxu0 0.0
  %918 = vmatpush1.xpose.msra.mxu0 %v913
  %919 = vmatprep.subr.mxu0 0.0
  %920 = vmatpush1.xpose.msra.mxu0 0.0
  %921 = vmatprep.subr.mxu0 0.0
  %922 = vmatpush1.xpose.msra.mxu0 0.0
  %923 = vmatprep.subr.mxu0 0.0
  %924 = vmatpush1.xpose.msra.mxu0 0.0
  %925 = vmatprep.subr.mxu0 0.0
  %926 = vmatpush1.xpose.msra.mxu0 0.0
  %927 = vmatprep.subr.mxu0 0.0
  %928 = vmatpush1.xpose.msra.mxu0 0.0
  %929 = vmatprep.subr.mxu0 0.0
  %930 = vmatpush1.xpose.msra.mxu0 0.0
  %931 = vmatprep.subr.mxu0 0.0
  %932 = vmatpush1.xpose.msra.mxu0 0.0
  %933 = vmatprep.subr.mxu0 0.0
  %934 = vmatpush1.xpose.msra.mxu0 0.0
  %935 = vmatprep.subr.mxu0 0.0
  %936 = vmatpush1.xpose.msra.mxu0 0.0
  %937 = vmatprep.subr.mxu0 0.0
  %938 = vmatpush1.xpose.msra.mxu0 0.0
  %939 = vmatprep.subr.mxu0 0.0
  %940 = vmatpush1.xpose.msra.mxu0 0.0
  %941 = vmatprep.subr.mxu0 0.0
  %942 = vmatpush1.xpose.msra.mxu0 0.0
  %943 = vmatprep.subr.mxu0 0.0
  %944 = vmatpush1.xpose.msra.mxu0 0.0
  %945 = vmatprep.subr.mxu0 0.0
  %946 = vmatpush1.xpose.msra.mxu0 0.0
  %947 = vmatprep.subr.mxu0 0.0
  %948 = vmatpush1.xpose.msra.mxu0 0.0
  %949 = vmatprep.subr.mxu0 0.0
  %950 = vmatpush1.xpose.msra.mxu0 0.0
  %951 = vmatprep.subr.mxu0 0.0
  %952 = vmatpush1.xpose.msra.mxu0 0.0
  %953 = vmatprep.subr.mxu0 0.0
  %954 = vmatpush1.xpose.msra.mxu0 0.0
  %955 = vmatprep.subr.mxu0 0.0
  %956 = vmatpush1.xpose.msra.mxu0 0.0
  %957 = vmatprep.subr.mxu0 0.0
  %958 = vmatpush1.xpose.msra.mxu0 0.0
  %959 = vmatprep.subr.mxu0 0.0
  %960 = vmatpush1.xpose.msra.mxu0 0.0
  %961 = vmatprep.subr.mxu0 0.0
  %962 = vmatpush1.xpose.msra.mxu0 0.0
  %963 = vmatprep.subr.mxu0 0.0
  %964 = vmatpush1.xpose.msra.mxu0 0.0
  %965 = vmatprep.subr.mxu0 0.0
  %966 = vmatpush1.xpose.msra.mxu0 0.0
  %967 = vmatprep.subr.mxu0 0.0
  %968 = vmatpush1.xpose.msra.mxu0 0.0
  %969 = vmatprep.subr.mxu0 0.0
  %970 = vmatpush1.xpose.msra.mxu0 0.0
  %971 = vmatprep.subr.mxu0 0.0
  %972 = vmatpush1.xpose.msra.mxu0 0.0
  %973 = vmatprep.subr.mxu0 0.0
  %974 = vmatpush1.xpose.msra.mxu0 0.0
  %975 = vmatprep.subr.mxu0 0.0
  %976 = vmatpush1.xpose.msra.mxu0 0.0
  %977 = vmatprep.subr.mxu0 0.0
  %978 = vmatpush1.xpose.msra.mxu0 0.0
  %979 = vmatprep.mubr.f32.mxu0 0.0
  %980 = vmatmul.mubr.f32.gmra.mrb[0].mxu0 %v904
  %v981 = vpop.f32.mrb[0].mxu0
  %v982 = vadd.f32 0.0, %v981
  %v983 = vpop.f32.mrb[0].mxu0
  %984 = vmatprep.mubr.f32.mxu0 0.0
  %985 = vmatmul.mubr.f32.gmra.mrb[0].mxu0 %v907
  %v986 = vpop.f32.mrb[0].mxu0
  %v987 = vadd.f32 0.0, %v986
  %v988 = vpop.f32.mrb[0].mxu0
  %989 = vdwg.mxu0
  %v991 = vsel %vm554, %v228, 0
  %v994 = vsel %vm554, %v233, 0
  %v997 = vsel %vm554, %v377, 0
  %v1000 = vsel %vm554, %v382, 0
  %1002 = vmatprep.subr.mxu0 0.0
  %1003 = vmatpush1.xpose.msra.mxu0 %v997
  %1004 = vmatprep.subr.mxu0 0.0
  %1005 = vmatpush1.xpose.msra.mxu0 %v1000
  %1006 = vmatprep.subr.mxu0 0.0
  %1007 = vmatpush1.xpose.msra.mxu0 0.0
  %1008 = vmatprep.subr.mxu0 0.0
  %1009 = vmatpush1.xpose.msra.mxu0 0.0
  %1010 = vmatprep.subr.mxu0 0.0
  %1011 = vmatpush1.xpose.msra.mxu0 0.0
  %1012 = vmatprep.subr.mxu0 0.0
  %1013 = vmatpush1.xpose.msra.mxu0 0.0
  %1014 = vmatprep.subr.mxu0 0.0
  %1015 = vmatpush1.xpose.msra.mxu0 0.0
  %1016 = vmatprep.subr.mxu0 0.0
  %1017 = vmatpush1.xpose.msra.mxu0 0.0
  %1018 = vmatprep.subr.mxu0 0.0
  %1019 = vmatpush1.xpose.msra.mxu0 0.0
  %1020 = vmatprep.subr.mxu0 0.0
  %1021 = vmatpush1.xpose.msra.mxu0 0.0
  %1022 = vmatprep.subr.mxu0 0.0
  %1023 = vmatpush1.xpose.msra.mxu0 0.0
  %1024 = vmatprep.subr.mxu0 0.0
  %1025 = vmatpush1.xpose.msra.mxu0 0.0
  %1026 = vmatprep.subr.mxu0 0.0
  %1027 = vmatpush1.xpose.msra.mxu0 0.0
  %1028 = vmatprep.subr.mxu0 0.0
  %1029 = vmatpush1.xpose.msra.mxu0 0.0
  %1030 = vmatprep.subr.mxu0 0.0
  %1031 = vmatpush1.xpose.msra.mxu0 0.0
  %1032 = vmatprep.subr.mxu0 0.0
  %1033 = vmatpush1.xpose.msra.mxu0 0.0
  %1034 = vmatprep.subr.mxu0 0.0
  %1035 = vmatpush1.xpose.msra.mxu0 0.0
  %1036 = vmatprep.subr.mxu0 0.0
  %1037 = vmatpush1.xpose.msra.mxu0 0.0
  %1038 = vmatprep.subr.mxu0 0.0
  %1039 = vmatpush1.xpose.msra.mxu0 0.0
  %1040 = vmatprep.subr.mxu0 0.0
  %1041 = vmatpush1.xpose.msra.mxu0 0.0
  %1042 = vmatprep.subr.mxu0 0.0
  %1043 = vmatpush1.xpose.msra.mxu0 0.0
  %1044 = vmatprep.subr.mxu0 0.0
  %1045 = vmatpush1.xpose.msra.mxu0 0.0
  %1046 = vmatprep.subr.mxu0 0.0
  %1047 = vmatpush1.xpose.msra.mxu0 0.0
  %1048 = vmatprep.subr.mxu0 0.0
  %1049 = vmatpush1.xpose.msra.mxu0 0.0
  %1050 = vmatprep.subr.mxu0 0.0
  %1051 = vmatpush1.xpose.msra.mxu0 0.0
  %1052 = vmatprep.subr.mxu0 0.0
  %1053 = vmatpush1.xpose.msra.mxu0 0.0
  %1054 = vmatprep.subr.mxu0 0.0
  %1055 = vmatpush1.xpose.msra.mxu0 0.0
  %1056 = vmatprep.subr.mxu0 0.0
  %1057 = vmatpush1.xpose.msra.mxu0 0.0
  %1058 = vmatprep.subr.mxu0 0.0
  %1059 = vmatpush1.xpose.msra.mxu0 0.0
  %1060 = vmatprep.subr.mxu0 0.0
  %1061 = vmatpush1.xpose.msra.mxu0 0.0
  %1062 = vmatprep.subr.mxu0 0.0
  %1063 = vmatpush1.xpose.msra.mxu0 0.0
  %1064 = vmatprep.subr.mxu0 0.0
  %1065 = vmatpush1.xpose.msra.mxu0 0.0
  %1066 = vmatprep.mubr.f32.mxu0 0.0
  %1067 = vmatmul.mubr.f32.gmra.mrb[0].mxu0 %v991
  %v1068 = vpop.f32.mrb[0].mxu0
  %v1069 = vadd.f32 0.0, %v1068
  %v1070 = vpop.f32.mrb[0].mxu0
  %1071 = vmatprep.mubr.f32.mxu0 0.0
  %1072 = vmatmul.mubr.f32.gmra.mrb[0].mxu0 %v994
  %v1073 = vpop.f32.mrb[0].mxu0
  %v1074 = vadd.f32 0.0, %v1073
  %v1075 = vpop.f32.mrb[0].mxu0
  %1076 = vdwg.mxu0
  %v1078 = vsel %vm554, %v238, 0
  %v1081 = vsel %vm554, %v243, 0
  %v1084 = vsel %vm554, %v387, 0
  %v1087 = vsel %vm554, %v392, 0
  %1089 = vmatprep.subr.mxu0 0.0
  %1090 = vmatpush1.xpose.msra.mxu0 %v1084
  %1091 = vmatprep.subr.mxu0 0.0
  %1092 = vmatpush1.xpose.msra.mxu0 %v1087
  %1093 = vmatprep.subr.mxu0 0.0
  %1094 = vmatpush1.xpose.msra.mxu0 0.0
  %1095 = vmatprep.subr.mxu0 0.0
  %1096 = vmatpush1.xpose.msra.mxu0 0.0
  %1097 = vmatprep.subr.mxu0 0.0
  %1098 = vmatpush1.xpose.msra.mxu0 0.0
  %1099 = vmatprep.subr.mxu0 0.0
  %1100 = vmatpush1.xpose.msra.mxu0 0.0
  %1101 = vmatprep.subr.mxu0 0.0
  %1102 = vmatpush1.xpose.msra.mxu0 0.0
  %1103 = vmatprep.subr.mxu0 0.0
  %1104 = vmatpush1.xpose.msra.mxu0 0.0
  %1105 = vmatprep.subr.mxu0 0.0
  %1106 = vmatpush1.xpose.msra.mxu0 0.0
  %1107 = vmatprep.subr.mxu0 0.0
  %1108 = vmatpush1.xpose.msra.mxu0 0.0
  %1109 = vmatprep.subr.mxu0 0.0
  %1110 = vmatpush1.xpose.msra.mxu0 0.0
  %1111 = vmatprep.subr.mxu0 0.0
  %1112 = vmatpush1.xpose.msra.mxu0 0.0
  %1113 = vmatprep.subr.mxu0 0.0
  %1114 = vmatpush1.xpose.msra.mxu0 0.0
  %1115 = vmatprep.subr.mxu0 0.0
  %1116 = vmatpush1.xpose.msra.mxu0 0.0
  %1117 = vmatprep.subr.mxu0 0.0
  %1118 = vmatpush1.xpose.msra.mxu0 0.0
  %1119 = vmatprep.subr.mxu0 0.0
  %1120 = vmatpush1.xpose.msra.mxu0 0.0
  %1121 = vmatprep.subr.mxu0 0.0
  %1122 = vmatpush1.xpose.msra.mxu0 0.0
  %1123 = vmatprep.subr.mxu0 0.0
  %1124 = vmatpush1.xpose.msra.mxu0 0.0
  %1125 = vmatprep.subr.mxu0 0.0
  %1126 = vmatpush1.xpose.msra.mxu0 0.0
  %1127 = vmatprep.subr.mxu0 0.0
  %1128 = vmatpush1.xpose.msra.mxu0 0.0
  %1129 = vmatprep.subr.mxu0 0.0
  %1130 = vmatpush1.xpose.msra.mxu0 0.0
  %1131 = vmatprep.subr.mxu0 0.0
  %1132 = vmatpush1.xpose.msra.mxu0 0.0
  %1133 = vmatprep.subr.mxu0 0.0
  %1134 = vmatpush1.xpose.msra.mxu0 0.0
  %1135 = vmatprep.subr.mxu0 0.0
  %1136 = vmatpush1.xpose.msra.mxu0 0.0
  %1137 = vmatprep.subr.mxu0 0.0
  %1138 = vmatpush1.xpose.msra.mxu0 0.0
  %1139 = vmatprep.subr.mxu0 0.0
  %1140 = vmatpush1.xpose.msra.mxu0 0.0
  %1141 = vmatprep.subr.mxu0 0.0
  %1142 = vmatpush1.xpose.msra.mxu0 0.0
  %1143 = vmatprep.subr.mxu0 0.0
  %1144 = vmatpush1.xpose.msra.mxu0 0.0
  %1145 = vmatprep.subr.mxu0 0.0
  %1146 = vmatpush1.xpose.msra.mxu0 0.0
  %1147 = vmatprep.subr.mxu0 0.0
  %1148 = vmatpush1.xpose.msra.mxu0 0.0
  %1149 = vmatprep.subr.mxu0 0.0
  %1150 = vmatpush1.xpose.msra.mxu0 0.0
  %1151 = vmatprep.subr.mxu0 0.0
  %1152 = vmatpush1.xpose.msra.mxu0 0.0
  %1153 = vmatprep.mubr.f32.mxu0 0.0
  %1154 = vmatmul.mubr.f32.gmra.mrb[0].mxu0 %v1078
  %v1155 = vpop.f32.mrb[0].mxu0
  %v1156 = vadd.f32 0.0, %v1155
  %v1157 = vpop.f32.mrb[0].mxu0
  %1158 = vmatprep.mubr.f32.mxu0 0.0
  %1159 = vmatmul.mubr.f32.gmra.mrb[0].mxu0 %v1081
  %v1160 = vpop.f32.mrb[0].mxu0
  %v1161 = vadd.f32 0.0, %v1160
  %v1162 = vpop.f32.mrb[0].mxu0
  %1163 = vdwg.mxu0
  %v1165 = vsel %vm554, %v248, 0
  %v1168 = vsel %vm554, %v253, 0
  %v1171 = vsel %vm554, %v397, 0
  %v1174 = vsel %vm554, %v402, 0
  %1176 = vmatprep.subr.mxu0 0.0
  %1177 = vmatpush1.xpose.msra.mxu0 %v1171
  %1178 = vmatprep.subr.mxu0 0.0
  %1179 = vmatpush1.xpose.msra.mxu0 %v1174
  %1180 = vmatprep.subr.mxu0 0.0
  %1181 = vmatpush1.xpose.msra.mxu0 0.0
  %1182 = vmatprep.subr.mxu0 0.0
  %1183 = vmatpush1.xpose.msra.mxu0 0.0
  %1184 = vmatprep.subr.mxu0 0.0
  %1185 = vmatpush1.xpose.msra.mxu0 0.0
  %1186 = vmatprep.subr.mxu0 0.0
  %1187 = vmatpush1.xpose.msra.mxu0 0.0
  %1188 = vmatprep.subr.mxu0 0.0
  %1189 = vmatpush1.xpose.msra.mxu0 0.0
  %1190 = vmatprep.subr.mxu0 0.0
  %1191 = vmatpush1.xpose.msra.mxu0 0.0
  %1192 = vmatprep.subr.mxu0 0.0
  %1193 = vmatpush1.xpose.msra.mxu0 0.0
  %1194 = vmatprep.subr.mxu0 0.0
  %1195 = vmatpush1.xpose.msra.mxu0 0.0
  %1196 = vmatprep.subr.mxu0 0.0
  %1197 = vmatpush1.xpose.msra.mxu0 0.0
  %1198 = vmatprep.subr.mxu0 0.0
  %1199 = vmatpush1.xpose.msra.mxu0 0.0
  %1200 = vmatprep.subr.mxu0 0.0
  %1201 = vmatpush1.xpose.msra.mxu0 0.0
  %1202 = vmatprep.subr.mxu0 0.0
  %1203 = vmatpush1.xpose.msra.mxu0 0.0
  %1204 = vmatprep.subr.mxu0 0.0
  %1205 = vmatpush1.xpose.msra.mxu0 0.0
  %1206 = vmatprep.subr.mxu0 0.0
  %1207 = vmatpush1.xpose.msra.mxu0 0.0
  %1208 = vmatprep.subr.mxu0 0.0
  %1209 = vmatpush1.xpose.msra.mxu0 0.0
  %1210 = vmatprep.subr.mxu0 0.0
  %1211 = vmatpush1.xpose.msra.mxu0 0.0
  %1212 = vmatprep.subr.mxu0 0.0
  %1213 = vmatpush1.xpose.msra.mxu0 0.0
  %1214 = vmatprep.subr.mxu0 0.0
  %1215 = vmatpush1.xpose.msra.mxu0 0.0
  %1216 = vmatprep.subr.mxu0 0.0
  %1217 = vmatpush1.xpose.msra.mxu0 0.0
  %1218 = vmatprep.subr.mxu0 0.0
  %1219 = vmatpush1.xpose.msra.mxu0 0.0
  %1220 = vmatprep.subr.mxu0 0.0
  %1221 = vmatpush1.xpose.msra.mxu0 0.0
  %1222 = vmatprep.subr.mxu0 0.0
  %1223 = vmatpush1.xpose.msra.mxu0 0.0
  %1224 = vmatprep.subr.mxu0 0.0
  %1225 = vmatpush1.xpose.msra.mxu0 0.0
  %1226 = vmatprep.subr.mxu0 0.0
  %1227 = vmatpush1.xpose.msra.mxu0 0.0
  %1228 = vmatprep.subr.mxu0 0.0
  %1229 = vmatpush1.xpose.msra.mxu0 0.0
  %1230 = vmatprep.subr.mxu0 0.0
  %1231 = vmatpush1.xpose.msra.mxu0 0.0
  %1232 = vmatprep.subr.mxu0 0.0
  %1233 = vmatpush1.xpose.msra.mxu0 0.0
  %1234 = vmatprep.subr.mxu0 0.0
  %1235 = vmatpush1.xpose.msra.mxu0 0.0
  %1236 = vmatprep.subr.mxu0 0.0
  %1237 = vmatpush1.xpose.msra.mxu0 0.0
  %1238 = vmatprep.subr.mxu0 0.0
  %1239 = vmatpush1.xpose.msra.mxu0 0.0
  %1240 = vmatprep.mubr.f32.mxu0 0.0
  %1241 = vmatmul.mubr.f32.gmra.mrb[0].mxu0 %v1165
  %v1242 = vpop.f32.mrb[0].mxu0
  %v1243 = vadd.f32 0.0, %v1242
  %v1244 = vpop.f32.mrb[0].mxu0
  %1245 = vmatprep.mubr.f32.mxu0 0.0
  %1246 = vmatmul.mubr.f32.gmra.mrb[0].mxu0 %v1168
  %v1247 = vpop.f32.mrb[0].mxu0
  %v1248 = vadd.f32 0.0, %v1247
  %v1249 = vpop.f32.mrb[0].mxu0
  %1250 = vdwg.mxu0
  %v1251 = vmul.f32 %v634, 0.35355338
  %v1252 = vmul.f32 %v639, 0.35355338
  %v1253 = vmul.f32 %v721, 0.35355338
  %v1254 = vmul.f32 %v726, 0.35355338
  %v1255 = vmul.f32 %v808, 0.35355338
  %v1256 = vmul.f32 %v813, 0.35355338
  %v1257 = vmul.f32 %v895, 0.35355338
  %v1258 = vmul.f32 %v900, 0.35355338
  %v1259 = vmul.f32 %v982, 0.35355338
  %v1260 = vmul.f32 %v987, 0.35355338
  %v1261 = vmul.f32 %v1069, 0.35355338
  %v1262 = vmul.f32 %v1074, 0.35355338
  %v1263 = vmul.f32 %v1156, 0.35355338
  %v1264 = vmul.f32 %v1161, 0.35355338
  %v1265 = vmul.f32 %v1243, 0.35355338
  %v1266 = vmul.f32 %v1248, 0.35355338
  %v1267 = vadd.f32 %v1251, %v42
  %v1268 = vadd.f32 %v1252, %v43
  %v1269 = vadd.f32 %v1253, %v44
  %v1270 = vadd.f32 %v1254, %v45
  %v1271 = vadd.f32 %v1255, %v46
  %v1272 = vadd.f32 %v1256, %v47
  %v1273 = vadd.f32 %v1257, %v48
  %v1274 = vadd.f32 %v1258, %v49
  %v1275 = vadd.f32 %v1259, %v50
  %v1276 = vadd.f32 %v1260, %v51
  %v1277 = vadd.f32 %v1261, %v52
  %v1278 = vadd.f32 %v1262, %v53
  %v1279 = vadd.f32 %v1263, %v54
  %v1280 = vadd.f32 %v1264, %v55
  %v1281 = vadd.f32 %v1265, %v56
  %v1282 = vadd.f32 %v1266, %v57
  %vm1283 = vcmask 130048
  %v1284 = vsel %vm1283, %v1267, -inf
  %1285 = vmax.xlane.f32.xlu0 %v1284
  %v1286 = vpop.xlane.xlu0 %1285
  %v1287 = vsel %vm1283, %v1268, -inf
  %1288 = vmax.xlane.f32.xlu0 %v1287
  %v1289 = vpop.xlane.xlu0 %1288
  %v1290 = vsel %vm1283, %v1269, -inf
  %1291 = vmax.xlane.f32.xlu0 %v1290
  %v1292 = vpop.xlane.xlu0 %1291
  %v1293 = vsel %vm1283, %v1270, -inf
  %1294 = vmax.xlane.f32.xlu0 %v1293
  %v1295 = vpop.xlane.xlu0 %1294
  %v1296 = vsel %vm1283, %v1271, -inf
  %1297 = vmax.xlane.f32.xlu0 %v1296
  %v1298 = vpop.xlane.xlu0 %1297
  %v1299 = vsel %vm1283, %v1272, -inf
  %1300 = vmax.xlane.f32.xlu0 %v1299
  %v1301 = vpop.xlane.xlu0 %1300
  %v1302 = vsel %vm1283, %v1273, -inf
  %1303 = vmax.xlane.f32.xlu0 %v1302
  %v1304 = vpop.xlane.xlu0 %1303
  %v1305 = vsel %vm1283, %v1274, -inf
  %1306 = vmax.xlane.f32.xlu0 %v1305
  %v1307 = vpop.xlane.xlu0 %1306
  %v1308 = vsel %vm1283, %v1275, -inf
  %1309 = vmax.xlane.f32.xlu0 %v1308
  %v1310 = vpop.xlane.xlu0 %1309
  %v1311 = vsel %vm1283, %v1276, -inf
  %1312 = vmax.xlane.f32.xlu0 %v1311
  %v1313 = vpop.xlane.xlu0 %1312
  %v1314 = vsel %vm1283, %v1277, -inf
  %1315 = vmax.xlane.f32.xlu0 %v1314
  %v1316 = vpop.xlane.xlu0 %1315
  %v1317 = vsel %vm1283, %v1278, -inf
  %1318 = vmax.xlane.f32.xlu0 %v1317
  %v1319 = vpop.xlane.xlu0 %1318
  %v1320 = vsel %vm1283, %v1279, -inf
  %1321 = vmax.xlane.f32.xlu0 %v1320
  %v1322 = vpop.xlane.xlu0 %1321
  %v1323 = vsel %vm1283, %v1280, -inf
  %1324 = vmax.xlane.f32.xlu0 %v1323
  %v1325 = vpop.xlane.xlu0 %1324
  %v1326 = vsel %vm1283, %v1281, -inf
  %1327 = vmax.xlane.f32.xlu0 %v1326
  %v1328 = vpop.xlane.xlu0 %1327
  %v1329 = vsel %vm1283, %v1282, -inf
  %1330 = vmax.xlane.f32.xlu0 %v1329
  %v1331 = vpop.xlane.xlu0 %1330
  %v1332 = vsub.f32 %v1267, %v1286
  %v1333 = vsub.f32 %v1268, %v1289
  %v1334 = vsub.f32 %v1269, %v1292
  %v1335 = vsub.f32 %v1270, %v1295
  %v1336 = vsub.f32 %v1271, %v1298
  %v1337 = vsub.f32 %v1272, %v1301
  %v1338 = vsub.f32 %v1273, %v1304
  %v1339 = vsub.f32 %v1274, %v1307
  %v1340 = vsub.f32 %v1275, %v1310
  %v1341 = vsub.f32 %v1276, %v1313
  %v1342 = vsub.f32 %v1277, %v1316
  %v1343 = vsub.f32 %v1278, %v1319
  %v1344 = vsub.f32 %v1279, %v1322
  %v1345 = vsub.f32 %v1280, %v1325
  %v1346 = vsub.f32 %v1281, %v1328
  %v1347 = vsub.f32 %v1282, %v1331
  %v1348 = vmul.f32 %v1332, 1.442695
  %v1349 = vpow.pop %v1348
  %v1350 = vmul.f32 %v1333, 1.442695
  %v1351 = vpow.pop %v1350
  %v1352 = vmul.f32 %v1334, 1.442695
  %v1353 = vpow.pop %v1352
  %v1354 = vmul.f32 %v1335, 1.442695
  %v1355 = vpow.pop %v1354
  %v1356 = vmul.f32 %v1336, 1.442695
  %v1357 = vpow.pop %v1356
  %v1358 = vmul.f32 %v1337, 1.442695
  %v1359 = vpow.pop %v1358
  %v1360 = vmul.f32 %v1338, 1.442695
  %v1361 = vpow.pop %v1360
  %v1362 = vmul.f32 %v1339, 1.442695
  %v1363 = vpow.pop %v1362
  %v1364 = vmul.f32 %v1340, 1.442695
  %v1365 = vpow.pop %v1364
  %v1366 = vmul.f32 %v1341, 1.442695
  %v1367 = vpow.pop %v1366
  %v1368 = vmul.f32 %v1342, 1.442695
  %v1369 = vpow.pop %v1368
  %v1370 = vmul.f32 %v1343, 1.442695
  %v1371 = vpow.pop %v1370
  %v1372 = vmul.f32 %v1344, 1.442695
  %v1373 = vpow.pop %v1372
  %v1374 = vmul.f32 %v1345, 1.442695
  %v1375 = vpow.pop %v1374
  %v1376 = vmul.f32 %v1346, 1.442695
  %v1377 = vpow.pop %v1376
  %v1378 = vmul.f32 %v1347, 1.442695
  %v1379 = vpow.pop %v1378
  %v1380 = vsel %vm1283, %v1349, 0.0
  %1381 = vadd.xlane.f32.xlu0 %v1380
  %v1382 = vpop.xlane.xlu0 %1381
  %v1383 = vsel %vm1283, %v1351, 0.0
  %1384 = vadd.xlane.f32.xlu0 %v1383
  %v1385 = vpop.xlane.xlu0 %1384
  %v1386 = vsel %vm1283, %v1353, 0.0
  %1387 = vadd.xlane.f32.xlu0 %v1386
  %v1388 = vpop.xlane.xlu0 %1387
  %v1389 = vsel %vm1283, %v1355, 0.0
  %1390 = vadd.xlane.f32.xlu0 %v1389
  %v1391 = vpop.xlane.xlu0 %1390
  %v1392 = vsel %vm1283, %v1357, 0.0
  %1393 = vadd.xlane.f32.xlu0 %v1392
  %v1394 = vpop.xlane.xlu0 %1393
  %v1395 = vsel %vm1283, %v1359, 0.0
  %1396 = vadd.xlane.f32.xlu0 %v1395
  %v1397 = vpop.xlane.xlu0 %1396
  %v1398 = vsel %vm1283, %v1361, 0.0
  %1399 = vadd.xlane.f32.xlu0 %v1398
  %v1400 = vpop.xlane.xlu0 %1399
  %v1401 = vsel %vm1283, %v1363, 0.0
  %1402 = vadd.xlane.f32.xlu0 %v1401
  %v1403 = vpop.xlane.xlu0 %1402
  %v1404 = vsel %vm1283, %v1365, 0.0
  %1405 = vadd.xlane.f32.xlu0 %v1404
  %v1406 = vpop.xlane.xlu0 %1405
  %v1407 = vsel %vm1283, %v1367, 0.0
  %1408 = vadd.xlane.f32.xlu0 %v1407
  %v1409 = vpop.xlane.xlu0 %1408
  %v1410 = vsel %vm1283, %v1369, 0.0
  %1411 = vadd.xlane.f32.xlu0 %v1410
  %v1412 = vpop.xlane.xlu0 %1411
  %v1413 = vsel %vm1283, %v1371, 0.0
  %1414 = vadd.xlane.f32.xlu0 %v1413
  %v1415 = vpop.xlane.xlu0 %1414
  %v1416 = vsel %vm1283, %v1373, 0.0
  %1417 = vadd.xlane.f32.xlu0 %v1416
  %v1418 = vpop.xlane.xlu0 %1417
  %v1419 = vsel %vm1283, %v1375, 0.0
  %1420 = vadd.xlane.f32.xlu0 %v1419
  %v1421 = vpop.xlane.xlu0 %1420
  %v1422 = vsel %vm1283, %v1377, 0.0
  %1423 = vadd.xlane.f32.xlu0 %v1422
  %v1424 = vpop.xlane.xlu0 %1423
  %v1425 = vsel %vm1283, %v1379, 0.0
  %1426 = vadd.xlane.f32.xlu0 %v1425
  %v1427 = vpop.xlane.xlu0 %1426
  %v1428 = vrcp.pop %v1382
  %v1429 = vrcp.pop %v1385
  %v1430 = vrcp.pop %v1388
  %v1431 = vrcp.pop %v1391
  %v1432 = vrcp.pop %v1394
  %v1433 = vrcp.pop %v1397
  %v1434 = vrcp.pop %v1400
  %v1435 = vrcp.pop %v1403
  %v1436 = vrcp.pop %v1406
  %v1437 = vrcp.pop %v1409
  %v1438 = vrcp.pop %v1412
  %v1439 = vrcp.pop %v1415
  %v1440 = vrcp.pop %v1418
  %v1441 = vrcp.pop %v1421
  %v1442 = vrcp.pop %v1424
  %v1443 = vrcp.pop %v1427
  %v1444 = vmul.f32 %v1349, %v1428
  %v1445 = vmul.f32 %v1351, %v1429
  %v1446 = vmul.f32 %v1353, %v1430
  %v1447 = vmul.f32 %v1355, %v1431
  %v1448 = vmul.f32 %v1357, %v1432
  %v1449 = vmul.f32 %v1359, %v1433
  %v1450 = vmul.f32 %v1361, %v1434
  %v1451 = vmul.f32 %v1363, %v1435
  %v1452 = vmul.f32 %v1365, %v1436
  %v1453 = vmul.f32 %v1367, %v1437
  %v1454 = vmul.f32 %v1369, %v1438
  %v1455 = vmul.f32 %v1371, %v1439
  %v1456 = vmul.f32 %v1373, %v1440
  %v1457 = vmul.f32 %v1375, %v1441
  %v1458 = vmul.f32 %v1377, %v1442
  %v1459 = vmul.f32 %v1379, %v1443
  %v1461 = vsel %vm1283, %v1444, 0
  %v1464 = vsel %vm1283, %v1445, 0
  %1466 = vmatprep.subr.mxu0 0.0
  %1467 = vmatpush1.msra.mxu0 %v476
  %1468 = vmatprep.subr.mxu0 0.0
  %1469 = vmatpush1.msra.mxu0 %v481
  %1470 = vmatprep.subr.mxu0 0.0
  %1471 = vmatpush1.msra.mxu0 0.0
  %1472 = vmatprep.subr.mxu0 0.0
  %1473 = vmatpush1.msra.mxu0 0.0
  %1474 = vmatprep.subr.mxu0 0.0
  %1475 = vmatpush1.msra.mxu0 0.0
  %1476 = vmatprep.subr.mxu0 0.0
  %1477 = vmatpush1.msra.mxu0 0.0
  %1478 = vmatprep.subr.mxu0 0.0
  %1479 = vmatpush1.msra.mxu0 0.0
  %1480 = vmatprep.subr.mxu0 0.0
  %1481 = vmatpush1.msra.mxu0 0.0
  %1482 = vmatprep.subr.mxu0 0.0
  %1483 = vmatpush1.msra.mxu0 0.0
  %1484 = vmatprep.subr.mxu0 0.0
  %1485 = vmatpush1.msra.mxu0 0.0
  %1486 = vmatprep.subr.mxu0 0.0
  %1487 = vmatpush1.msra.mxu0 0.0
  %1488 = vmatprep.subr.mxu0 0.0
  %1489 = vmatpush1.msra.mxu0 0.0
  %1490 = vmatprep.subr.mxu0 0.0
  %1491 = vmatpush1.msra.mxu0 0.0
  %1492 = vmatprep.subr.mxu0 0.0
  %1493 = vmatpush1.msra.mxu0 0.0
  %1494 = vmatprep.subr.mxu0 0.0
  %1495 = vmatpush1.msra.mxu0 0.0
  %1496 = vmatprep.subr.mxu0 0.0
  %1497 = vmatpush1.msra.mxu0 0.0
  %1498 = vmatprep.subr.mxu0 0.0
  %1499 = vmatpush1.msra.mxu0 0.0
  %1500 = vmatprep.subr.mxu0 0.0
  %1501 = vmatpush1.msra.mxu0 0.0
  %1502 = vmatprep.subr.mxu0 0.0
  %1503 = vmatpush1.msra.mxu0 0.0
  %1504 = vmatprep.subr.mxu0 0.0
  %1505 = vmatpush1.msra.mxu0 0.0
  %1506 = vmatprep.subr.mxu0 0.0
  %1507 = vmatpush1.msra.mxu0 0.0
  %1508 = vmatprep.subr.mxu0 0.0
  %1509 = vmatpush1.msra.mxu0 0.0
  %1510 = vmatprep.subr.mxu0 0.0
  %1511 = vmatpush1.msra.mxu0 0.0
  %1512 = vmatprep.subr.mxu0 0.0
  %1513 = vmatpush1.msra.mxu0 0.0
  %1514 = vmatprep.subr.mxu0 0.0
  %1515 = vmatpush1.msra.mxu0 0.0
  %1516 = vmatprep.subr.mxu0 0.0
  %1517 = vmatpush1.msra.mxu0 0.0
  %1518 = vmatprep.subr.mxu0 0.0
  %1519 = vmatpush1.msra.mxu0 0.0
  %1520 = vmatprep.subr.mxu0 0.0
  %1521 = vmatpush1.msra.mxu0 0.0
  %1522 = vmatprep.subr.mxu0 0.0
  %1523 = vmatpush1.msra.mxu0 0.0
  %1524 = vmatprep.subr.mxu0 0.0
  %1525 = vmatpush1.msra.mxu0 0.0
  %1526 = vmatprep.subr.mxu0 0.0
  %1527 = vmatpush1.msra.mxu0 0.0
  %1528 = vmatprep.subr.mxu0 0.0
  %1529 = vmatpush1.msra.mxu0 0.0
  %1530 = vmatprep.mubr.f32.mxu0 0.0
  %1531 = vmatmul.mubr.f32.gmra.mrb[0].mxu0 %v1461
  %v1532 = vpop.f32.mrb[0].mxu0
  %v1533 = vadd.f32 0.0, %v1532
  %v1534 = vpop.f32.mrb[0].mxu0
  %1535 = vmatprep.mubr.f32.mxu0 0.0
  %1536 = vmatmul.mubr.f32.gmra.mrb[0].mxu0 %v1464
  %v1537 = vpop.f32.mrb[0].mxu0
  %v1538 = vadd.f32 0.0, %v1537
  %v1539 = vpop.f32.mrb[0].mxu0
  %1540 = vdwg.mxu0
  %v1542 = vsel %vm1283, %v1446, 0
  %v1545 = vsel %vm1283, %v1447, 0
  %1547 = vmatprep.subr.mxu0 0.0
  %1548 = vmatpush1.msra.mxu0 %v486
  %1549 = vmatprep.subr.mxu0 0.0
  %1550 = vmatpush1.msra.mxu0 %v491
  %1551 = vmatprep.subr.mxu0 0.0
  %1552 = vmatpush1.msra.mxu0 0.0
  %1553 = vmatprep.subr.mxu0 0.0
  %1554 = vmatpush1.msra.mxu0 0.0
  %1555 = vmatprep.subr.mxu0 0.0
  %1556 = vmatpush1.msra.mxu0 0.0
  %1557 = vmatprep.subr.mxu0 0.0
  %1558 = vmatpush1.msra.mxu0 0.0
  %1559 = vmatprep.subr.mxu0 0.0
  %1560 = vmatpush1.msra.mxu0 0.0
  %1561 = vmatprep.subr.mxu0 0.0
  %1562 = vmatpush1.msra.mxu0 0.0
  %1563 = vmatprep.subr.mxu0 0.0
  %1564 = vmatpush1.msra.mxu0 0.0
  %1565 = vmatprep.subr.mxu0 0.0
  %1566 = vmatpush1.msra.mxu0 0.0
  %1567 = vmatprep.subr.mxu0 0.0
  %1568 = vmatpush1.msra.mxu0 0.0
  %1569 = vmatprep.subr.mxu0 0.0
  %1570 = vmatpush1.msra.mxu0 0.0
  %1571 = vmatprep.subr.mxu0 0.0
  %1572 = vmatpush1.msra.mxu0 0.0
  %1573 = vmatprep.subr.mxu0 0.0
  %1574 = vmatpush1.msra.mxu0 0.0
  %1575 = vmatprep.subr.mxu0 0.0
  %1576 = vmatpush1.msra.mxu0 0.0
  %1577 = vmatprep.subr.mxu0 0.0
  %1578 = vmatpush1.msra.mxu0 0.0
  %1579 = vmatprep.subr.mxu0 0.0
  %1580 = vmatpush1.msra.mxu0 0.0
  %1581 = vmatprep.subr.mxu0 0.0
  %1582 = vmatpush1.msra.mxu0 0.0
  %1583 = vmatprep.subr.mxu0 0.0
  %1584 = vmatpush1.msra.mxu0 0.0
  %1585 = vmatprep.subr.mxu0 0.0
  %1586 = vmatpush1.msra.mxu0 0.0
  %1587 = vmatprep.subr.mxu0 0.0
  %1588 = vmatpush1.msra.mxu0 0.0
  %1589 = vmatprep.subr.mxu0 0.0
  %1590 = vmatpush1.msra.mxu0 0.0
  %1591 = vmatprep.subr.mxu0 0.0
  %1592 = vmatpush1.msra.mxu0 0.0
  %1593 = vmatprep.subr.mxu0 0.0
  %1594 = vmatpush1.msra.mxu0 0.0
  %1595 = vmatprep.subr.mxu0 0.0
  %1596 = vmatpush1.msra.mxu0 0.0
  %1597 = vmatprep.subr.mxu0 0.0
  %1598 = vmatpush1.msra.mxu0 0.0
  %1599 = vmatprep.subr.mxu0 0.0
  %1600 = vmatpush1.msra.mxu0 0.0
  %1601 = vmatprep.subr.mxu0 0.0
  %1602 = vmatpush1.msra.mxu0 0.0
  %1603 = vmatprep.subr.mxu0 0.0
  %1604 = vmatpush1.msra.mxu0 0.0
  %1605 = vmatprep.subr.mxu0 0.0
  %1606 = vmatpush1.msra.mxu0 0.0
  %1607 = vmatprep.subr.mxu0 0.0
  %1608 = vmatpush1.msra.mxu0 0.0
  %1609 = vmatprep.subr.mxu0 0.0
  %1610 = vmatpush1.msra.mxu0 0.0
  %1611 = vmatprep.mubr.f32.mxu0 0.0
  %1612 = vmatmul.mubr.f32.gmra.mrb[0].mxu0 %v1542
  %v1613 = vpop.f32.mrb[0].mxu0
  %v1614 = vadd.f32 0.0, %v1613
  %v1615 = vpop.f32.mrb[0].mxu0
  %1616 = vmatprep.mubr.f32.mxu0 0.0
  %1617 = vmatmul.mubr.f32.gmra.mrb[0].mxu0 %v1545
  %v1618 = vpop.f32.mrb[0].mxu0
  %v1619 = vadd.f32 0.0, %v1618
  %v1620 = vpop.f32.mrb[0].mxu0
  %1621 = vdwg.mxu0
  %v1623 = vsel %vm1283, %v1448, 0
  %v1626 = vsel %vm1283, %v1449, 0
  %1628 = vmatprep.subr.mxu0 0.0
  %1629 = vmatpush1.msra.mxu0 %v496
  %1630 = vmatprep.subr.mxu0 0.0
  %1631 = vmatpush1.msra.mxu0 %v501
  %1632 = vmatprep.subr.mxu0 0.0
  %1633 = vmatpush1.msra.mxu0 0.0
  %1634 = vmatprep.subr.mxu0 0.0
  %1635 = vmatpush1.msra.mxu0 0.0
  %1636 = vmatprep.subr.mxu0 0.0
  %1637 = vmatpush1.msra.mxu0 0.0
  %1638 = vmatprep.subr.mxu0 0.0
  %1639 = vmatpush1.msra.mxu0 0.0
  %1640 = vmatprep.subr.mxu0 0.0
  %1641 = vmatpush1.msra.mxu0 0.0
  %1642 = vmatprep.subr.mxu0 0.0
  %1643 = vmatpush1.msra.mxu0 0.0
  %1644 = vmatprep.subr.mxu0 0.0
  %1645 = vmatpush1.msra.mxu0 0.0
  %1646 = vmatprep.subr.mxu0 0.0
  %1647 = vmatpush1.msra.mxu0 0.0
  %1648 = vmatprep.subr.mxu0 0.0
  %1649 = vmatpush1.msra.mxu0 0.0
  %1650 = vmatprep.subr.mxu0 0.0
  %1651 = vmatpush1.msra.mxu0 0.0
  %1652 = vmatprep.subr.mxu0 0.0
  %1653 = vmatpush1.msra.mxu0 0.0
  %1654 = vmatprep.subr.mxu0 0.0
  %1655 = vmatpush1.msra.mxu0 0.0
  %1656 = vmatprep.subr.mxu0 0.0
  %1657 = vmatpush1.msra.mxu0 0.0
  %1658 = vmatprep.subr.mxu0 0.0
  %1659 = vmatpush1.msra.mxu0 0.0
  %1660 = vmatprep.subr.mxu0 0.0
  %1661 = vmatpush1.msra.mxu0 0.0
  %1662 = vmatprep.subr.mxu0 0.0
  %1663 = vmatpush1.msra.mxu0 0.0
  %1664 = vmatprep.subr.mxu0 0.0
  %1665 = vmatpush1.msra.mxu0 0.0
  %1666 = vmatprep.subr.mxu0 0.0
  %1667 = vmatpush1.msra.mxu0 0.0
  %1668 = vmatprep.subr.mxu0 0.0
  %1669 = vmatpush1.msra.mxu0 0.0
  %1670 = vmatprep.subr.mxu0 0.0
  %1671 = vmatpush1.msra.mxu0 0.0
  %1672 = vmatprep.subr.mxu0 0.0
  %1673 = vmatpush1.msra.mxu0 0.0
  %1674 = vmatprep.subr.mxu0 0.0
  %1675 = vmatpush1.msra.mxu0 0.0
  %1676 = vmatprep.subr.mxu0 0.0
  %1677 = vmatpush1.msra.mxu0 0.0
  %1678 = vmatprep.subr.mxu0 0.0
  %1679 = vmatpush1.msra.mxu0 0.0
  %1680 = vmatprep.subr.mxu0 0.0
  %1681 = vmatpush1.msra.mxu0 0.0
  %1682 = vmatprep.subr.mxu0 0.0
  %1683 = vmatpush1.msra.mxu0 0.0
  %1684 = vmatprep.subr.mxu0 0.0
  %1685 = vmatpush1.msra.mxu0 0.0
  %1686 = vmatprep.subr.mxu0 0.0
  %1687 = vmatpush1.msra.mxu0 0.0
  %1688 = vmatprep.subr.mxu0 0.0
  %1689 = vmatpush1.msra.mxu0 0.0
  %1690 = vmatprep.subr.mxu0 0.0
  %1691 = vmatpush1.msra.mxu0 0.0
  %1692 = vmatprep.mubr.f32.mxu0 0.0
  %1693 = vmatmul.mubr.f32.gmra.mrb[0].mxu0 %v1623
  %v1694 = vpop.f32.mrb[0].mxu0
  %v1695 = vadd.f32 0.0, %v1694
  %v1696 = vpop.f32.mrb[0].mxu0
  %1697 = vmatprep.mubr.f32.mxu0 0.0
  %1698 = vmatmul.mubr.f32.gmra.mrb[0].mxu0 %v1626
  %v1699 = vpop.f32.mrb[0].mxu0
  %v1700 = vadd.f32 0.0, %v1699
  %v1701 = vpop.f32.mrb[0].mxu0
  %1702 = vdwg.mxu0
  %v1704 = vsel %vm1283, %v1450, 0
  %v1707 = vsel %vm1283, %v1451, 0
  %1709 = vmatprep.subr.mxu0 0.0
  %1710 = vmatpush1.msra.mxu0 %v506
  %1711 = vmatprep.subr.mxu0 0.0
  %1712 = vmatpush1.msra.mxu0 %v511
  %1713 = vmatprep.subr.mxu0 0.0
  %1714 = vmatpush1.msra.mxu0 0.0
  %1715 = vmatprep.subr.mxu0 0.0
  %1716 = vmatpush1.msra.mxu0 0.0
  %1717 = vmatprep.subr.mxu0 0.0
  %1718 = vmatpush1.msra.mxu0 0.0
  %1719 = vmatprep.subr.mxu0 0.0
  %1720 = vmatpush1.msra.mxu0 0.0
  %1721 = vmatprep.subr.mxu0 0.0
  %1722 = vmatpush1.msra.mxu0 0.0
  %1723 = vmatprep.subr.mxu0 0.0
  %1724 = vmatpush1.msra.mxu0 0.0
  %1725 = vmatprep.subr.mxu0 0.0
  %1726 = vmatpush1.msra.mxu0 0.0
  %1727 = vmatprep.subr.mxu0 0.0
  %1728 = vmatpush1.msra.mxu0 0.0
  %1729 = vmatprep.subr.mxu0 0.0
  %1730 = vmatpush1.msra.mxu0 0.0
  %1731 = vmatprep.subr.mxu0 0.0
  %1732 = vmatpush1.msra.mxu0 0.0
  %1733 = vmatprep.subr.mxu0 0.0
  %1734 = vmatpush1.msra.mxu0 0.0
  %1735 = vmatprep.subr.mxu0 0.0
  %1736 = vmatpush1.msra.mxu0 0.0
  %1737 = vmatprep.subr.mxu0 0.0
  %1738 = vmatpush1.msra.mxu0 0.0
  %1739 = vmatprep.subr.mxu0 0.0
  %1740 = vmatpush1.msra.mxu0 0.0
  %1741 = vmatprep.subr.mxu0 0.0
  %1742 = vmatpush1.msra.mxu0 0.0
  %1743 = vmatprep.subr.mxu0 0.0
  %1744 = vmatpush1.msra.mxu0 0.0
  %1745 = vmatprep.subr.mxu0 0.0
  %1746 = vmatpush1.msra.mxu0 0.0
  %1747 = vmatprep.subr.mxu0 0.0
  %1748 = vmatpush1.msra.mxu0 0.0
  %1749 = vmatprep.subr.mxu0 0.0
  %1750 = vmatpush1.msra.mxu0 0.0
  %1751 = vmatprep.subr.mxu0 0.0
  %1752 = vmatpush1.msra.mxu0 0.0
  %1753 = vmatprep.subr.mxu0 0.0
  %1754 = vmatpush1.msra.mxu0 0.0
  %1755 = vmatprep.subr.mxu0 0.0
  %1756 = vmatpush1.msra.mxu0 0.0
  %1757 = vmatprep.subr.mxu0 0.0
  %1758 = vmatpush1.msra.mxu0 0.0
  %1759 = vmatprep.subr.mxu0 0.0
  %1760 = vmatpush1.msra.mxu0 0.0
  %1761 = vmatprep.subr.mxu0 0.0
  %1762 = vmatpush1.msra.mxu0 0.0
  %1763 = vmatprep.subr.mxu0 0.0
  %1764 = vmatpush1.msra.mxu0 0.0
  %1765 = vmatprep.subr.mxu0 0.0
  %1766 = vmatpush1.msra.mxu0 0.0
  %1767 = vmatprep.subr.mxu0 0.0
  %1768 = vmatpush1.msra.mxu0 0.0
  %1769 = vmatprep.subr.mxu0 0.0
  %1770 = vmatpush1.msra.mxu0 0.0
  %1771 = vmatprep.subr.mxu0 0.0
  %1772 = vmatpush1.msra.mxu0 0.0
  %1773 = vmatprep.mubr.f32.mxu0 0.0
  %1774 = vmatmul.mubr.f32.gmra.mrb[0].mxu0 %v1704
  %v1775 = vpop.f32.mrb[0].mxu0
  %v1776 = vadd.f32 0.0, %v1775
  %v1777 = vpop.f32.mrb[0].mxu0
  %1778 = vmatprep.mubr.f32.mxu0 0.0
  %1779 = vmatmul.mubr.f32.gmra.mrb[0].mxu0 %v1707
  %v1780 = vpop.f32.mrb[0].mxu0
  %v1781 = vadd.f32 0.0, %v1780
  %v1782 = vpop.f32.mrb[0].mxu0
  %1783 = vdwg.mxu0
  %v1785 = vsel %vm1283, %v1452, 0
  %v1788 = vsel %vm1283, %v1453, 0
  %1790 = vmatprep.subr.mxu0 0.0
  %1791 = vmatpush1.msra.mxu0 %v516
  %1792 = vmatprep.subr.mxu0 0.0
  %1793 = vmatpush1.msra.mxu0 %v521
  %1794 = vmatprep.subr.mxu0 0.0
  %1795 = vmatpush1.msra.mxu0 0.0
  %1796 = vmatprep.subr.mxu0 0.0
  %1797 = vmatpush1.msra.mxu0 0.0
  %1798 = vmatprep.subr.mxu0 0.0
  %1799 = vmatpush1.msra.mxu0 0.0
  %1800 = vmatprep.subr.mxu0 0.0
  %1801 = vmatpush1.msra.mxu0 0.0
  %1802 = vmatprep.subr.mxu0 0.0
  %1803 = vmatpush1.msra.mxu0 0.0
  %1804 = vmatprep.subr.mxu0 0.0
  %1805 = vmatpush1.msra.mxu0 0.0
  %1806 = vmatprep.subr.mxu0 0.0
  %1807 = vmatpush1.msra.mxu0 0.0
  %1808 = vmatprep.subr.mxu0 0.0
  %1809 = vmatpush1.msra.mxu0 0.0
  %1810 = vmatprep.subr.mxu0 0.0
  %1811 = vmatpush1.msra.mxu0 0.0
  %1812 = vmatprep.subr.mxu0 0.0
  %1813 = vmatpush1.msra.mxu0 0.0
  %1814 = vmatprep.subr.mxu0 0.0
  %1815 = vmatpush1.msra.mxu0 0.0
  %1816 = vmatprep.subr.mxu0 0.0
  %1817 = vmatpush1.msra.mxu0 0.0
  %1818 = vmatprep.subr.mxu0 0.0
  %1819 = vmatpush1.msra.mxu0 0.0
  %1820 = vmatprep.subr.mxu0 0.0
  %1821 = vmatpush1.msra.mxu0 0.0
  %1822 = vmatprep.subr.mxu0 0.0
  %1823 = vmatpush1.msra.mxu0 0.0
  %1824 = vmatprep.subr.mxu0 0.0
  %1825 = vmatpush1.msra.mxu0 0.0
  %1826 = vmatprep.subr.mxu0 0.0
  %1827 = vmatpush1.msra.mxu0 0.0
  %1828 = vmatprep.subr.mxu0 0.0
  %1829 = vmatpush1.msra.mxu0 0.0
  %1830 = vmatprep.subr.mxu0 0.0
  %1831 = vmatpush1.msra.mxu0 0.0
  %1832 = vmatprep.subr.mxu0 0.0
  %1833 = vmatpush1.msra.mxu0 0.0
  %1834 = vmatprep.subr.mxu0 0.0
  %1835 = vmatpush1.msra.mxu0 0.0
  %1836 = vmatprep.subr.mxu0 0.0
  %1837 = vmatpush1.msra.mxu0 0.0
  %1838 = vmatprep.subr.mxu0 0.0
  %1839 = vmatpush1.msra.mxu0 0.0
  %1840 = vmatprep.subr.mxu0 0.0
  %1841 = vmatpush1.msra.mxu0 0.0
  %1842 = vmatprep.subr.mxu0 0.0
  %1843 = vmatpush1.msra.mxu0 0.0
  %1844 = vmatprep.subr.mxu0 0.0
  %1845 = vmatpush1.msra.mxu0 0.0
  %1846 = vmatprep.subr.mxu0 0.0
  %1847 = vmatpush1.msra.mxu0 0.0
  %1848 = vmatprep.subr.mxu0 0.0
  %1849 = vmatpush1.msra.mxu0 0.0
  %1850 = vmatprep.subr.mxu0 0.0
  %1851 = vmatpush1.msra.mxu0 0.0
  %1852 = vmatprep.subr.mxu0 0.0
  %1853 = vmatpush1.msra.mxu0 0.0
  %1854 = vmatprep.mubr.f32.mxu0 0.0
  %1855 = vmatmul.mubr.f32.gmra.mrb[0].mxu0 %v1785
  %v1856 = vpop.f32.mrb[0].mxu0
  %v1857 = vadd.f32 0.0, %v1856
  %v1858 = vpop.f32.mrb[0].mxu0
  %1859 = vmatprep.mubr.f32.mxu0 0.0
  %1860 = vmatmul.mubr.f32.gmra.mrb[0].mxu0 %v1788
  %v1861 = vpop.f32.mrb[0].mxu0
  %v1862 = vadd.f32 0.0, %v1861
  %v1863 = vpop.f32.mrb[0].mxu0
  %1864 = vdwg.mxu0
  %v1866 = vsel %vm1283, %v1454, 0
  %v1869 = vsel %vm1283, %v1455, 0
  %1871 = vmatprep.subr.mxu0 0.0
  %1872 = vmatpush1.msra.mxu0 %v526
  %1873 = vmatprep.subr.mxu0 0.0
  %1874 = vmatpush1.msra.mxu0 %v531
  %1875 = vmatprep.subr.mxu0 0.0
  %1876 = vmatpush1.msra.mxu0 0.0
  %1877 = vmatprep.subr.mxu0 0.0
  %1878 = vmatpush1.msra.mxu0 0.0
  %1879 = vmatprep.subr.mxu0 0.0
  %1880 = vmatpush1.msra.mxu0 0.0
  %1881 = vmatprep.subr.mxu0 0.0
  %1882 = vmatpush1.msra.mxu0 0.0
  %1883 = vmatprep.subr.mxu0 0.0
  %1884 = vmatpush1.msra.mxu0 0.0
  %1885 = vmatprep.subr.mxu0 0.0
  %1886 = vmatpush1.msra.mxu0 0.0
  %1887 = vmatprep.subr.mxu0 0.0
  %1888 = vmatpush1.msra.mxu0 0.0
  %1889 = vmatprep.subr.mxu0 0.0
  %1890 = vmatpush1.msra.mxu0 0.0
  %1891 = vmatprep.subr.mxu0 0.0
  %1892 = vmatpush1.msra.mxu0 0.0
  %1893 = vmatprep.subr.mxu0 0.0
  %1894 = vmatpush1.msra.mxu0 0.0
  %1895 = vmatprep.subr.mxu0 0.0
  %1896 = vmatpush1.msra.mxu0 0.0
  %1897 = vmatprep.subr.mxu0 0.0
  %1898 = vmatpush1.msra.mxu0 0.0
  %1899 = vmatprep.subr.mxu0 0.0
  %1900 = vmatpush1.msra.mxu0 0.0
  %1901 = vmatprep.subr.mxu0 0.0
  %1902 = vmatpush1.msra.mxu0 0.0
  %1903 = vmatprep.subr.mxu0 0.0
  %1904 = vmatpush1.msra.mxu0 0.0
  %1905 = vmatprep.subr.mxu0 0.0
  %1906 = vmatpush1.msra.mxu0 0.0
  %1907 = vmatprep.subr.mxu0 0.0
  %1908 = vmatpush1.msra.mxu0 0.0
  %1909 = vmatprep.subr.mxu0 0.0
  %1910 = vmatpush1.msra.mxu0 0.0
  %1911 = vmatprep.subr.mxu0 0.0
  %1912 = vmatpush1.msra.mxu0 0.0
  %1913 = vmatprep.subr.mxu0 0.0
  %1914 = vmatpush1.msra.mxu0 0.0
  %1915 = vmatprep.subr.mxu0 0.0
  %1916 = vmatpush1.msra.mxu0 0.0
  %1917 = vmatprep.subr.mxu0 0.0
  %1918 = vmatpush1.msra.mxu0 0.0
  %1919 = vmatprep.subr.mxu0 0.0
  %1920 = vmatpush1.msra.mxu0 0.0
  %1921 = vmatprep.subr.mxu0 0.0
  %1922 = vmatpush1.msra.mxu0 0.0
  %1923 = vmatprep.subr.mxu0 0.0
  %1924 = vmatpush1.msra.mxu0 0.0
  %1925 = vmatprep.subr.mxu0 0.0
  %1926 = vmatpush1.msra.mxu0 0.0
  %1927 = vmatprep.subr.mxu0 0.0
  %1928 = vmatpush1.msra.mxu0 0.0
  %1929 = vmatprep.subr.mxu0 0.0
  %1930 = vmatpush1.msra.mxu0 0.0
  %1931 = vmatprep.subr.mxu0 0.0
  %1932 = vmatpush1.msra.mxu0 0.0
  %1933 = vmatprep.subr.mxu0 0.0
  %1934 = vmatpush1.msra.mxu0 0.0
  %1935 = vmatprep.mubr.f32.mxu0 0.0
  %1936 = vmatmul.mubr.f32.gmra.mrb[0].mxu0 %v1866
  %v1937 = vpop.f32.mrb[0].mxu0
  %v1938 = vadd.f32 0.0, %v1937
  %v1939 = vpop.f32.mrb[0].mxu0
  %1940 = vmatprep.mubr.f32.mxu0 0.0
  %1941 = vmatmul.mubr.f32.gmra.mrb[0].mxu0 %v1869
  %v1942 = vpop.f32.mrb[0].mxu0
  %v1943 = vadd.f32 0.0, %v1942
  %v1944 = vpop.f32.mrb[0].mxu0
  %1945 = vdwg.mxu0
  %v1947 = vsel %vm1283, %v1456, 0
  %v1950 = vsel %vm1283, %v1457, 0
  %1952 = vmatprep.subr.mxu0 0.0
  %1953 = vmatpush1.msra.mxu0 %v536
  %1954 = vmatprep.subr.mxu0 0.0
  %1955 = vmatpush1.msra.mxu0 %v541
  %1956 = vmatprep.subr.mxu0 0.0
  %1957 = vmatpush1.msra.mxu0 0.0
  %1958 = vmatprep.subr.mxu0 0.0
  %1959 = vmatpush1.msra.mxu0 0.0
  %1960 = vmatprep.subr.mxu0 0.0
  %1961 = vmatpush1.msra.mxu0 0.0
  %1962 = vmatprep.subr.mxu0 0.0
  %1963 = vmatpush1.msra.mxu0 0.0
  %1964 = vmatprep.subr.mxu0 0.0
  %1965 = vmatpush1.msra.mxu0 0.0
  %1966 = vmatprep.subr.mxu0 0.0
  %1967 = vmatpush1.msra.mxu0 0.0
  %1968 = vmatprep.subr.mxu0 0.0
  %1969 = vmatpush1.msra.mxu0 0.0
  %1970 = vmatprep.subr.mxu0 0.0
  %1971 = vmatpush1.msra.mxu0 0.0
  %1972 = vmatprep.subr.mxu0 0.0
  %1973 = vmatpush1.msra.mxu0 0.0
  %1974 = vmatprep.subr.mxu0 0.0
  %1975 = vmatpush1.msra.mxu0 0.0
  %1976 = vmatprep.subr.mxu0 0.0
  %1977 = vmatpush1.msra.mxu0 0.0
  %1978 = vmatprep.subr.mxu0 0.0
  %1979 = vmatpush1.msra.mxu0 0.0
  %1980 = vmatprep.subr.mxu0 0.0
  %1981 = vmatpush1.msra.mxu0 0.0
  %1982 = vmatprep.subr.mxu0 0.0
  %1983 = vmatpush1.msra.mxu0 0.0
  %1984 = vmatprep.subr.mxu0 0.0
  %1985 = vmatpush1.msra.mxu0 0.0
  %1986 = vmatprep.subr.mxu0 0.0
  %1987 = vmatpush1.msra.mxu0 0.0
  %1988 = vmatprep.subr.mxu0 0.0
  %1989 = vmatpush1.msra.mxu0 0.0
  %1990 = vmatprep.subr.mxu0 0.0
  %1991 = vmatpush1.msra.mxu0 0.0
  %1992 = vmatprep.subr.mxu0 0.0
  %1993 = vmatpush1.msra.mxu0 0.0
  %1994 = vmatprep.subr.mxu0 0.0
  %1995 = vmatpush1.msra.mxu0 0.0
  %1996 = vmatprep.subr.mxu0 0.0
  %1997 = vmatpush1.msra.mxu0 0.0
  %1998 = vmatprep.subr.mxu0 0.0
  %1999 = vmatpush1.msra.mxu0 0.0
  %2000 = vmatprep.subr.mxu0 0.0
  %2001 = vmatpush1.msra.mxu0 0.0
  %2002 = vmatprep.subr.mxu0 0.0
  %2003 = vmatpush1.msra.mxu0 0.0
  %2004 = vmatprep.subr.mxu0 0.0
  %2005 = vmatpush1.msra.mxu0 0.0
  %2006 = vmatprep.subr.mxu0 0.0
  %2007 = vmatpush1.msra.mxu0 0.0
  %2008 = vmatprep.subr.mxu0 0.0
  %2009 = vmatpush1.msra.mxu0 0.0
  %2010 = vmatprep.subr.mxu0 0.0
  %2011 = vmatpush1.msra.mxu0 0.0
  %2012 = vmatprep.subr.mxu0 0.0
  %2013 = vmatpush1.msra.mxu0 0.0
  %2014 = vmatprep.subr.mxu0 0.0
  %2015 = vmatpush1.msra.mxu0 0.0
  %2016 = vmatprep.mubr.f32.mxu0 0.0
  %2017 = vmatmul.mubr.f32.gmra.mrb[0].mxu0 %v1947
  %v2018 = vpop.f32.mrb[0].mxu0
  %v2019 = vadd.f32 0.0, %v2018
  %v2020 = vpop.f32.mrb[0].mxu0
  %2021 = vmatprep.mubr.f32.mxu0 0.0
  %2022 = vmatmul.mubr.f32.gmra.mrb[0].mxu0 %v1950
  %v2023 = vpop.f32.mrb[0].mxu0
  %v2024 = vadd.f32 0.0, %v2023
  %v2025 = vpop.f32.mrb[0].mxu0
  %2026 = vdwg.mxu0
  %v2028 = vsel %vm1283, %v1458, 0
  %v2031 = vsel %vm1283, %v1459, 0
  %2033 = vmatprep.subr.mxu0 0.0
  %2034 = vmatpush1.msra.mxu0 %v546
  %2035 = vmatprep.subr.mxu0 0.0
  %2036 = vmatpush1.msra.mxu0 %v551
  %2037 = vmatprep.subr.mxu0 0.0
  %2038 = vmatpush1.msra.mxu0 0.0
  %2039 = vmatprep.subr.mxu0 0.0
  %2040 = vmatpush1.msra.mxu0 0.0
  %2041 = vmatprep.subr.mxu0 0.0
  %2042 = vmatpush1.msra.mxu0 0.0
  %2043 = vmatprep.subr.mxu0 0.0
  %2044 = vmatpush1.msra.mxu0 0.0
  %2045 = vmatprep.subr.mxu0 0.0
  %2046 = vmatpush1.msra.mxu0 0.0
  %2047 = vmatprep.subr.mxu0 0.0
  %2048 = vmatpush1.msra.mxu0 0.0
  %2049 = vmatprep.subr.mxu0 0.0
  %2050 = vmatpush1.msra.mxu0 0.0
  %2051 = vmatprep.subr.mxu0 0.0
  %2052 = vmatpush1.msra.mxu0 0.0
  %2053 = vmatprep.subr.mxu0 0.0
  %2054 = vmatpush1.msra.mxu0 0.0
  %2055 = vmatprep.subr.mxu0 0.0
  %2056 = vmatpush1.msra.mxu0 0.0
  %2057 = vmatprep.subr.mxu0 0.0
  %2058 = vmatpush1.msra.mxu0 0.0
  %2059 = vmatprep.subr.mxu0 0.0
  %2060 = vmatpush1.msra.mxu0 0.0
  %2061 = vmatprep.subr.mxu0 0.0
  %2062 = vmatpush1.msra.mxu0 0.0
  %2063 = vmatprep.subr.mxu0 0.0
  %2064 = vmatpush1.msra.mxu0 0.0
  %2065 = vmatprep.subr.mxu0 0.0
  %2066 = vmatpush1.msra.mxu0 0.0
  %2067 = vmatprep.subr.mxu0 0.0
  %2068 = vmatpush1.msra.mxu0 0.0
  %2069 = vmatprep.subr.mxu0 0.0
  %2070 = vmatpush1.msra.mxu0 0.0
  %2071 = vmatprep.subr.mxu0 0.0
  %2072 = vmatpush1.msra.mxu0 0.0
  %2073 = vmatprep.subr.mxu0 0.0
  %2074 = vmatpush1.msra.mxu0 0.0
  %2075 = vmatprep.subr.mxu0 0.0
  %2076 = vmatpush1.msra.mxu0 0.0
  %2077 = vmatprep.subr.mxu0 0.0
  %2078 = vmatpush1.msra.mxu0 0.0
  %2079 = vmatprep.subr.mxu0 0.0
  %2080 = vmatpush1.msra.mxu0 0.0
  %2081 = vmatprep.subr.mxu0 0.0
  %2082 = vmatpush1.msra.mxu0 0.0
  %2083 = vmatprep.subr.mxu0 0.0
  %2084 = vmatpush1.msra.mxu0 0.0
  %2085 = vmatprep.subr.mxu0 0.0
  %2086 = vmatpush1.msra.mxu0 0.0
  %2087 = vmatprep.subr.mxu0 0.0
  %2088 = vmatpush1.msra.mxu0 0.0
  %2089 = vmatprep.subr.mxu0 0.0
  %2090 = vmatpush1.msra.mxu0 0.0
  %2091 = vmatprep.subr.mxu0 0.0
  %2092 = vmatpush1.msra.mxu0 0.0
  %2093 = vmatprep.subr.mxu0 0.0
  %2094 = vmatpush1.msra.mxu0 0.0
  %2095 = vmatprep.subr.mxu0 0.0
  %2096 = vmatpush1.msra.mxu0 0.0
  %2097 = vmatprep.mubr.f32.mxu0 0.0
  %2098 = vmatmul.mubr.f32.gmra.mrb[0].mxu0 %v2028
  %v2099 = vpop.f32.mrb[0].mxu0
  %v2100 = vadd.f32 0.0, %v2099
  %v2101 = vpop.f32.mrb[0].mxu0
  %2102 = vmatprep.mubr.f32.mxu0 0.0
  %2103 = vmatmul.mubr.f32.gmra.mrb[0].mxu0 %v2031
  %v2104 = vpop.f32.mrb[0].mxu0
  %v2105 = vadd.f32 0.0, %v2104
  %v2106 = vpop.f32.mrb[0].mxu0
  %2107 = vdwg.mxu0
  %s2108 = scalar_lea.vmem %s1, 32
  %v2109 = vld [vmem:[%s2108] sm:$0xff]
  %v2110 = vld [vmem:[%s2108 + $0x8] sm:$0xff]
  %v2111 = vld [vmem:[%s2108 + $0x10] sm:$0xff]
  %v2112 = vld [vmem:[%s2108 + $0x18] sm:$0xff]
  %2113 = vmatprep.subr.mxu0 0.0
  %2114 = vmatpush1.msra.mxu0 %v2109
  %2115 = vmatprep.subr.mxu0 0.0
  %2116 = vmatpush1.msra.mxu0 %v2110
  %2117 = vmatprep.subr.mxu0 0.0
  %2118 = vmatpush1.msra.mxu0 %v2111
  %2119 = vmatprep.subr.mxu0 0.0
  %2120 = vmatpush1.msra.mxu0 %v2112
  %2121 = vmatprep.subr.mxu0 0.0
  %2122 = vmatpush1.msra.mxu0 0.0
  %2123 = vmatprep.subr.mxu0 0.0
  %2124 = vmatpush1.msra.mxu0 0.0
  %2125 = vmatprep.subr.mxu0 0.0
  %2126 = vmatpush1.msra.mxu0 0.0
  %2127 = vmatprep.subr.mxu0 0.0
  %2128 = vmatpush1.msra.mxu0 0.0
  %2129 = vmatprep.subr.mxu0 0.0
  %2130 = vmatpush1.msra.mxu0 0.0
  %2131 = vmatprep.subr.mxu0 0.0
  %2132 = vmatpush1.msra.mxu0 0.0
  %2133 = vmatprep.subr.mxu0 0.0
  %2134 = vmatpush1.msra.mxu0 0.0
  %2135 = vmatprep.subr.mxu0 0.0
  %2136 = vmatpush1.msra.mxu0 0.0
  %2137 = vmatprep.subr.mxu0 0.0
  %2138 = vmatpush1.msra.mxu0 0.0
  %2139 = vmatprep.subr.mxu0 0.0
  %2140 = vmatpush1.msra.mxu0 0.0
  %2141 = vmatprep.subr.mxu0 0.0
  %2142 = vmatpush1.msra.mxu0 0.0
  %2143 = vmatprep.subr.mxu0 0.0
  %2144 = vmatpush1.msra.mxu0 0.0
  %2145 = vmatprep.subr.mxu0 0.0
  %2146 = vmatpush1.msra.mxu0 0.0
  %2147 = vmatprep.subr.mxu0 0.0
  %2148 = vmatpush1.msra.mxu0 0.0
  %2149 = vmatprep.subr.mxu0 0.0
  %2150 = vmatpush1.msra.mxu0 0.0
  %2151 = vmatprep.subr.mxu0 0.0
  %2152 = vmatpush1.msra.mxu0 0.0
  %2153 = vmatprep.subr.mxu0 0.0
  %2154 = vmatpush1.msra.mxu0 0.0
  %2155 = vmatprep.subr.mxu0 0.0
  %2156 = vmatpush1.msra.mxu0 0.0
  %2157 = vmatprep.subr.mxu0 0.0
  %2158 = vmatpush1.msra.mxu0 0.0
  %2159 = vmatprep.subr.mxu0 0.0
  %2160 = vmatpush1.msra.mxu0 0.0
  %2161 = vmatprep.subr.mxu0 0.0
  %2162 = vmatpush1.msra.mxu0 0.0
  %2163 = vmatprep.subr.mxu0 0.0
  %2164 = vmatpush1.msra.mxu0 0.0
  %2165 = vmatprep.subr.mxu0 0.0
  %2166 = vmatpush1.msra.mxu0 0.0
  %2167 = vmatprep.subr.mxu0 0.0
  %2168 = vmatpush1.msra.mxu0 0.0
  %2169 = vmatprep.subr.mxu0 0.0
  %2170 = vmatpush1.msra.mxu0 0.0
  %2171 = vmatprep.subr.mxu0 0.0
  %2172 = vmatpush1.msra.mxu0 0.0
  %2173 = vmatprep.subr.mxu0 0.0
  %2174 = vmatpush1.msra.mxu0 0.0
  %2175 = vmatprep.subr.mxu0 0.0
  %2176 = vmatpush1.msra.mxu0 0.0
  %2177 = vmatprep.mubr.f32.mxu0 0.0
  %2178 = vmatmul.mubr.f32.gmra.mrb[0].mxu0 %v64
  %v2179 = vpop.f32.mrb[0].mxu0
  %v2180 = vadd.f32 0.0, %v2179
  %v2181 = vpop.f32.mrb[0].mxu0
  %2182 = vmatprep.mubr.f32.mxu0 0.0
  %2183 = vmatmul.mubr.f32.gmra.mrb[0].mxu0 %v67
  %v2184 = vpop.f32.mrb[0].mxu0
  %v2185 = vadd.f32 0.0, %v2184
  %v2186 = vpop.f32.mrb[0].mxu0
  %2187 = vmatprep.mubr.f32.mxu0 0.0
  %2188 = vmatmul.mubr.f32.gmra.mrb[0].mxu0 %v70
  %v2189 = vpop.f32.mrb[0].mxu0
  %v2190 = vadd.f32 0.0, %v2189
  %v2191 = vpop.f32.mrb[0].mxu0
  %2192 = vmatprep.mubr.f32.mxu0 0.0
  %2193 = vmatmul.mubr.f32.gmra.mrb[0].mxu0 %v73
  %v2194 = vpop.f32.mrb[0].mxu0
  %v2195 = vadd.f32 0.0, %v2194
  %v2196 = vpop.f32.mrb[0].mxu0
  %2197 = vmatprep.mubr.f32.mxu0 0.0
  %2198 = vmatmul.mubr.f32.gmra.mrb[0].mxu0 %v76
  %v2199 = vpop.f32.mrb[0].mxu0
  %v2200 = vadd.f32 0.0, %v2199
  %v2201 = vpop.f32.mrb[0].mxu0
  %2202 = vmatprep.mubr.f32.mxu0 0.0
  %2203 = vmatmul.mubr.f32.gmra.mrb[0].mxu0 %v79
  %v2204 = vpop.f32.mrb[0].mxu0
  %v2205 = vadd.f32 0.0, %v2204
  %v2206 = vpop.f32.mrb[0].mxu0
  %2207 = vmatprep.mubr.f32.mxu0 0.0
  %2208 = vmatmul.mubr.f32.gmra.mrb[0].mxu0 %v82
  %v2209 = vpop.f32.mrb[0].mxu0
  %v2210 = vadd.f32 0.0, %v2209
  %v2211 = vpop.f32.mrb[0].mxu0
  %2212 = vmatprep.mubr.f32.mxu0 0.0
  %2213 = vmatmul.mubr.f32.gmra.mrb[0].mxu0 %v85
  %v2214 = vpop.f32.mrb[0].mxu0
  %v2215 = vadd.f32 0.0, %v2214
  %v2216 = vpop.f32.mrb[0].mxu0
  %2217 = vmatprep.mubr.f32.mxu0 0.0
  %2218 = vmatmul.mubr.f32.gmra.mrb[0].mxu0 %v88
  %v2219 = vpop.f32.mrb[0].mxu0
  %v2220 = vadd.f32 0.0, %v2219
  %v2221 = vpop.f32.mrb[0].mxu0
  %2222 = vmatprep.mubr.f32.mxu0 0.0
  %2223 = vmatmul.mubr.f32.gmra.mrb[0].mxu0 %v91
  %v2224 = vpop.f32.mrb[0].mxu0
  %v2225 = vadd.f32 0.0, %v2224
  %v2226 = vpop.f32.mrb[0].mxu0
  %2227 = vmatprep.mubr.f32.mxu0 0.0
  %2228 = vmatmul.mubr.f32.gmra.mrb[0].mxu0 %v94
  %v2229 = vpop.f32.mrb[0].mxu0
  %v2230 = vadd.f32 0.0, %v2229
  %v2231 = vpop.f32.mrb[0].mxu0
  %2232 = vmatprep.mubr.f32.mxu0 0.0
  %2233 = vmatmul.mubr.f32.gmra.mrb[0].mxu0 %v97
  %v2234 = vpop.f32.mrb[0].mxu0
  %v2235 = vadd.f32 0.0, %v2234
  %v2236 = vpop.f32.mrb[0].mxu0
  %2237 = vmatprep.mubr.f32.mxu0 0.0
  %2238 = vmatmul.mubr.f32.gmra.mrb[0].mxu0 %v100
  %v2239 = vpop.f32.mrb[0].mxu0
  %v2240 = vadd.f32 0.0, %v2239
  %v2241 = vpop.f32.mrb[0].mxu0
  %2242 = vmatprep.mubr.f32.mxu0 0.0
  %2243 = vmatmul.mubr.f32.gmra.mrb[0].mxu0 %v103
  %v2244 = vpop.f32.mrb[0].mxu0
  %v2245 = vadd.f32 0.0, %v2244
  %v2246 = vpop.f32.mrb[0].mxu0
  %2247 = vmatprep.mubr.f32.mxu0 0.0
  %2248 = vmatmul.mubr.f32.gmra.mrb[0].mxu0 %v106
  %v2249 = vpop.f32.mrb[0].mxu0
  %v2250 = vadd.f32 0.0, %v2249
  %v2251 = vpop.f32.mrb[0].mxu0
  %2252 = vmatprep.mubr.f32.mxu0 0.0
  %2253 = vmatmul.mubr.f32.gmra.mrb[0].mxu0 %v109
  %v2254 = vpop.f32.mrb[0].mxu0
  %v2255 = vadd.f32 0.0, %v2254
  %v2256 = vpop.f32.mrb[0].mxu0
  %2257 = vdwg.mxu0
  %s2258 = scalar_lea.vmem %s2, 32
  %v2259 = vld [vmem:[%s2258] sm:$0xff]
  %v2260 = vld [vmem:[%s2258 + $0x8] sm:$0xff]
  %v2261 = vld [vmem:[%s2258 + $0x10] sm:$0xff]
  %v2262 = vld [vmem:[%s2258 + $0x18] sm:$0xff]
  %2263 = vmatprep.subr.mxu0 0.0
  %2264 = vmatpush1.msra.mxu0 %v2259
  %2265 = vmatprep.subr.mxu0 0.0
  %2266 = vmatpush1.msra.mxu0 %v2260
  %2267 = vmatprep.subr.mxu0 0.0
  %2268 = vmatpush1.msra.mxu0 %v2261
  %2269 = vmatprep.subr.mxu0 0.0
  %2270 = vmatpush1.msra.mxu0 %v2262
  %2271 = vmatprep.subr.mxu0 0.0
  %2272 = vmatpush1.msra.mxu0 0.0
  %2273 = vmatprep.subr.mxu0 0.0
  %2274 = vmatpush1.msra.mxu0 0.0
  %2275 = vmatprep.subr.mxu0 0.0
  %2276 = vmatpush1.msra.mxu0 0.0
  %2277 = vmatprep.subr.mxu0 0.0
  %2278 = vmatpush1.msra.mxu0 0.0
  %2279 = vmatprep.subr.mxu0 0.0
  %2280 = vmatpush1.msra.mxu0 0.0
  %2281 = vmatprep.subr.mxu0 0.0
  %2282 = vmatpush1.msra.mxu0 0.0
  %2283 = vmatprep.subr.mxu0 0.0
  %2284 = vmatpush1.msra.mxu0 0.0
  %2285 = vmatprep.subr.mxu0 0.0
  %2286 = vmatpush1.msra.mxu0 0.0
  %2287 = vmatprep.subr.mxu0 0.0
  %2288 = vmatpush1.msra.mxu0 0.0
  %2289 = vmatprep.subr.mxu0 0.0
  %2290 = vmatpush1.msra.mxu0 0.0
  %2291 = vmatprep.subr.mxu0 0.0
  %2292 = vmatpush1.msra.mxu0 0.0
  %2293 = vmatprep.subr.mxu0 0.0
  %2294 = vmatpush1.msra.mxu0 0.0
  %2295 = vmatprep.subr.mxu0 0.0
  %2296 = vmatpush1.msra.mxu0 0.0
  %2297 = vmatprep.subr.mxu0 0.0
  %2298 = vmatpush1.msra.mxu0 0.0
  %2299 = vmatprep.subr.mxu0 0.0
  %2300 = vmatpush1.msra.mxu0 0.0
  %2301 = vmatprep.subr.mxu0 0.0
  %2302 = vmatpush1.msra.mxu0 0.0
  %2303 = vmatprep.subr.mxu0 0.0
  %2304 = vmatpush1.msra.mxu0 0.0
  %2305 = vmatprep.subr.mxu0 0.0
  %2306 = vmatpush1.msra.mxu0 0.0
  %2307 = vmatprep.subr.mxu0 0.0
  %2308 = vmatpush1.msra.mxu0 0.0
  %2309 = vmatprep.subr.mxu0 0.0
  %2310 = vmatpush1.msra.mxu0 0.0
  %2311 = vmatprep.subr.mxu0 0.0
  %2312 = vmatpush1.msra.mxu0 0.0
  %2313 = vmatprep.subr.mxu0 0.0
  %2314 = vmatpush1.msra.mxu0 0.0
  %2315 = vmatprep.subr.mxu0 0.0
  %2316 = vmatpush1.msra.mxu0 0.0
  %2317 = vmatprep.subr.mxu0 0.0
  %2318 = vmatpush1.msra.mxu0 0.0
  %2319 = vmatprep.subr.mxu0 0.0
  %2320 = vmatpush1.msra.mxu0 0.0
  %2321 = vmatprep.subr.mxu0 0.0
  %2322 = vmatpush1.msra.mxu0 0.0
  %2323 = vmatprep.subr.mxu0 0.0
  %2324 = vmatpush1.msra.mxu0 0.0
  %2325 = vmatprep.subr.mxu0 0.0
  %2326 = vmatpush1.msra.mxu0 0.0
  %2327 = vmatprep.mubr.f32.mxu0 0.0
  %2328 = vmatmul.mubr.f32.gmra.mrb[0].mxu0 %v64
  %v2329 = vpop.f32.mrb[0].mxu0
  %v2330 = vadd.f32 0.0, %v2329
  %v2331 = vpop.f32.mrb[0].mxu0
  %2332 = vmatprep.mubr.f32.mxu0 0.0
  %2333 = vmatmul.mubr.f32.gmra.mrb[0].mxu0 %v67
  %v2334 = vpop.f32.mrb[0].mxu0
  %v2335 = vadd.f32 0.0, %v2334
  %v2336 = vpop.f32.mrb[0].mxu0
  %2337 = vmatprep.mubr.f32.mxu0 0.0
  %2338 = vmatmul.mubr.f32.gmra.mrb[0].mxu0 %v70
  %v2339 = vpop.f32.mrb[0].mxu0
  %v2340 = vadd.f32 0.0, %v2339
  %v2341 = vpop.f32.mrb[0].mxu0
  %2342 = vmatprep.mubr.f32.mxu0 0.0
  %2343 = vmatmul.mubr.f32.gmra.mrb[0].mxu0 %v73
  %v2344 = vpop.f32.mrb[0].mxu0
  %v2345 = vadd.f32 0.0, %v2344
  %v2346 = vpop.f32.mrb[0].mxu0
  %2347 = vmatprep.mubr.f32.mxu0 0.0
  %2348 = vmatmul.mubr.f32.gmra.mrb[0].mxu0 %v76
  %v2349 = vpop.f32.mrb[0].mxu0
  %v2350 = vadd.f32 0.0, %v2349
  %v2351 = vpop.f32.mrb[0].mxu0
  %2352 = vmatprep.mubr.f32.mxu0 0.0
  %2353 = vmatmul.mubr.f32.gmra.mrb[0].mxu0 %v79
  %v2354 = vpop.f32.mrb[0].mxu0
  %v2355 = vadd.f32 0.0, %v2354
  %v2356 = vpop.f32.mrb[0].mxu0
  %2357 = vmatprep.mubr.f32.mxu0 0.0
  %2358 = vmatmul.mubr.f32.gmra.mrb[0].mxu0 %v82
  %v2359 = vpop.f32.mrb[0].mxu0
  %v2360 = vadd.f32 0.0, %v2359
  %v2361 = vpop.f32.mrb[0].mxu0
  %2362 = vmatprep.mubr.f32.mxu0 0.0
  %2363 = vmatmul.mubr.f32.gmra.mrb[0].mxu0 %v85
  %v2364 = vpop.f32.mrb[0].mxu0
  %v2365 = vadd.f32 0.0, %v2364
  %v2366 = vpop.f32.mrb[0].mxu0
  %2367 = vmatprep.mubr.f32.mxu0 0.0
  %2368 = vmatmul.mubr.f32.gmra.mrb[0].mxu0 %v88
  %v2369 = vpop.f32.mrb[0].mxu0
  %v2370 = vadd.f32 0.0, %v2369
  %v2371 = vpop.f32.mrb[0].mxu0
  %2372 = vmatprep.mubr.f32.mxu0 0.0
  %2373 = vmatmul.mubr.f32.gmra.mrb[0].mxu0 %v91
  %v2374 = vpop.f32.mrb[0].mxu0
  %v2375 = vadd.f32 0.0, %v2374
  %v2376 = vpop.f32.mrb[0].mxu0
  %2377 = vmatprep.mubr.f32.mxu0 0.0
  %2378 = vmatmul.mubr.f32.gmra.mrb[0].mxu0 %v94
  %v2379 = vpop.f32.mrb[0].mxu0
  %v2380 = vadd.f32 0.0, %v2379
  %v2381 = vpop.f32.mrb[0].mxu0
  %2382 = vmatprep.mubr.f32.mxu0 0.0
  %2383 = vmatmul.mubr.f32.gmra.mrb[0].mxu0 %v97
  %v2384 = vpop.f32.mrb[0].mxu0
  %v2385 = vadd.f32 0.0, %v2384
  %v2386 = vpop.f32.mrb[0].mxu0
  %2387 = vmatprep.mubr.f32.mxu0 0.0
  %2388 = vmatmul.mubr.f32.gmra.mrb[0].mxu0 %v100
  %v2389 = vpop.f32.mrb[0].mxu0
  %v2390 = vadd.f32 0.0, %v2389
  %v2391 = vpop.f32.mrb[0].mxu0
  %2392 = vmatprep.mubr.f32.mxu0 0.0
  %2393 = vmatmul.mubr.f32.gmra.mrb[0].mxu0 %v103
  %v2394 = vpop.f32.mrb[0].mxu0
  %v2395 = vadd.f32 0.0, %v2394
  %v2396 = vpop.f32.mrb[0].mxu0
  %2397 = vmatprep.mubr.f32.mxu0 0.0
  %2398 = vmatmul.mubr.f32.gmra.mrb[0].mxu0 %v106
  %v2399 = vpop.f32.mrb[0].mxu0
  %v2400 = vadd.f32 0.0, %v2399
  %v2401 = vpop.f32.mrb[0].mxu0
  %2402 = vmatprep.mubr.f32.mxu0 0.0
  %2403 = vmatmul.mubr.f32.gmra.mrb[0].mxu0 %v109
  %v2404 = vpop.f32.mrb[0].mxu0
  %v2405 = vadd.f32 0.0, %v2404
  %v2406 = vpop.f32.mrb[0].mxu0
  %2407 = vdwg.mxu0
  %s2408 = scalar_lea.vmem %s3, 32
  %v2409 = vld [vmem:[%s2408] sm:$0xff]
  %v2410 = vld [vmem:[%s2408 + $0x8] sm:$0xff]
  %v2411 = vld [vmem:[%s2408 + $0x10] sm:$0xff]
  %v2412 = vld [vmem:[%s2408 + $0x18] sm:$0xff]
  %2413 = vmatprep.subr.mxu0 0.0
  %2414 = vmatpush1.msra.mxu0 %v2409
  %2415 = vmatprep.subr.mxu0 0.0
  %2416 = vmatpush1.msra.mxu0 %v2410
  %2417 = vmatprep.subr.mxu0 0.0
  %2418 = vmatpush1.msra.mxu0 %v2411
  %2419 = vmatprep.subr.mxu0 0.0
  %2420 = vmatpush1.msra.mxu0 %v2412
  %2421 = vmatprep.subr.mxu0 0.0
  %2422 = vmatpush1.msra.mxu0 0.0
  %2423 = vmatprep.subr.mxu0 0.0
  %2424 = vmatpush1.msra.mxu0 0.0
  %2425 = vmatprep.subr.mxu0 0.0
  %2426 = vmatpush1.msra.mxu0 0.0
  %2427 = vmatprep.subr.mxu0 0.0
  %2428 = vmatpush1.msra.mxu0 0.0
  %2429 = vmatprep.subr.mxu0 0.0
  %2430 = vmatpush1.msra.mxu0 0.0
  %2431 = vmatprep.subr.mxu0 0.0
  %2432 = vmatpush1.msra.mxu0 0.0
  %2433 = vmatprep.subr.mxu0 0.0
  %2434 = vmatpush1.msra.mxu0 0.0
  %2435 = vmatprep.subr.mxu0 0.0
  %2436 = vmatpush1.msra.mxu0 0.0
  %2437 = vmatprep.subr.mxu0 0.0
  %2438 = vmatpush1.msra.mxu0 0.0
  %2439 = vmatprep.subr.mxu0 0.0
  %2440 = vmatpush1.msra.mxu0 0.0
  %2441 = vmatprep.subr.mxu0 0.0
  %2442 = vmatpush1.msra.mxu0 0.0
  %2443 = vmatprep.subr.mxu0 0.0
  %2444 = vmatpush1.msra.mxu0 0.0
  %2445 = vmatprep.subr.mxu0 0.0
  %2446 = vmatpush1.msra.mxu0 0.0
  %2447 = vmatprep.subr.mxu0 0.0
  %2448 = vmatpush1.msra.mxu0 0.0
  %2449 = vmatprep.subr.mxu0 0.0
  %2450 = vmatpush1.msra.mxu0 0.0
  %2451 = vmatprep.subr.mxu0 0.0
  %2452 = vmatpush1.msra.mxu0 0.0
  %2453 = vmatprep.subr.mxu0 0.0
  %2454 = vmatpush1.msra.mxu0 0.0
  %2455 = vmatprep.subr.mxu0 0.0
  %2456 = vmatpush1.msra.mxu0 0.0
  %2457 = vmatprep.subr.mxu0 0.0
  %2458 = vmatpush1.msra.mxu0 0.0
  %2459 = vmatprep.subr.mxu0 0.0
  %2460 = vmatpush1.msra.mxu0 0.0
  %2461 = vmatprep.subr.mxu0 0.0
  %2462 = vmatpush1.msra.mxu0 0.0
  %2463 = vmatprep.subr.mxu0 0.0
  %2464 = vmatpush1.msra.mxu0 0.0
  %2465 = vmatprep.subr.mxu0 0.0
  %2466 = vmatpush1.msra.mxu0 0.0
  %2467 = vmatprep.subr.mxu0 0.0
  %2468 = vmatpush1.msra.mxu0 0.0
  %2469 = vmatprep.subr.mxu0 0.0
  %2470 = vmatpush1.msra.mxu0 0.0
  %2471 = vmatprep.subr.mxu0 0.0
  %2472 = vmatpush1.msra.mxu0 0.0
  %2473 = vmatprep.subr.mxu0 0.0
  %2474 = vmatpush1.msra.mxu0 0.0
  %2475 = vmatprep.subr.mxu0 0.0
  %2476 = vmatpush1.msra.mxu0 0.0
  %2477 = vmatprep.mubr.f32.mxu0 0.0
  %2478 = vmatmul.mubr.f32.gmra.mrb[0].mxu0 %v64
  %v2479 = vpop.f32.mrb[0].mxu0
  %v2480 = vadd.f32 0.0, %v2479
  %v2481 = vpop.f32.mrb[0].mxu0
  %2482 = vmatprep.mubr.f32.mxu0 0.0
  %2483 = vmatmul.mubr.f32.gmra.mrb[0].mxu0 %v67
  %v2484 = vpop.f32.mrb[0].mxu0
  %v2485 = vadd.f32 0.0, %v2484
  %v2486 = vpop.f32.mrb[0].mxu0
  %2487 = vmatprep.mubr.f32.mxu0 0.0
  %2488 = vmatmul.mubr.f32.gmra.mrb[0].mxu0 %v70
  %v2489 = vpop.f32.mrb[0].mxu0
  %v2490 = vadd.f32 0.0, %v2489
  %v2491 = vpop.f32.mrb[0].mxu0
  %2492 = vmatprep.mubr.f32.mxu0 0.0
  %2493 = vmatmul.mubr.f32.gmra.mrb[0].mxu0 %v73
  %v2494 = vpop.f32.mrb[0].mxu0
  %v2495 = vadd.f32 0.0, %v2494
  %v2496 = vpop.f32.mrb[0].mxu0
  %2497 = vmatprep.mubr.f32.mxu0 0.0
  %2498 = vmatmul.mubr.f32.gmra.mrb[0].mxu0 %v76
  %v2499 = vpop.f32.mrb[0].mxu0
  %v2500 = vadd.f32 0.0, %v2499
  %v2501 = vpop.f32.mrb[0].mxu0
  %2502 = vmatprep.mubr.f32.mxu0 0.0
  %2503 = vmatmul.mubr.f32.gmra.mrb[0].mxu0 %v79
  %v2504 = vpop.f32.mrb[0].mxu0
  %v2505 = vadd.f32 0.0, %v2504
  %v2506 = vpop.f32.mrb[0].mxu0
  %2507 = vmatprep.mubr.f32.mxu0 0.0
  %2508 = vmatmul.mubr.f32.gmra.mrb[0].mxu0 %v82
  %v2509 = vpop.f32.mrb[0].mxu0
  %v2510 = vadd.f32 0.0, %v2509
  %v2511 = vpop.f32.mrb[0].mxu0
  %2512 = vmatprep.mubr.f32.mxu0 0.0
  %2513 = vmatmul.mubr.f32.gmra.mrb[0].mxu0 %v85
  %v2514 = vpop.f32.mrb[0].mxu0
  %v2515 = vadd.f32 0.0, %v2514
  %v2516 = vpop.f32.mrb[0].mxu0
  %2517 = vmatprep.mubr.f32.mxu0 0.0
  %2518 = vmatmul.mubr.f32.gmra.mrb[0].mxu0 %v88
  %v2519 = vpop.f32.mrb[0].mxu0
  %v2520 = vadd.f32 0.0, %v2519
  %v2521 = vpop.f32.mrb[0].mxu0
  %2522 = vmatprep.mubr.f32.mxu0 0.0
  %2523 = vmatmul.mubr.f32.gmra.mrb[0].mxu0 %v91
  %v2524 = vpop.f32.mrb[0].mxu0
  %v2525 = vadd.f32 0.0, %v2524
  %v2526 = vpop.f32.mrb[0].mxu0
  %2527 = vmatprep.mubr.f32.mxu0 0.0
  %2528 = vmatmul.mubr.f32.gmra.mrb[0].mxu0 %v94
  %v2529 = vpop.f32.mrb[0].mxu0
  %v2530 = vadd.f32 0.0, %v2529
  %v2531 = vpop.f32.mrb[0].mxu0
  %2532 = vmatprep.mubr.f32.mxu0 0.0
  %2533 = vmatmul.mubr.f32.gmra.mrb[0].mxu0 %v97
  %v2534 = vpop.f32.mrb[0].mxu0
  %v2535 = vadd.f32 0.0, %v2534
  %v2536 = vpop.f32.mrb[0].mxu0
  %2537 = vmatprep.mubr.f32.mxu0 0.0
  %2538 = vmatmul.mubr.f32.gmra.mrb[0].mxu0 %v100
  %v2539 = vpop.f32.mrb[0].mxu0
  %v2540 = vadd.f32 0.0, %v2539
  %v2541 = vpop.f32.mrb[0].mxu0
  %2542 = vmatprep.mubr.f32.mxu0 0.0
  %2543 = vmatmul.mubr.f32.gmra.mrb[0].mxu0 %v103
  %v2544 = vpop.f32.mrb[0].mxu0
  %v2545 = vadd.f32 0.0, %v2544
  %v2546 = vpop.f32.mrb[0].mxu0
  %2547 = vmatprep.mubr.f32.mxu0 0.0
  %2548 = vmatmul.mubr.f32.gmra.mrb[0].mxu0 %v106
  %v2549 = vpop.f32.mrb[0].mxu0
  %v2550 = vadd.f32 0.0, %v2549
  %v2551 = vpop.f32.mrb[0].mxu0
  %2552 = vmatprep.mubr.f32.mxu0 0.0
  %2553 = vmatmul.mubr.f32.gmra.mrb[0].mxu0 %v109
  %v2554 = vpop.f32.mrb[0].mxu0
  %v2555 = vadd.f32 0.0, %v2554
  %v2556 = vpop.f32.mrb[0].mxu0
  %2557 = vdwg.mxu0
  %v2559 = vsel %vm554, %v2180, 0
  %v2562 = vsel %vm554, %v2185, 0
  %v2565 = vsel %vm554, %v2330, 0
  %v2568 = vsel %vm554, %v2335, 0
  %2570 = vmatprep.subr.mxu0 0.0
  %2571 = vmatpush1.xpose.msra.mxu0 %v2565
  %2572 = vmatprep.subr.mxu0 0.0
  %2573 = vmatpush1.xpose.msra.mxu0 %v2568
  %2574 = vmatprep.subr.mxu0 0.0
  %2575 = vmatpush1.xpose.msra.mxu0 0.0
  %2576 = vmatprep.subr.mxu0 0.0
  %2577 = vmatpush1.xpose.msra.mxu0 0.0
  %2578 = vmatprep.subr.mxu0 0.0
  %2579 = vmatpush1.xpose.msra.mxu0 0.0
  %2580 = vmatprep.subr.mxu0 0.0
  %2581 = vmatpush1.xpose.msra.mxu0 0.0
  %2582 = vmatprep.subr.mxu0 0.0
  %2583 = vmatpush1.xpose.msra.mxu0 0.0
  %2584 = vmatprep.subr.mxu0 0.0
  %2585 = vmatpush1.xpose.msra.mxu0 0.0
  %2586 = vmatprep.subr.mxu0 0.0
  %2587 = vmatpush1.xpose.msra.mxu0 0.0
  %2588 = vmatprep.subr.mxu0 0.0
  %2589 = vmatpush1.xpose.msra.mxu0 0.0
  %2590 = vmatprep.subr.mxu0 0.0
  %2591 = vmatpush1.xpose.msra.mxu0 0.0
  %2592 = vmatprep.subr.mxu0 0.0
  %2593 = vmatpush1.xpose.msra.mxu0 0.0
  %2594 = vmatprep.subr.mxu0 0.0
  %2595 = vmatpush1.xpose.msra.mxu0 0.0
  %2596 = vmatprep.subr.mxu0 0.0
  %2597 = vmatpush1.xpose.msra.mxu0 0.0
  %2598 = vmatprep.subr.mxu0 0.0
  %2599 = vmatpush1.xpose.msra.mxu0 0.0
  %2600 = vmatprep.subr.mxu0 0.0
  %2601 = vmatpush1.xpose.msra.mxu0 0.0
  %2602 = vmatprep.subr.mxu0 0.0
  %2603 = vmatpush1.xpose.msra.mxu0 0.0
  %2604 = vmatprep.subr.mxu0 0.0
  %2605 = vmatpush1.xpose.msra.mxu0 0.0
  %2606 = vmatprep.subr.mxu0 0.0
  %2607 = vmatpush1.xpose.msra.mxu0 0.0
  %2608 = vmatprep.subr.mxu0 0.0
  %2609 = vmatpush1.xpose.msra.mxu0 0.0
  %2610 = vmatprep.subr.mxu0 0.0
  %2611 = vmatpush1.xpose.msra.mxu0 0.0
  %2612 = vmatprep.subr.mxu0 0.0
  %2613 = vmatpush1.xpose.msra.mxu0 0.0
  %2614 = vmatprep.subr.mxu0 0.0
  %2615 = vmatpush1.xpose.msra.mxu0 0.0
  %2616 = vmatprep.subr.mxu0 0.0
  %2617 = vmatpush1.xpose.msra.mxu0 0.0
  %2618 = vmatprep.subr.mxu0 0.0
  %2619 = vmatpush1.xpose.msra.mxu0 0.0
  %2620 = vmatprep.subr.mxu0 0.0
  %2621 = vmatpush1.xpose.msra.mxu0 0.0
  %2622 = vmatprep.subr.mxu0 0.0
  %2623 = vmatpush1.xpose.msra.mxu0 0.0
  %2624 = vmatprep.subr.mxu0 0.0
  %2625 = vmatpush1.xpose.msra.mxu0 0.0
  %2626 = vmatprep.subr.mxu0 0.0
  %2627 = vmatpush1.xpose.msra.mxu0 0.0
  %2628 = vmatprep.subr.mxu0 0.0
  %2629 = vmatpush1.xpose.msra.mxu0 0.0
  %2630 = vmatprep.subr.mxu0 0.0
  %2631 = vmatpush1.xpose.msra.mxu0 0.0
  %2632 = vmatprep.subr.mxu0 0.0
  %2633 = vmatpush1.xpose.msra.mxu0 0.0
  %2634 = vmatprep.mubr.f32.mxu0 0.0
  %2635 = vmatmul.mubr.f32.gmra.mrb[0].mxu0 %v2559
  %v2636 = vpop.f32.mrb[0].mxu0
  %v2637 = vadd.f32 0.0, %v2636
  %v2638 = vpop.f32.mrb[0].mxu0
  %2639 = vmatprep.mubr.f32.mxu0 0.0
  %2640 = vmatmul.mubr.f32.gmra.mrb[0].mxu0 %v2562
  %v2641 = vpop.f32.mrb[0].mxu0
  %v2642 = vadd.f32 0.0, %v2641
  %v2643 = vpop.f32.mrb[0].mxu0
  %2644 = vdwg.mxu0
  %v2646 = vsel %vm554, %v2190, 0
  %v2649 = vsel %vm554, %v2195, 0
  %v2652 = vsel %vm554, %v2340, 0
  %v2655 = vsel %vm554, %v2345, 0
  %2657 = vmatprep.subr.mxu0 0.0
  %2658 = vmatpush1.xpose.msra.mxu0 %v2652
  %2659 = vmatprep.subr.mxu0 0.0
  %2660 = vmatpush1.xpose.msra.mxu0 %v2655
  %2661 = vmatprep.subr.mxu0 0.0
  %2662 = vmatpush1.xpose.msra.mxu0 0.0
  %2663 = vmatprep.subr.mxu0 0.0
  %2664 = vmatpush1.xpose.msra.mxu0 0.0
  %2665 = vmatprep.subr.mxu0 0.0
  %2666 = vmatpush1.xpose.msra.mxu0 0.0
  %2667 = vmatprep.subr.mxu0 0.0
  %2668 = vmatpush1.xpose.msra.mxu0 0.0
  %2669 = vmatprep.subr.mxu0 0.0
  %2670 = vmatpush1.xpose.msra.mxu0 0.0
  %2671 = vmatprep.subr.mxu0 0.0
  %2672 = vmatpush1.xpose.msra.mxu0 0.0
  %2673 = vmatprep.subr.mxu0 0.0
  %2674 = vmatpush1.xpose.msra.mxu0 0.0
  %2675 = vmatprep.subr.mxu0 0.0
  %2676 = vmatpush1.xpose.msra.mxu0 0.0
  %2677 = vmatprep.subr.mxu0 0.0
  %2678 = vmatpush1.xpose.msra.mxu0 0.0
  %2679 = vmatprep.subr.mxu0 0.0
  %2680 = vmatpush1.xpose.msra.mxu0 0.0
  %2681 = vmatprep.subr.mxu0 0.0
  %2682 = vmatpush1.xpose.msra.mxu0 0.0
  %2683 = vmatprep.subr.mxu0 0.0
  %2684 = vmatpush1.xpose.msra.mxu0 0.0
  %2685 = vmatprep.subr.mxu0 0.0
  %2686 = vmatpush1.xpose.msra.mxu0 0.0
  %2687 = vmatprep.subr.mxu0 0.0
  %2688 = vmatpush1.xpose.msra.mxu0 0.0
  %2689 = vmatprep.subr.mxu0 0.0
  %2690 = vmatpush1.xpose.msra.mxu0 0.0
  %2691 = vmatprep.subr.mxu0 0.0
  %2692 = vmatpush1.xpose.msra.mxu0 0.0
  %2693 = vmatprep.subr.mxu0 0.0
  %2694 = vmatpush1.xpose.msra.mxu0 0.0
  %2695 = vmatprep.subr.mxu0 0.0
  %2696 = vmatpush1.xpose.msra.mxu0 0.0
  %2697 = vmatprep.subr.mxu0 0.0
  %2698 = vmatpush1.xpose.msra.mxu0 0.0
  %2699 = vmatprep.subr.mxu0 0.0
  %2700 = vmatpush1.xpose.msra.mxu0 0.0
  %2701 = vmatprep.subr.mxu0 0.0
  %2702 = vmatpush1.xpose.msra.mxu0 0.0
  %2703 = vmatprep.subr.mxu0 0.0
  %2704 = vmatpush1.xpose.msra.mxu0 0.0
  %2705 = vmatprep.subr.mxu0 0.0
  %2706 = vmatpush1.xpose.msra.mxu0 0.0
  %2707 = vmatprep.subr.mxu0 0.0
  %2708 = vmatpush1.xpose.msra.mxu0 0.0
  %2709 = vmatprep.subr.mxu0 0.0
  %2710 = vmatpush1.xpose.msra.mxu0 0.0
  %2711 = vmatprep.subr.mxu0 0.0
  %2712 = vmatpush1.xpose.msra.mxu0 0.0
  %2713 = vmatprep.subr.mxu0 0.0
  %2714 = vmatpush1.xpose.msra.mxu0 0.0
  %2715 = vmatprep.subr.mxu0 0.0
  %2716 = vmatpush1.xpose.msra.mxu0 0.0
  %2717 = vmatprep.subr.mxu0 0.0
  %2718 = vmatpush1.xpose.msra.mxu0 0.0
  %2719 = vmatprep.subr.mxu0 0.0
  %2720 = vmatpush1.xpose.msra.mxu0 0.0
  %2721 = vmatprep.mubr.f32.mxu0 0.0
  %2722 = vmatmul.mubr.f32.gmra.mrb[0].mxu0 %v2646
  %v2723 = vpop.f32.mrb[0].mxu0
  %v2724 = vadd.f32 0.0, %v2723
  %v2725 = vpop.f32.mrb[0].mxu0
  %2726 = vmatprep.mubr.f32.mxu0 0.0
  %2727 = vmatmul.mubr.f32.gmra.mrb[0].mxu0 %v2649
  %v2728 = vpop.f32.mrb[0].mxu0
  %v2729 = vadd.f32 0.0, %v2728
  %v2730 = vpop.f32.mrb[0].mxu0
  %2731 = vdwg.mxu0
  %v2733 = vsel %vm554, %v2200, 0
  %v2736 = vsel %vm554, %v2205, 0
  %v2739 = vsel %vm554, %v2350, 0
  %v2742 = vsel %vm554, %v2355, 0
  %2744 = vmatprep.subr.mxu0 0.0
  %2745 = vmatpush1.xpose.msra.mxu0 %v2739
  %2746 = vmatprep.subr.mxu0 0.0
  %2747 = vmatpush1.xpose.msra.mxu0 %v2742
  %2748 = vmatprep.subr.mxu0 0.0
  %2749 = vmatpush1.xpose.msra.mxu0 0.0
  %2750 = vmatprep.subr.mxu0 0.0
  %2751 = vmatpush1.xpose.msra.mxu0 0.0
  %2752 = vmatprep.subr.mxu0 0.0
  %2753 = vmatpush1.xpose.msra.mxu0 0.0
  %2754 = vmatprep.subr.mxu0 0.0
  %2755 = vmatpush1.xpose.msra.mxu0 0.0
  %2756 = vmatprep.subr.mxu0 0.0
  %2757 = vmatpush1.xpose.msra.mxu0 0.0
  %2758 = vmatprep.subr.mxu0 0.0
  %2759 = vmatpush1.xpose.msra.mxu0 0.0
  %2760 = vmatprep.subr.mxu0 0.0
  %2761 = vmatpush1.xpose.msra.mxu0 0.0
  %2762 = vmatprep.subr.mxu0 0.0
  %2763 = vmatpush1.xpose.msra.mxu0 0.0
  %2764 = vmatprep.subr.mxu0 0.0
  %2765 = vmatpush1.xpose.msra.mxu0 0.0
  %2766 = vmatprep.subr.mxu0 0.0
  %2767 = vmatpush1.xpose.msra.mxu0 0.0
  %2768 = vmatprep.subr.mxu0 0.0
  %2769 = vmatpush1.xpose.msra.mxu0 0.0
  %2770 = vmatprep.subr.mxu0 0.0
  %2771 = vmatpush1.xpose.msra.mxu0 0.0
  %2772 = vmatprep.subr.mxu0 0.0
  %2773 = vmatpush1.xpose.msra.mxu0 0.0
  %2774 = vmatprep.subr.mxu0 0.0
  %2775 = vmatpush1.xpose.msra.mxu0 0.0
  %2776 = vmatprep.subr.mxu0 0.0
  %2777 = vmatpush1.xpose.msra.mxu0 0.0
  %2778 = vmatprep.subr.mxu0 0.0
  %2779 = vmatpush1.xpose.msra.mxu0 0.0
  %2780 = vmatprep.subr.mxu0 0.0
  %2781 = vmatpush1.xpose.msra.mxu0 0.0
  %2782 = vmatprep.subr.mxu0 0.0
  %2783 = vmatpush1.xpose.msra.mxu0 0.0
  %2784 = vmatprep.subr.mxu0 0.0
  %2785 = vmatpush1.xpose.msra.mxu0 0.0
  %2786 = vmatprep.subr.mxu0 0.0
  %2787 = vmatpush1.xpose.msra.mxu0 0.0
  %2788 = vmatprep.subr.mxu0 0.0
  %2789 = vmatpush1.xpose.msra.mxu0 0.0
  %2790 = vmatprep.subr.mxu0 0.0
  %2791 = vmatpush1.xpose.msra.mxu0 0.0
  %2792 = vmatprep.subr.mxu0 0.0
  %2793 = vmatpush1.xpose.msra.mxu0 0.0
  %2794 = vmatprep.subr.mxu0 0.0
  %2795 = vmatpush1.xpose.msra.mxu0 0.0
  %2796 = vmatprep.subr.mxu0 0.0
  %2797 = vmatpush1.xpose.msra.mxu0 0.0
  %2798 = vmatprep.subr.mxu0 0.0
  %2799 = vmatpush1.xpose.msra.mxu0 0.0
  %2800 = vmatprep.subr.mxu0 0.0
  %2801 = vmatpush1.xpose.msra.mxu0 0.0
  %2802 = vmatprep.subr.mxu0 0.0
  %2803 = vmatpush1.xpose.msra.mxu0 0.0
  %2804 = vmatprep.subr.mxu0 0.0
  %2805 = vmatpush1.xpose.msra.mxu0 0.0
  %2806 = vmatprep.subr.mxu0 0.0
  %2807 = vmatpush1.xpose.msra.mxu0 0.0
  %2808 = vmatprep.mubr.f32.mxu0 0.0
  %2809 = vmatmul.mubr.f32.gmra.mrb[0].mxu0 %v2733
  %v2810 = vpop.f32.mrb[0].mxu0
  %v2811 = vadd.f32 0.0, %v2810
  %v2812 = vpop.f32.mrb[0].mxu0
  %2813 = vmatprep.mubr.f32.mxu0 0.0
  %2814 = vmatmul.mubr.f32.gmra.mrb[0].mxu0 %v2736
  %v2815 = vpop.f32.mrb[0].mxu0
  %v2816 = vadd.f32 0.0, %v2815
  %v2817 = vpop.f32.mrb[0].mxu0
  %2818 = vdwg.mxu0
  %v2820 = vsel %vm554, %v2210, 0
  %v2823 = vsel %vm554, %v2215, 0
  %v2826 = vsel %vm554, %v2360, 0
  %v2829 = vsel %vm554, %v2365, 0
  %2831 = vmatprep.subr.mxu0 0.0
  %2832 = vmatpush1.xpose.msra.mxu0 %v2826
  %2833 = vmatprep.subr.mxu0 0.0
  %2834 = vmatpush1.xpose.msra.mxu0 %v2829
  %2835 = vmatprep.subr.mxu0 0.0
  %2836 = vmatpush1.xpose.msra.mxu0 0.0
  %2837 = vmatprep.subr.mxu0 0.0
  %2838 = vmatpush1.xpose.msra.mxu0 0.0
  %2839 = vmatprep.subr.mxu0 0.0
  %2840 = vmatpush1.xpose.msra.mxu0 0.0
  %2841 = vmatprep.subr.mxu0 0.0
  %2842 = vmatpush1.xpose.msra.mxu0 0.0
  %2843 = vmatprep.subr.mxu0 0.0
  %2844 = vmatpush1.xpose.msra.mxu0 0.0
  %2845 = vmatprep.subr.mxu0 0.0
  %2846 = vmatpush1.xpose.msra.mxu0 0.0
  %2847 = vmatprep.subr.mxu0 0.0
  %2848 = vmatpush1.xpose.msra.mxu0 0.0
  %2849 = vmatprep.subr.mxu0 0.0
  %2850 = vmatpush1.xpose.msra.mxu0 0.0
  %2851 = vmatprep.subr.mxu0 0.0
  %2852 = vmatpush1.xpose.msra.mxu0 0.0
  %2853 = vmatprep.subr.mxu0 0.0
  %2854 = vmatpush1.xpose.msra.mxu0 0.0
  %2855 = vmatprep.subr.mxu0 0.0
  %2856 = vmatpush1.xpose.msra.mxu0 0.0
  %2857 = vmatprep.subr.mxu0 0.0
  %2858 = vmatpush1.xpose.msra.mxu0 0.0
  %2859 = vmatprep.subr.mxu0 0.0
  %2860 = vmatpush1.xpose.msra.mxu0 0.0
  %2861 = vmatprep.subr.mxu0 0.0
  %2862 = vmatpush1.xpose.msra.mxu0 0.0
  %2863 = vmatprep.subr.mxu0 0.0
  %2864 = vmatpush1.xpose.msra.mxu0 0.0
  %2865 = vmatprep.subr.mxu0 0.0
  %2866 = vmatpush1.xpose.msra.mxu0 0.0
  %2867 = vmatprep.subr.mxu0 0.0
  %2868 = vmatpush1.xpose.msra.mxu0 0.0
  %2869 = vmatprep.subr.mxu0 0.0
  %2870 = vmatpush1.xpose.msra.mxu0 0.0
  %2871 = vmatprep.subr.mxu0 0.0
  %2872 = vmatpush1.xpose.msra.mxu0 0.0
  %2873 = vmatprep.subr.mxu0 0.0
  %2874 = vmatpush1.xpose.msra.mxu0 0.0
  %2875 = vmatprep.subr.mxu0 0.0
  %2876 = vmatpush1.xpose.msra.mxu0 0.0
  %2877 = vmatprep.subr.mxu0 0.0
  %2878 = vmatpush1.xpose.msra.mxu0 0.0
  %2879 = vmatprep.subr.mxu0 0.0
  %2880 = vmatpush1.xpose.msra.mxu0 0.0
  %2881 = vmatprep.subr.mxu0 0.0
  %2882 = vmatpush1.xpose.msra.mxu0 0.0
  %2883 = vmatprep.subr.mxu0 0.0
  %2884 = vmatpush1.xpose.msra.mxu0 0.0
  %2885 = vmatprep.subr.mxu0 0.0
  %2886 = vmatpush1.xpose.msra.mxu0 0.0
  %2887 = vmatprep.subr.mxu0 0.0
  %2888 = vmatpush1.xpose.msra.mxu0 0.0
  %2889 = vmatprep.subr.mxu0 0.0
  %2890 = vmatpush1.xpose.msra.mxu0 0.0
  %2891 = vmatprep.subr.mxu0 0.0
  %2892 = vmatpush1.xpose.msra.mxu0 0.0
  %2893 = vmatprep.subr.mxu0 0.0
  %2894 = vmatpush1.xpose.msra.mxu0 0.0
  %2895 = vmatprep.mubr.f32.mxu0 0.0
  %2896 = vmatmul.mubr.f32.gmra.mrb[0].mxu0 %v2820
  %v2897 = vpop.f32.mrb[0].mxu0
  %v2898 = vadd.f32 0.0, %v2897
  %v2899 = vpop.f32.mrb[0].mxu0
  %2900 = vmatprep.mubr.f32.mxu0 0.0
  %2901 = vmatmul.mubr.f32.gmra.mrb[0].mxu0 %v2823
  %v2902 = vpop.f32.mrb[0].mxu0
  %v2903 = vadd.f32 0.0, %v2902
  %v2904 = vpop.f32.mrb[0].mxu0
  %2905 = vdwg.mxu0
  %v2907 = vsel %vm554, %v2220, 0
  %v2910 = vsel %vm554, %v2225, 0
  %v2913 = vsel %vm554, %v2370, 0
  %v2916 = vsel %vm554, %v2375, 0
  %2918 = vmatprep.subr.mxu0 0.0
  %2919 = vmatpush1.xpose.msra.mxu0 %v2913
  %2920 = vmatprep.subr.mxu0 0.0
  %2921 = vmatpush1.xpose.msra.mxu0 %v2916
  %2922 = vmatprep.subr.mxu0 0.0
  %2923 = vmatpush1.xpose.msra.mxu0 0.0
  %2924 = vmatprep.subr.mxu0 0.0
  %2925 = vmatpush1.xpose.msra.mxu0 0.0
  %2926 = vmatprep.subr.mxu0 0.0
  %2927 = vmatpush1.xpose.msra.mxu0 0.0
  %2928 = vmatprep.subr.mxu0 0.0
  %2929 = vmatpush1.xpose.msra.mxu0 0.0
  %2930 = vmatprep.subr.mxu0 0.0
  %2931 = vmatpush1.xpose.msra.mxu0 0.0
  %2932 = vmatprep.subr.mxu0 0.0
  %2933 = vmatpush1.xpose.msra.mxu0 0.0
  %2934 = vmatprep.subr.mxu0 0.0
  %2935 = vmatpush1.xpose.msra.mxu0 0.0
  %2936 = vmatprep.subr.mxu0 0.0
  %2937 = vmatpush1.xpose.msra.mxu0 0.0
  %2938 = vmatprep.subr.mxu0 0.0
  %2939 = vmatpush1.xpose.msra.mxu0 0.0
  %2940 = vmatprep.subr.mxu0 0.0
  %2941 = vmatpush1.xpose.msra.mxu0 0.0
  %2942 = vmatprep.subr.mxu0 0.0
  %2943 = vmatpush1.xpose.msra.mxu0 0.0
  %2944 = vmatprep.subr.mxu0 0.0
  %2945 = vmatpush1.xpose.msra.mxu0 0.0
  %2946 = vmatprep.subr.mxu0 0.0
  %2947 = vmatpush1.xpose.msra.mxu0 0.0
  %2948 = vmatprep.subr.mxu0 0.0
  %2949 = vmatpush1.xpose.msra.mxu0 0.0
  %2950 = vmatprep.subr.mxu0 0.0
  %2951 = vmatpush1.xpose.msra.mxu0 0.0
  %2952 = vmatprep.subr.mxu0 0.0
  %2953 = vmatpush1.xpose.msra.mxu0 0.0
  %2954 = vmatprep.subr.mxu0 0.0
  %2955 = vmatpush1.xpose.msra.mxu0 0.0
  %2956 = vmatprep.subr.mxu0 0.0
  %2957 = vmatpush1.xpose.msra.mxu0 0.0
  %2958 = vmatprep.subr.mxu0 0.0
  %2959 = vmatpush1.xpose.msra.mxu0 0.0
  %2960 = vmatprep.subr.mxu0 0.0
  %2961 = vmatpush1.xpose.msra.mxu0 0.0
  %2962 = vmatprep.subr.mxu0 0.0
  %2963 = vmatpush1.xpose.msra.mxu0 0.0
  %2964 = vmatprep.subr.mxu0 0.0
  %2965 = vmatpush1.xpose.msra.mxu0 0.0
  %2966 = vmatprep.subr.mxu0 0.0
  %2967 = vmatpush1.xpose.msra.mxu0 0.0
  %2968 = vmatprep.subr.mxu0 0.0
  %2969 = vmatpush1.xpose.msra.mxu0 0.0
  %2970 = vmatprep.subr.mxu0 0.0
  %2971 = vmatpush1.xpose.msra.mxu0 0.0
  %2972 = vmatprep.subr.mxu0 0.0
  %2973 = vmatpush1.xpose.msra.mxu0 0.0
  %2974 = vmatprep.subr.mxu0 0.0
  %2975 = vmatpush1.xpose.msra.mxu0 0.0
  %2976 = vmatprep.subr.mxu0 0.0
  %2977 = vmatpush1.xpose.msra.mxu0 0.0
  %2978 = vmatprep.subr.mxu0 0.0
  %2979 = vmatpush1.xpose.msra.mxu0 0.0
  %2980 = vmatprep.subr.mxu0 0.0
  %2981 = vmatpush1.xpose.msra.mxu0 0.0
  %2982 = vmatprep.mubr.f32.mxu0 0.0
  %2983 = vmatmul.mubr.f32.gmra.mrb[0].mxu0 %v2907
  %v2984 = vpop.f32.mrb[0].mxu0
  %v2985 = vadd.f32 0.0, %v2984
  %v2986 = vpop.f32.mrb[0].mxu0
  %2987 = vmatprep.mubr.f32.mxu0 0.0
  %2988 = vmatmul.mubr.f32.gmra.mrb[0].mxu0 %v2910
  %v2989 = vpop.f32.mrb[0].mxu0
  %v2990 = vadd.f32 0.0, %v2989
  %v2991 = vpop.f32.mrb[0].mxu0
  %2992 = vdwg.mxu0
  %v2994 = vsel %vm554, %v2230, 0
  %v2997 = vsel %vm554, %v2235, 0
  %v3000 = vsel %vm554, %v2380, 0
  %v3003 = vsel %vm554, %v2385, 0
  %3005 = vmatprep.subr.mxu0 0.0
  %3006 = vmatpush1.xpose.msra.mxu0 %v3000
  %3007 = vmatprep.subr.mxu0 0.0
  %3008 = vmatpush1.xpose.msra.mxu0 %v3003
  %3009 = vmatprep.subr.mxu0 0.0
  %3010 = vmatpush1.xpose.msra.mxu0 0.0
  %3011 = vmatprep.subr.mxu0 0.0
  %3012 = vmatpush1.xpose.msra.mxu0 0.0
  %3013 = vmatprep.subr.mxu0 0.0
  %3014 = vmatpush1.xpose.msra.mxu0 0.0
  %3015 = vmatprep.subr.mxu0 0.0
  %3016 = vmatpush1.xpose.msra.mxu0 0.0
  %3017 = vmatprep.subr.mxu0 0.0
  %3018 = vmatpush1.xpose.msra.mxu0 0.0
  %3019 = vmatprep.subr.mxu0 0.0
  %3020 = vmatpush1.xpose.msra.mxu0 0.0
  %3021 = vmatprep.subr.mxu0 0.0
  %3022 = vmatpush1.xpose.msra.mxu0 0.0
  %3023 = vmatprep.subr.mxu0 0.0
  %3024 = vmatpush1.xpose.msra.mxu0 0.0
  %3025 = vmatprep.subr.mxu0 0.0
  %3026 = vmatpush1.xpose.msra.mxu0 0.0
  %3027 = vmatprep.subr.mxu0 0.0
  %3028 = vmatpush1.xpose.msra.mxu0 0.0
  %3029 = vmatprep.subr.mxu0 0.0
  %3030 = vmatpush1.xpose.msra.mxu0 0.0
  %3031 = vmatprep.subr.mxu0 0.0
  %3032 = vmatpush1.xpose.msra.mxu0 0.0
  %3033 = vmatprep.subr.mxu0 0.0
  %3034 = vmatpush1.xpose.msra.mxu0 0.0
  %3035 = vmatprep.subr.mxu0 0.0
  %3036 = vmatpush1.xpose.msra.mxu0 0.0
  %3037 = vmatprep.subr.mxu0 0.0
  %3038 = vmatpush1.xpose.msra.mxu0 0.0
  %3039 = vmatprep.subr.mxu0 0.0
  %3040 = vmatpush1.xpose.msra.mxu0 0.0
  %3041 = vmatprep.subr.mxu0 0.0
  %3042 = vmatpush1.xpose.msra.mxu0 0.0
  %3043 = vmatprep.subr.mxu0 0.0
  %3044 = vmatpush1.xpose.msra.mxu0 0.0
  %3045 = vmatprep.subr.mxu0 0.0
  %3046 = vmatpush1.xpose.msra.mxu0 0.0
  %3047 = vmatprep.subr.mxu0 0.0
  %3048 = vmatpush1.xpose.msra.mxu0 0.0
  %3049 = vmatprep.subr.mxu0 0.0
  %3050 = vmatpush1.xpose.msra.mxu0 0.0
  %3051 = vmatprep.subr.mxu0 0.0
  %3052 = vmatpush1.xpose.msra.mxu0 0.0
  %3053 = vmatprep.subr.mxu0 0.0
  %3054 = vmatpush1.xpose.msra.mxu0 0.0
  %3055 = vmatprep.subr.mxu0 0.0
  %3056 = vmatpush1.xpose.msra.mxu0 0.0
  %3057 = vmatprep.subr.mxu0 0.0
  %3058 = vmatpush1.xpose.msra.mxu0 0.0
  %3059 = vmatprep.subr.mxu0 0.0
  %3060 = vmatpush1.xpose.msra.mxu0 0.0
  %3061 = vmatprep.subr.mxu0 0.0
  %3062 = vmatpush1.xpose.msra.mxu0 0.0
  %3063 = vmatprep.subr.mxu0 0.0
  %3064 = vmatpush1.xpose.msra.mxu0 0.0
  %3065 = vmatprep.subr.mxu0 0.0
  %3066 = vmatpush1.xpose.msra.mxu0 0.0
  %3067 = vmatprep.subr.mxu0 0.0
  %3068 = vmatpush1.xpose.msra.mxu0 0.0
  %3069 = vmatprep.mubr.f32.mxu0 0.0
  %3070 = vmatmul.mubr.f32.gmra.mrb[0].mxu0 %v2994
  %v3071 = vpop.f32.mrb[0].mxu0
  %v3072 = vadd.f32 0.0, %v3071
  %v3073 = vpop.f32.mrb[0].mxu0
  %3074 = vmatprep.mubr.f32.mxu0 0.0
  %3075 = vmatmul.mubr.f32.gmra.mrb[0].mxu0 %v2997
  %v3076 = vpop.f32.mrb[0].mxu0
  %v3077 = vadd.f32 0.0, %v3076
  %v3078 = vpop.f32.mrb[0].mxu0
  %3079 = vdwg.mxu0
  %v3081 = vsel %vm554, %v2240, 0
  %v3084 = vsel %vm554, %v2245, 0
  %v3087 = vsel %vm554, %v2390, 0
  %v3090 = vsel %vm554, %v2395, 0
  %3092 = vmatprep.subr.mxu0 0.0
  %3093 = vmatpush1.xpose.msra.mxu0 %v3087
  %3094 = vmatprep.subr.mxu0 0.0
  %3095 = vmatpush1.xpose.msra.mxu0 %v3090
  %3096 = vmatprep.subr.mxu0 0.0
  %3097 = vmatpush1.xpose.msra.mxu0 0.0
  %3098 = vmatprep.subr.mxu0 0.0
  %3099 = vmatpush1.xpose.msra.mxu0 0.0
  %3100 = vmatprep.subr.mxu0 0.0
  %3101 = vmatpush1.xpose.msra.mxu0 0.0
  %3102 = vmatprep.subr.mxu0 0.0
  %3103 = vmatpush1.xpose.msra.mxu0 0.0
  %3104 = vmatprep.subr.mxu0 0.0
  %3105 = vmatpush1.xpose.msra.mxu0 0.0
  %3106 = vmatprep.subr.mxu0 0.0
  %3107 = vmatpush1.xpose.msra.mxu0 0.0
  %3108 = vmatprep.subr.mxu0 0.0
  %3109 = vmatpush1.xpose.msra.mxu0 0.0
  %3110 = vmatprep.subr.mxu0 0.0
  %3111 = vmatpush1.xpose.msra.mxu0 0.0
  %3112 = vmatprep.subr.mxu0 0.0
  %3113 = vmatpush1.xpose.msra.mxu0 0.0
  %3114 = vmatprep.subr.mxu0 0.0
  %3115 = vmatpush1.xpose.msra.mxu0 0.0
  %3116 = vmatprep.subr.mxu0 0.0
  %3117 = vmatpush1.xpose.msra.mxu0 0.0
  %3118 = vmatprep.subr.mxu0 0.0
  %3119 = vmatpush1.xpose.msra.mxu0 0.0
  %3120 = vmatprep.subr.mxu0 0.0
  %3121 = vmatpush1.xpose.msra.mxu0 0.0
  %3122 = vmatprep.subr.mxu0 0.0
  %3123 = vmatpush1.xpose.msra.mxu0 0.0
  %3124 = vmatprep.subr.mxu0 0.0
  %3125 = vmatpush1.xpose.msra.mxu0 0.0
  %3126 = vmatprep.subr.mxu0 0.0
  %3127 = vmatpush1.xpose.msra.mxu0 0.0
  %3128 = vmatprep.subr.mxu0 0.0
  %3129 = vmatpush1.xpose.msra.mxu0 0.0
  %3130 = vmatprep.subr.mxu0 0.0
  %3131 = vmatpush1.xpose.msra.mxu0 0.0
  %3132 = vmatprep.subr.mxu0 0.0
  %3133 = vmatpush1.xpose.msra.mxu0 0.0
  %3134 = vmatprep.subr.mxu0 0.0
  %3135 = vmatpush1.xpose.msra.mxu0 0.0
  %3136 = vmatprep.subr.mxu0 0.0
  %3137 = vmatpush1.xpose.msra.mxu0 0.0
  %3138 = vmatprep.subr.mxu0 0.0
  %3139 = vmatpush1.xpose.msra.mxu0 0.0
  %3140 = vmatprep.subr.mxu0 0.0
  %3141 = vmatpush1.xpose.msra.mxu0 0.0
  %3142 = vmatprep.subr.mxu0 0.0
  %3143 = vmatpush1.xpose.msra.mxu0 0.0
  %3144 = vmatprep.subr.mxu0 0.0
  %3145 = vmatpush1.xpose.msra.mxu0 0.0
  %3146 = vmatprep.subr.mxu0 0.0
  %3147 = vmatpush1.xpose.msra.mxu0 0.0
  %3148 = vmatprep.subr.mxu0 0.0
  %3149 = vmatpush1.xpose.msra.mxu0 0.0
  %3150 = vmatprep.subr.mxu0 0.0
  %3151 = vmatpush1.xpose.msra.mxu0 0.0
  %3152 = vmatprep.subr.mxu0 0.0
  %3153 = vmatpush1.xpose.msra.mxu0 0.0
  %3154 = vmatprep.subr.mxu0 0.0
  %3155 = vmatpush1.xpose.msra.mxu0 0.0
  %3156 = vmatprep.mubr.f32.mxu0 0.0
  %3157 = vmatmul.mubr.f32.gmra.mrb[0].mxu0 %v3081
  %v3158 = vpop.f32.mrb[0].mxu0
  %v3159 = vadd.f32 0.0, %v3158
  %v3160 = vpop.f32.mrb[0].mxu0
  %3161 = vmatprep.mubr.f32.mxu0 0.0
  %3162 = vmatmul.mubr.f32.gmra.mrb[0].mxu0 %v3084
  %v3163 = vpop.f32.mrb[0].mxu0
  %v3164 = vadd.f32 0.0, %v3163
  %v3165 = vpop.f32.mrb[0].mxu0
  %3166 = vdwg.mxu0
  %v3168 = vsel %vm554, %v2250, 0
  %v3171 = vsel %vm554, %v2255, 0
  %v3174 = vsel %vm554, %v2400, 0
  %v3177 = vsel %vm554, %v2405, 0
  %3179 = vmatprep.subr.mxu0 0.0
  %3180 = vmatpush1.xpose.msra.mxu0 %v3174
  %3181 = vmatprep.subr.mxu0 0.0
  %3182 = vmatpush1.xpose.msra.mxu0 %v3177
  %3183 = vmatprep.subr.mxu0 0.0
  %3184 = vmatpush1.xpose.msra.mxu0 0.0
  %3185 = vmatprep.subr.mxu0 0.0
  %3186 = vmatpush1.xpose.msra.mxu0 0.0
  %3187 = vmatprep.subr.mxu0 0.0
  %3188 = vmatpush1.xpose.msra.mxu0 0.0
  %3189 = vmatprep.subr.mxu0 0.0
  %3190 = vmatpush1.xpose.msra.mxu0 0.0
  %3191 = vmatprep.subr.mxu0 0.0
  %3192 = vmatpush1.xpose.msra.mxu0 0.0
  %3193 = vmatprep.subr.mxu0 0.0
  %3194 = vmatpush1.xpose.msra.mxu0 0.0
  %3195 = vmatprep.subr.mxu0 0.0
  %3196 = vmatpush1.xpose.msra.mxu0 0.0
  %3197 = vmatprep.subr.mxu0 0.0
  %3198 = vmatpush1.xpose.msra.mxu0 0.0
  %3199 = vmatprep.subr.mxu0 0.0
  %3200 = vmatpush1.xpose.msra.mxu0 0.0
  %3201 = vmatprep.subr.mxu0 0.0
  %3202 = vmatpush1.xpose.msra.mxu0 0.0
  %3203 = vmatprep.subr.mxu0 0.0
  %3204 = vmatpush1.xpose.msra.mxu0 0.0
  %3205 = vmatprep.subr.mxu0 0.0
  %3206 = vmatpush1.xpose.msra.mxu0 0.0
  %3207 = vmatprep.subr.mxu0 0.0
  %3208 = vmatpush1.xpose.msra.mxu0 0.0
  %3209 = vmatprep.subr.mxu0 0.0
  %3210 = vmatpush1.xpose.msra.mxu0 0.0
  %3211 = vmatprep.subr.mxu0 0.0
  %3212 = vmatpush1.xpose.msra.mxu0 0.0
  %3213 = vmatprep.subr.mxu0 0.0
  %3214 = vmatpush1.xpose.msra.mxu0 0.0
  %3215 = vmatprep.subr.mxu0 0.0
  %3216 = vmatpush1.xpose.msra.mxu0 0.0
  %3217 = vmatprep.subr.mxu0 0.0
  %3218 = vmatpush1.xpose.msra.mxu0 0.0
  %3219 = vmatprep.subr.mxu0 0.0
  %3220 = vmatpush1.xpose.msra.mxu0 0.0
  %3221 = vmatprep.subr.mxu0 0.0
  %3222 = vmatpush1.xpose.msra.mxu0 0.0
  %3223 = vmatprep.subr.mxu0 0.0
  %3224 = vmatpush1.xpose.msra.mxu0 0.0
  %3225 = vmatprep.subr.mxu0 0.0
  %3226 = vmatpush1.xpose.msra.mxu0 0.0
  %3227 = vmatprep.subr.mxu0 0.0
  %3228 = vmatpush1.xpose.msra.mxu0 0.0
  %3229 = vmatprep.subr.mxu0 0.0
  %3230 = vmatpush1.xpose.msra.mxu0 0.0
  %3231 = vmatprep.subr.mxu0 0.0
  %3232 = vmatpush1.xpose.msra.mxu0 0.0
  %3233 = vmatprep.subr.mxu0 0.0
  %3234 = vmatpush1.xpose.msra.mxu0 0.0
  %3235 = vmatprep.subr.mxu0 0.0
  %3236 = vmatpush1.xpose.msra.mxu0 0.0
  %3237 = vmatprep.subr.mxu0 0.0
  %3238 = vmatpush1.xpose.msra.mxu0 0.0
  %3239 = vmatprep.subr.mxu0 0.0
  %3240 = vmatpush1.xpose.msra.mxu0 0.0
  %3241 = vmatprep.subr.mxu0 0.0
  %3242 = vmatpush1.xpose.msra.mxu0 0.0
  %3243 = vmatprep.mubr.f32.mxu0 0.0
  %3244 = vmatmul.mubr.f32.gmra.mrb[0].mxu0 %v3168
  %v3245 = vpop.f32.mrb[0].mxu0
  %v3246 = vadd.f32 0.0, %v3245
  %v3247 = vpop.f32.mrb[0].mxu0
  %3248 = vmatprep.mubr.f32.mxu0 0.0
  %3249 = vmatmul.mubr.f32.gmra.mrb[0].mxu0 %v3171
  %v3250 = vpop.f32.mrb[0].mxu0
  %v3251 = vadd.f32 0.0, %v3250
  %v3252 = vpop.f32.mrb[0].mxu0
  %3253 = vdwg.mxu0
  %v3254 = vmul.f32 %v2637, 0.35355338
  %v3255 = vmul.f32 %v2642, 0.35355338
  %v3256 = vmul.f32 %v2724, 0.35355338
  %v3257 = vmul.f32 %v2729, 0.35355338
  %v3258 = vmul.f32 %v2811, 0.35355338
  %v3259 = vmul.f32 %v2816, 0.35355338
  %v3260 = vmul.f32 %v2898, 0.35355338
  %v3261 = vmul.f32 %v2903, 0.35355338
  %v3262 = vmul.f32 %v2985, 0.35355338
  %v3263 = vmul.f32 %v2990, 0.35355338
  %v3264 = vmul.f32 %v3072, 0.35355338
  %v3265 = vmul.f32 %v3077, 0.35355338
  %v3266 = vmul.f32 %v3159, 0.35355338
  %v3267 = vmul.f32 %v3164, 0.35355338
  %v3268 = vmul.f32 %v3246, 0.35355338
  %v3269 = vmul.f32 %v3251, 0.35355338
  %v3270 = vadd.f32 %v3254, %v42
  %v3271 = vadd.f32 %v3255, %v43
  %v3272 = vadd.f32 %v3256, %v44
  %v3273 = vadd.f32 %v3257, %v45
  %v3274 = vadd.f32 %v3258, %v46
  %v3275 = vadd.f32 %v3259, %v47
  %v3276 = vadd.f32 %v3260, %v48
  %v3277 = vadd.f32 %v3261, %v49
  %v3278 = vadd.f32 %v3262, %v50
  %v3279 = vadd.f32 %v3263, %v51
  %v3280 = vadd.f32 %v3264, %v52
  %v3281 = vadd.f32 %v3265, %v53
  %v3282 = vadd.f32 %v3266, %v54
  %v3283 = vadd.f32 %v3267, %v55
  %v3284 = vadd.f32 %v3268, %v56
  %v3285 = vadd.f32 %v3269, %v57
  %v3286 = vsel %vm1283, %v3270, -inf
  %3287 = vmax.xlane.f32.xlu0 %v3286
  %v3288 = vpop.xlane.xlu0 %3287
  %v3289 = vsel %vm1283, %v3271, -inf
  %3290 = vmax.xlane.f32.xlu0 %v3289
  %v3291 = vpop.xlane.xlu0 %3290
  %v3292 = vsel %vm1283, %v3272, -inf
  %3293 = vmax.xlane.f32.xlu0 %v3292
  %v3294 = vpop.xlane.xlu0 %3293
  %v3295 = vsel %vm1283, %v3273, -inf
  %3296 = vmax.xlane.f32.xlu0 %v3295
  %v3297 = vpop.xlane.xlu0 %3296
  %v3298 = vsel %vm1283, %v3274, -inf
  %3299 = vmax.xlane.f32.xlu0 %v3298
  %v3300 = vpop.xlane.xlu0 %3299
  %v3301 = vsel %vm1283, %v3275, -inf
  %3302 = vmax.xlane.f32.xlu0 %v3301
  %v3303 = vpop.xlane.xlu0 %3302
  %v3304 = vsel %vm1283, %v3276, -inf
  %3305 = vmax.xlane.f32.xlu0 %v3304
  %v3306 = vpop.xlane.xlu0 %3305
  %v3307 = vsel %vm1283, %v3277, -inf
  %3308 = vmax.xlane.f32.xlu0 %v3307
  %v3309 = vpop.xlane.xlu0 %3308
  %v3310 = vsel %vm1283, %v3278, -inf
  %3311 = vmax.xlane.f32.xlu0 %v3310
  %v3312 = vpop.xlane.xlu0 %3311
  %v3313 = vsel %vm1283, %v3279, -inf
  %3314 = vmax.xlane.f32.xlu0 %v3313
  %v3315 = vpop.xlane.xlu0 %3314
  %v3316 = vsel %vm1283, %v3280, -inf
  %3317 = vmax.xlane.f32.xlu0 %v3316
  %v3318 = vpop.xlane.xlu0 %3317
  %v3319 = vsel %vm1283, %v3281, -inf
  %3320 = vmax.xlane.f32.xlu0 %v3319
  %v3321 = vpop.xlane.xlu0 %3320
  %v3322 = vsel %vm1283, %v3282, -inf
  %3323 = vmax.xlane.f32.xlu0 %v3322
  %v3324 = vpop.xlane.xlu0 %3323
  %v3325 = vsel %vm1283, %v3283, -inf
  %3326 = vmax.xlane.f32.xlu0 %v3325
  %v3327 = vpop.xlane.xlu0 %3326
  %v3328 = vsel %vm1283, %v3284, -inf
  %3329 = vmax.xlane.f32.xlu0 %v3328
  %v3330 = vpop.xlane.xlu0 %3329
  %v3331 = vsel %vm1283, %v3285, -inf
  %3332 = vmax.xlane.f32.xlu0 %v3331
  %v3333 = vpop.xlane.xlu0 %3332
  %v3334 = vsub.f32 %v3270, %v3288
  %v3335 = vsub.f32 %v3271, %v3291
  %v3336 = vsub.f32 %v3272, %v3294
  %v3337 = vsub.f32 %v3273, %v3297
  %v3338 = vsub.f32 %v3274, %v3300
  %v3339 = vsub.f32 %v3275, %v3303
  %v3340 = vsub.f32 %v3276, %v3306
  %v3341 = vsub.f32 %v3277, %v3309
  %v3342 = vsub.f32 %v3278, %v3312
  %v3343 = vsub.f32 %v3279, %v3315
  %v3344 = vsub.f32 %v3280, %v3318
  %v3345 = vsub.f32 %v3281, %v3321
  %v3346 = vsub.f32 %v3282, %v3324
  %v3347 = vsub.f32 %v3283, %v3327
  %v3348 = vsub.f32 %v3284, %v3330
  %v3349 = vsub.f32 %v3285, %v3333
  %v3350 = vmul.f32 %v3334, 1.442695
  %v3351 = vpow.pop %v3350
  %v3352 = vmul.f32 %v3335, 1.442695
  %v3353 = vpow.pop %v3352
  %v3354 = vmul.f32 %v3336, 1.442695
  %v3355 = vpow.pop %v3354
  %v3356 = vmul.f32 %v3337, 1.442695
  %v3357 = vpow.pop %v3356
  %v3358 = vmul.f32 %v3338, 1.442695
  %v3359 = vpow.pop %v3358
  %v3360 = vmul.f32 %v3339, 1.442695
  %v3361 = vpow.pop %v3360
  %v3362 = vmul.f32 %v3340, 1.442695
  %v3363 = vpow.pop %v3362
  %v3364 = vmul.f32 %v3341, 1.442695
  %v3365 = vpow.pop %v3364
  %v3366 = vmul.f32 %v3342, 1.442695
  %v3367 = vpow.pop %v3366
  %v3368 = vmul.f32 %v3343, 1.442695
  %v3369 = vpow.pop %v3368
  %v3370 = vmul.f32 %v3344, 1.442695
  %v3371 = vpow.pop %v3370
  %v3372 = vmul.f32 %v3345, 1.442695
  %v3373 = vpow.pop %v3372
  %v3374 = vmul.f32 %v3346, 1.442695
  %v3375 = vpow.pop %v3374
  %v3376 = vmul.f32 %v3347, 1.442695
  %v3377 = vpow.pop %v3376
  %v3378 = vmul.f32 %v3348, 1.442695
  %v3379 = vpow.pop %v3378
  %v3380 = vmul.f32 %v3349, 1.442695
  %v3381 = vpow.pop %v3380
  %v3382 = vsel %vm1283, %v3351, 0.0
  %3383 = vadd.xlane.f32.xlu0 %v3382
  %v3384 = vpop.xlane.xlu0 %3383
  %v3385 = vsel %vm1283, %v3353, 0.0
  %3386 = vadd.xlane.f32.xlu0 %v3385
  %v3387 = vpop.xlane.xlu0 %3386
  %v3388 = vsel %vm1283, %v3355, 0.0
  %3389 = vadd.xlane.f32.xlu0 %v3388
  %v3390 = vpop.xlane.xlu0 %3389
  %v3391 = vsel %vm1283, %v3357, 0.0
  %3392 = vadd.xlane.f32.xlu0 %v3391
  %v3393 = vpop.xlane.xlu0 %3392
  %v3394 = vsel %vm1283, %v3359, 0.0
  %3395 = vadd.xlane.f32.xlu0 %v3394
  %v3396 = vpop.xlane.xlu0 %3395
  %v3397 = vsel %vm1283, %v3361, 0.0
  %3398 = vadd.xlane.f32.xlu0 %v3397
  %v3399 = vpop.xlane.xlu0 %3398
  %v3400 = vsel %vm1283, %v3363, 0.0
  %3401 = vadd.xlane.f32.xlu0 %v3400
  %v3402 = vpop.xlane.xlu0 %3401
  %v3403 = vsel %vm1283, %v3365, 0.0
  %3404 = vadd.xlane.f32.xlu0 %v3403
  %v3405 = vpop.xlane.xlu0 %3404
  %v3406 = vsel %vm1283, %v3367, 0.0
  %3407 = vadd.xlane.f32.xlu0 %v3406
  %v3408 = vpop.xlane.xlu0 %3407
  %v3409 = vsel %vm1283, %v3369, 0.0
  %3410 = vadd.xlane.f32.xlu0 %v3409
  %v3411 = vpop.xlane.xlu0 %3410
  %v3412 = vsel %vm1283, %v3371, 0.0
  %3413 = vadd.xlane.f32.xlu0 %v3412
  %v3414 = vpop.xlane.xlu0 %3413
  %v3415 = vsel %vm1283, %v3373, 0.0
  %3416 = vadd.xlane.f32.xlu0 %v3415
  %v3417 = vpop.xlane.xlu0 %3416
  %v3418 = vsel %vm1283, %v3375, 0.0
  %3419 = vadd.xlane.f32.xlu0 %v3418
  %v3420 = vpop.xlane.xlu0 %3419
  %v3421 = vsel %vm1283, %v3377, 0.0
  %3422 = vadd.xlane.f32.xlu0 %v3421
  %v3423 = vpop.xlane.xlu0 %3422
  %v3424 = vsel %vm1283, %v3379, 0.0
  %3425 = vadd.xlane.f32.xlu0 %v3424
  %v3426 = vpop.xlane.xlu0 %3425
  %v3427 = vsel %vm1283, %v3381, 0.0
  %3428 = vadd.xlane.f32.xlu0 %v3427
  %v3429 = vpop.xlane.xlu0 %3428
  %v3430 = vrcp.pop %v3384
  %v3431 = vrcp.pop %v3387
  %v3432 = vrcp.pop %v3390
  %v3433 = vrcp.pop %v3393
  %v3434 = vrcp.pop %v3396
  %v3435 = vrcp.pop %v3399
  %v3436 = vrcp.pop %v3402
  %v3437 = vrcp.pop %v3405
  %v3438 = vrcp.pop %v3408
  %v3439 = vrcp.pop %v3411
  %v3440 = vrcp.pop %v3414
  %v3441 = vrcp.pop %v3417
  %v3442 = vrcp.pop %v3420
  %v3443 = vrcp.pop %v3423
  %v3444 = vrcp.pop %v3426
  %v3445 = vrcp.pop %v3429
  %v3446 = vmul.f32 %v3351, %v3430
  %v3447 = vmul.f32 %v3353, %v3431
  %v3448 = vmul.f32 %v3355, %v3432
  %v3449 = vmul.f32 %v3357, %v3433
  %v3450 = vmul.f32 %v3359, %v3434
  %v3451 = vmul.f32 %v3361, %v3435
  %v3452 = vmul.f32 %v3363, %v3436
  %v3453 = vmul.f32 %v3365, %v3437
  %v3454 = vmul.f32 %v3367, %v3438
  %v3455 = vmul.f32 %v3369, %v3439
  %v3456 = vmul.f32 %v3371, %v3440
  %v3457 = vmul.f32 %v3373, %v3441
  %v3458 = vmul.f32 %v3375, %v3442
  %v3459 = vmul.f32 %v3377, %v3443
  %v3460 = vmul.f32 %v3379, %v3444
  %v3461 = vmul.f32 %v3381, %v3445
  %v3463 = vsel %vm1283, %v3446, 0
  %v3466 = vsel %vm1283, %v3447, 0
  %3468 = vmatprep.subr.mxu0 0.0
  %3469 = vmatpush1.msra.mxu0 %v2480
  %3470 = vmatprep.subr.mxu0 0.0
  %3471 = vmatpush1.msra.mxu0 %v2485
  %3472 = vmatprep.subr.mxu0 0.0
  %3473 = vmatpush1.msra.mxu0 0.0
  %3474 = vmatprep.subr.mxu0 0.0
  %3475 = vmatpush1.msra.mxu0 0.0
  %3476 = vmatprep.subr.mxu0 0.0
  %3477 = vmatpush1.msra.mxu0 0.0
  %3478 = vmatprep.subr.mxu0 0.0
  %3479 = vmatpush1.msra.mxu0 0.0
  %3480 = vmatprep.subr.mxu0 0.0
  %3481 = vmatpush1.msra.mxu0 0.0
  %3482 = vmatprep.subr.mxu0 0.0
  %3483 = vmatpush1.msra.mxu0 0.0
  %3484 = vmatprep.subr.mxu0 0.0
  %3485 = vmatpush1.msra.mxu0 0.0
  %3486 = vmatprep.subr.mxu0 0.0
  %3487 = vmatpush1.msra.mxu0 0.0
  %3488 = vmatprep.subr.mxu0 0.0
  %3489 = vmatpush1.msra.mxu0 0.0
  %3490 = vmatprep.subr.mxu0 0.0
  %3491 = vmatpush1.msra.mxu0 0.0
  %3492 = vmatprep.subr.mxu0 0.0
  %3493 = vmatpush1.msra.mxu0 0.0
  %3494 = vmatprep.subr.mxu0 0.0
  %3495 = vmatpush1.msra.mxu0 0.0
  %3496 = vmatprep.subr.mxu0 0.0
  %3497 = vmatpush1.msra.mxu0 0.0
  %3498 = vmatprep.subr.mxu0 0.0
  %3499 = vmatpush1.msra.mxu0 0.0
  %3500 = vmatprep.subr.mxu0 0.0
  %3501 = vmatpush1.msra.mxu0 0.0
  %3502 = vmatprep.subr.mxu0 0.0
  %3503 = vmatpush1.msra.mxu0 0.0
  %3504 = vmatprep.subr.mxu0 0.0
  %3505 = vmatpush1.msra.mxu0 0.0
  %3506 = vmatprep.subr.mxu0 0.0
  %3507 = vmatpush1.msra.mxu0 0.0
  %3508 = vmatprep.subr.mxu0 0.0
  %3509 = vmatpush1.msra.mxu0 0.0
  %3510 = vmatprep.subr.mxu0 0.0
  %3511 = vmatpush1.msra.mxu0 0.0
  %3512 = vmatprep.subr.mxu0 0.0
  %3513 = vmatpush1.msra.mxu0 0.0
  %3514 = vmatprep.subr.mxu0 0.0
  %3515 = vmatpush1.msra.mxu0 0.0
  %3516 = vmatprep.subr.mxu0 0.0
  %3517 = vmatpush1.msra.mxu0 0.0
  %3518 = vmatprep.subr.mxu0 0.0
  %3519 = vmatpush1.msra.mxu0 0.0
  %3520 = vmatprep.subr.mxu0 0.0
  %3521 = vmatpush1.msra.mxu0 0.0
  %3522 = vmatprep.subr.mxu0 0.0
  %3523 = vmatpush1.msra.mxu0 0.0
  %3524 = vmatprep.subr.mxu0 0.0
  %3525 = vmatpush1.msra.mxu0 0.0
  %3526 = vmatprep.subr.mxu0 0.0
  %3527 = vmatpush1.msra.mxu0 0.0
  %3528 = vmatprep.subr.mxu0 0.0
  %3529 = vmatpush1.msra.mxu0 0.0
  %3530 = vmatprep.subr.mxu0 0.0
  %3531 = vmatpush1.msra.mxu0 0.0
  %3532 = vmatprep.mubr.f32.mxu0 0.0
  %3533 = vmatmul.mubr.f32.gmra.mrb[0].mxu0 %v3463
  %v3534 = vpop.f32.mrb[0].mxu0
  %v3535 = vadd.f32 0.0, %v3534
  %v3536 = vpop.f32.mrb[0].mxu0
  %3537 = vmatprep.mubr.f32.mxu0 0.0
  %3538 = vmatmul.mubr.f32.gmra.mrb[0].mxu0 %v3466
  %v3539 = vpop.f32.mrb[0].mxu0
  %v3540 = vadd.f32 0.0, %v3539
  %v3541 = vpop.f32.mrb[0].mxu0
  %3542 = vdwg.mxu0
  %v3544 = vsel %vm1283, %v3448, 0
  %v3547 = vsel %vm1283, %v3449, 0
  %3549 = vmatprep.subr.mxu0 0.0
  %3550 = vmatpush1.msra.mxu0 %v2490
  %3551 = vmatprep.subr.mxu0 0.0
  %3552 = vmatpush1.msra.mxu0 %v2495
  %3553 = vmatprep.subr.mxu0 0.0
  %3554 = vmatpush1.msra.mxu0 0.0
  %3555 = vmatprep.subr.mxu0 0.0
  %3556 = vmatpush1.msra.mxu0 0.0
  %3557 = vmatprep.subr.mxu0 0.0
  %3558 = vmatpush1.msra.mxu0 0.0
  %3559 = vmatprep.subr.mxu0 0.0
  %3560 = vmatpush1.msra.mxu0 0.0
  %3561 = vmatprep.subr.mxu0 0.0
  %3562 = vmatpush1.msra.mxu0 0.0
  %3563 = vmatprep.subr.mxu0 0.0
  %3564 = vmatpush1.msra.mxu0 0.0
  %3565 = vmatprep.subr.mxu0 0.0
  %3566 = vmatpush1.msra.mxu0 0.0
  %3567 = vmatprep.subr.mxu0 0.0
  %3568 = vmatpush1.msra.mxu0 0.0
  %3569 = vmatprep.subr.mxu0 0.0
  %3570 = vmatpush1.msra.mxu0 0.0
  %3571 = vmatprep.subr.mxu0 0.0
  %3572 = vmatpush1.msra.mxu0 0.0
  %3573 = vmatprep.subr.mxu0 0.0
  %3574 = vmatpush1.msra.mxu0 0.0
  %3575 = vmatprep.subr.mxu0 0.0
  %3576 = vmatpush1.msra.mxu0 0.0
  %3577 = vmatprep.subr.mxu0 0.0
  %3578 = vmatpush1.msra.mxu0 0.0
  %3579 = vmatprep.subr.mxu0 0.0
  %3580 = vmatpush1.msra.mxu0 0.0
  %3581 = vmatprep.subr.mxu0 0.0
  %3582 = vmatpush1.msra.mxu0 0.0
  %3583 = vmatprep.subr.mxu0 0.0
  %3584 = vmatpush1.msra.mxu0 0.0
  %3585 = vmatprep.subr.mxu0 0.0
  %3586 = vmatpush1.msra.mxu0 0.0
  %3587 = vmatprep.subr.mxu0 0.0
  %3588 = vmatpush1.msra.mxu0 0.0
  %3589 = vmatprep.subr.mxu0 0.0
  %3590 = vmatpush1.msra.mxu0 0.0
  %3591 = vmatprep.subr.mxu0 0.0
  %3592 = vmatpush1.msra.mxu0 0.0
  %3593 = vmatprep.subr.mxu0 0.0
  %3594 = vmatpush1.msra.mxu0 0.0
  %3595 = vmatprep.subr.mxu0 0.0
  %3596 = vmatpush1.msra.mxu0 0.0
  %3597 = vmatprep.subr.mxu0 0.0
  %3598 = vmatpush1.msra.mxu0 0.0
  %3599 = vmatprep.subr.mxu0 0.0
  %3600 = vmatpush1.msra.mxu0 0.0
  %3601 = vmatprep.subr.mxu0 0.0
  %3602 = vmatpush1.msra.mxu0 0.0
  %3603 = vmatprep.subr.mxu0 0.0
  %3604 = vmatpush1.msra.mxu0 0.0
  %3605 = vmatprep.subr.mxu0 0.0
  %3606 = vmatpush1.msra.mxu0 0.0
  %3607 = vmatprep.subr.mxu0 0.0
  %3608 = vmatpush1.msra.mxu0 0.0
  %3609 = vmatprep.subr.mxu0 0.0
  %3610 = vmatpush1.msra.mxu0 0.0
  %3611 = vmatprep.subr.mxu0 0.0
  %3612 = vmatpush1.msra.mxu0 0.0
  %3613 = vmatprep.mubr.f32.mxu0 0.0
  %3614 = vmatmul.mubr.f32.gmra.mrb[0].mxu0 %v3544
  %v3615 = vpop.f32.mrb[0].mxu0
  %v3616 = vadd.f32 0.0, %v3615
  %v3617 = vpop.f32.mrb[0].mxu0
  %3618 = vmatprep.mubr.f32.mxu0 0.0
  %3619 = vmatmul.mubr.f32.gmra.mrb[0].mxu0 %v3547
  %v3620 = vpop.f32.mrb[0].mxu0
  %v3621 = vadd.f32 0.0, %v3620
  %v3622 = vpop.f32.mrb[0].mxu0
  %3623 = vdwg.mxu0
  %v3625 = vsel %vm1283, %v3450, 0
  %v3628 = vsel %vm1283, %v3451, 0
  %3630 = vmatprep.subr.mxu0 0.0
  %3631 = vmatpush1.msra.mxu0 %v2500
  %3632 = vmatprep.subr.mxu0 0.0
  %3633 = vmatpush1.msra.mxu0 %v2505
  %3634 = vmatprep.subr.mxu0 0.0
  %3635 = vmatpush1.msra.mxu0 0.0
  %3636 = vmatprep.subr.mxu0 0.0
  %3637 = vmatpush1.msra.mxu0 0.0
  %3638 = vmatprep.subr.mxu0 0.0
  %3639 = vmatpush1.msra.mxu0 0.0
  %3640 = vmatprep.subr.mxu0 0.0
  %3641 = vmatpush1.msra.mxu0 0.0
  %3642 = vmatprep.subr.mxu0 0.0
  %3643 = vmatpush1.msra.mxu0 0.0
  %3644 = vmatprep.subr.mxu0 0.0
  %3645 = vmatpush1.msra.mxu0 0.0
  %3646 = vmatprep.subr.mxu0 0.0
  %3647 = vmatpush1.msra.mxu0 0.0
  %3648 = vmatprep.subr.mxu0 0.0
  %3649 = vmatpush1.msra.mxu0 0.0
  %3650 = vmatprep.subr.mxu0 0.0
  %3651 = vmatpush1.msra.mxu0 0.0
  %3652 = vmatprep.subr.mxu0 0.0
  %3653 = vmatpush1.msra.mxu0 0.0
  %3654 = vmatprep.subr.mxu0 0.0
  %3655 = vmatpush1.msra.mxu0 0.0
  %3656 = vmatprep.subr.mxu0 0.0
  %3657 = vmatpush1.msra.mxu0 0.0
  %3658 = vmatprep.subr.mxu0 0.0
  %3659 = vmatpush1.msra.mxu0 0.0
  %3660 = vmatprep.subr.mxu0 0.0
  %3661 = vmatpush1.msra.mxu0 0.0
  %3662 = vmatprep.subr.mxu0 0.0
  %3663 = vmatpush1.msra.mxu0 0.0
  %3664 = vmatprep.subr.mxu0 0.0
  %3665 = vmatpush1.msra.mxu0 0.0
  %3666 = vmatprep.subr.mxu0 0.0
  %3667 = vmatpush1.msra.mxu0 0.0
  %3668 = vmatprep.subr.mxu0 0.0
  %3669 = vmatpush1.msra.mxu0 0.0
  %3670 = vmatprep.subr.mxu0 0.0
  %3671 = vmatpush1.msra.mxu0 0.0
  %3672 = vmatprep.subr.mxu0 0.0
  %3673 = vmatpush1.msra.mxu0 0.0
  %3674 = vmatprep.subr.mxu0 0.0
  %3675 = vmatpush1.msra.mxu0 0.0
  %3676 = vmatprep.subr.mxu0 0.0
  %3677 = vmatpush1.msra.mxu0 0.0
  %3678 = vmatprep.subr.mxu0 0.0
  %3679 = vmatpush1.msra.mxu0 0.0
  %3680 = vmatprep.subr.mxu0 0.0
  %3681 = vmatpush1.msra.mxu0 0.0
  %3682 = vmatprep.subr.mxu0 0.0
  %3683 = vmatpush1.msra.mxu0 0.0
  %3684 = vmatprep.subr.mxu0 0.0
  %3685 = vmatpush1.msra.mxu0 0.0
  %3686 = vmatprep.subr.mxu0 0.0
  %3687 = vmatpush1.msra.mxu0 0.0
  %3688 = vmatprep.subr.mxu0 0.0
  %3689 = vmatpush1.msra.mxu0 0.0
  %3690 = vmatprep.subr.mxu0 0.0
  %3691 = vmatpush1.msra.mxu0 0.0
  %3692 = vmatprep.subr.mxu0 0.0
  %3693 = vmatpush1.msra.mxu0 0.0
  %3694 = vmatprep.mubr.f32.mxu0 0.0
  %3695 = vmatmul.mubr.f32.gmra.mrb[0].mxu0 %v3625
  %v3696 = vpop.f32.mrb[0].mxu0
  %v3697 = vadd.f32 0.0, %v3696
  %v3698 = vpop.f32.mrb[0].mxu0
  %3699 = vmatprep.mubr.f32.mxu0 0.0
  %3700 = vmatmul.mubr.f32.gmra.mrb[0].mxu0 %v3628
  %v3701 = vpop.f32.mrb[0].mxu0
  %v3702 = vadd.f32 0.0, %v3701
  %v3703 = vpop.f32.mrb[0].mxu0
  %3704 = vdwg.mxu0
  %v3706 = vsel %vm1283, %v3452, 0
  %v3709 = vsel %vm1283, %v3453, 0
  %3711 = vmatprep.subr.mxu0 0.0
  %3712 = vmatpush1.msra.mxu0 %v2510
  %3713 = vmatprep.subr.mxu0 0.0
  %3714 = vmatpush1.msra.mxu0 %v2515
  %3715 = vmatprep.subr.mxu0 0.0
  %3716 = vmatpush1.msra.mxu0 0.0
  %3717 = vmatprep.subr.mxu0 0.0
  %3718 = vmatpush1.msra.mxu0 0.0
  %3719 = vmatprep.subr.mxu0 0.0
  %3720 = vmatpush1.msra.mxu0 0.0
  %3721 = vmatprep.subr.mxu0 0.0
  %3722 = vmatpush1.msra.mxu0 0.0
  %3723 = vmatprep.subr.mxu0 0.0
  %3724 = vmatpush1.msra.mxu0 0.0
  %3725 = vmatprep.subr.mxu0 0.0
  %3726 = vmatpush1.msra.mxu0 0.0
  %3727 = vmatprep.subr.mxu0 0.0
  %3728 = vmatpush1.msra.mxu0 0.0
  %3729 = vmatprep.subr.mxu0 0.0
  %3730 = vmatpush1.msra.mxu0 0.0
  %3731 = vmatprep.subr.mxu0 0.0
  %3732 = vmatpush1.msra.mxu0 0.0
  %3733 = vmatprep.subr.mxu0 0.0
  %3734 = vmatpush1.msra.mxu0 0.0
  %3735 = vmatprep.subr.mxu0 0.0
  %3736 = vmatpush1.msra.mxu0 0.0
  %3737 = vmatprep.subr.mxu0 0.0
  %3738 = vmatpush1.msra.mxu0 0.0
  %3739 = vmatprep.subr.mxu0 0.0
  %3740 = vmatpush1.msra.mxu0 0.0
  %3741 = vmatprep.subr.mxu0 0.0
  %3742 = vmatpush1.msra.mxu0 0.0
  %3743 = vmatprep.subr.mxu0 0.0
  %3744 = vmatpush1.msra.mxu0 0.0
  %3745 = vmatprep.subr.mxu0 0.0
  %3746 = vmatpush1.msra.mxu0 0.0
  %3747 = vmatprep.subr.mxu0 0.0
  %3748 = vmatpush1.msra.mxu0 0.0
  %3749 = vmatprep.subr.mxu0 0.0
  %3750 = vmatpush1.msra.mxu0 0.0
  %3751 = vmatprep.subr.mxu0 0.0
  %3752 = vmatpush1.msra.mxu0 0.0
  %3753 = vmatprep.subr.mxu0 0.0
  %3754 = vmatpush1.msra.mxu0 0.0
  %3755 = vmatprep.subr.mxu0 0.0
  %3756 = vmatpush1.msra.mxu0 0.0
  %3757 = vmatprep.subr.mxu0 0.0
  %3758 = vmatpush1.msra.mxu0 0.0
  %3759 = vmatprep.subr.mxu0 0.0
  %3760 = vmatpush1.msra.mxu0 0.0
  %3761 = vmatprep.subr.mxu0 0.0
  %3762 = vmatpush1.msra.mxu0 0.0
  %3763 = vmatprep.subr.mxu0 0.0
  %3764 = vmatpush1.msra.mxu0 0.0
  %3765 = vmatprep.subr.mxu0 0.0
  %3766 = vmatpush1.msra.mxu0 0.0
  %3767 = vmatprep.subr.mxu0 0.0
  %3768 = vmatpush1.msra.mxu0 0.0
  %3769 = vmatprep.subr.mxu0 0.0
  %3770 = vmatpush1.msra.mxu0 0.0
  %3771 = vmatprep.subr.mxu0 0.0
  %3772 = vmatpush1.msra.mxu0 0.0
  %3773 = vmatprep.subr.mxu0 0.0
  %3774 = vmatpush1.msra.mxu0 0.0
  %3775 = vmatprep.mubr.f32.mxu0 0.0
  %3776 = vmatmul.mubr.f32.gmra.mrb[0].mxu0 %v3706
  %v3777 = vpop.f32.mrb[0].mxu0
  %v3778 = vadd.f32 0.0, %v3777
  %v3779 = vpop.f32.mrb[0].mxu0
  %3780 = vmatprep.mubr.f32.mxu0 0.0
  %3781 = vmatmul.mubr.f32.gmra.mrb[0].mxu0 %v3709
  %v3782 = vpop.f32.mrb[0].mxu0
  %v3783 = vadd.f32 0.0, %v3782
  %v3784 = vpop.f32.mrb[0].mxu0
  %3785 = vdwg.mxu0
  %v3787 = vsel %vm1283, %v3454, 0
  %v3790 = vsel %vm1283, %v3455, 0
  %3792 = vmatprep.subr.mxu0 0.0
  %3793 = vmatpush1.msra.mxu0 %v2520
  %3794 = vmatprep.subr.mxu0 0.0
  %3795 = vmatpush1.msra.mxu0 %v2525
  %3796 = vmatprep.subr.mxu0 0.0
  %3797 = vmatpush1.msra.mxu0 0.0
  %3798 = vmatprep.subr.mxu0 0.0
  %3799 = vmatpush1.msra.mxu0 0.0
  %3800 = vmatprep.subr.mxu0 0.0
  %3801 = vmatpush1.msra.mxu0 0.0
  %3802 = vmatprep.subr.mxu0 0.0
  %3803 = vmatpush1.msra.mxu0 0.0
  %3804 = vmatprep.subr.mxu0 0.0
  %3805 = vmatpush1.msra.mxu0 0.0
  %3806 = vmatprep.subr.mxu0 0.0
  %3807 = vmatpush1.msra.mxu0 0.0
  %3808 = vmatprep.subr.mxu0 0.0
  %3809 = vmatpush1.msra.mxu0 0.0
  %3810 = vmatprep.subr.mxu0 0.0
  %3811 = vmatpush1.msra.mxu0 0.0
  %3812 = vmatprep.subr.mxu0 0.0
  %3813 = vmatpush1.msra.mxu0 0.0
  %3814 = vmatprep.subr.mxu0 0.0
  %3815 = vmatpush1.msra.mxu0 0.0
  %3816 = vmatprep.subr.mxu0 0.0
  %3817 = vmatpush1.msra.mxu0 0.0
  %3818 = vmatprep.subr.mxu0 0.0
  %3819 = vmatpush1.msra.mxu0 0.0
  %3820 = vmatprep.subr.mxu0 0.0
  %3821 = vmatpush1.msra.mxu0 0.0
  %3822 = vmatprep.subr.mxu0 0.0
  %3823 = vmatpush1.msra.mxu0 0.0
  %3824 = vmatprep.subr.mxu0 0.0
  %3825 = vmatpush1.msra.mxu0 0.0
  %3826 = vmatprep.subr.mxu0 0.0
  %3827 = vmatpush1.msra.mxu0 0.0
  %3828 = vmatprep.subr.mxu0 0.0
  %3829 = vmatpush1.msra.mxu0 0.0
  %3830 = vmatprep.subr.mxu0 0.0
  %3831 = vmatpush1.msra.mxu0 0.0
  %3832 = vmatprep.subr.mxu0 0.0
  %3833 = vmatpush1.msra.mxu0 0.0
  %3834 = vmatprep.subr.mxu0 0.0
  %3835 = vmatpush1.msra.mxu0 0.0
  %3836 = vmatprep.subr.mxu0 0.0
  %3837 = vmatpush1.msra.mxu0 0.0
  %3838 = vmatprep.subr.mxu0 0.0
  %3839 = vmatpush1.msra.mxu0 0.0
  %3840 = vmatprep.subr.mxu0 0.0
  %3841 = vmatpush1.msra.mxu0 0.0
  %3842 = vmatprep.subr.mxu0 0.0
  %3843 = vmatpush1.msra.mxu0 0.0
  %3844 = vmatprep.subr.mxu0 0.0
  %3845 = vmatpush1.msra.mxu0 0.0
  %3846 = vmatprep.subr.mxu0 0.0
  %3847 = vmatpush1.msra.mxu0 0.0
  %3848 = vmatprep.subr.mxu0 0.0
  %3849 = vmatpush1.msra.mxu0 0.0
  %3850 = vmatprep.subr.mxu0 0.0
  %3851 = vmatpush1.msra.mxu0 0.0
  %3852 = vmatprep.subr.mxu0 0.0
  %3853 = vmatpush1.msra.mxu0 0.0
  %3854 = vmatprep.subr.mxu0 0.0
  %3855 = vmatpush1.msra.mxu0 0.0
  %3856 = vmatprep.mubr.f32.mxu0 0.0
  %3857 = vmatmul.mubr.f32.gmra.mrb[0].mxu0 %v3787
  %v3858 = vpop.f32.mrb[0].mxu0
  %v3859 = vadd.f32 0.0, %v3858
  %v3860 = vpop.f32.mrb[0].mxu0
  %3861 = vmatprep.mubr.f32.mxu0 0.0
  %3862 = vmatmul.mubr.f32.gmra.mrb[0].mxu0 %v3790
  %v3863 = vpop.f32.mrb[0].mxu0
  %v3864 = vadd.f32 0.0, %v3863
  %v3865 = vpop.f32.mrb[0].mxu0
  %3866 = vdwg.mxu0
  %v3868 = vsel %vm1283, %v3456, 0
  %v3871 = vsel %vm1283, %v3457, 0
  %3873 = vmatprep.subr.mxu0 0.0
  %3874 = vmatpush1.msra.mxu0 %v2530
  %3875 = vmatprep.subr.mxu0 0.0
  %3876 = vmatpush1.msra.mxu0 %v2535
  %3877 = vmatprep.subr.mxu0 0.0
  %3878 = vmatpush1.msra.mxu0 0.0
  %3879 = vmatprep.subr.mxu0 0.0
  %3880 = vmatpush1.msra.mxu0 0.0
  %3881 = vmatprep.subr.mxu0 0.0
  %3882 = vmatpush1.msra.mxu0 0.0
  %3883 = vmatprep.subr.mxu0 0.0
  %3884 = vmatpush1.msra.mxu0 0.0
  %3885 = vmatprep.subr.mxu0 0.0
  %3886 = vmatpush1.msra.mxu0 0.0
  %3887 = vmatprep.subr.mxu0 0.0
  %3888 = vmatpush1.msra.mxu0 0.0
  %3889 = vmatprep.subr.mxu0 0.0
  %3890 = vmatpush1.msra.mxu0 0.0
  %3891 = vmatprep.subr.mxu0 0.0
  %3892 = vmatpush1.msra.mxu0 0.0
  %3893 = vmatprep.subr.mxu0 0.0
  %3894 = vmatpush1.msra.mxu0 0.0
  %3895 = vmatprep.subr.mxu0 0.0
  %3896 = vmatpush1.msra.mxu0 0.0
  %3897 = vmatprep.subr.mxu0 0.0
  %3898 = vmatpush1.msra.mxu0 0.0
  %3899 = vmatprep.subr.mxu0 0.0
  %3900 = vmatpush1.msra.mxu0 0.0
  %3901 = vmatprep.subr.mxu0 0.0
  %3902 = vmatpush1.msra.mxu0 0.0
  %3903 = vmatprep.subr.mxu0 0.0
  %3904 = vmatpush1.msra.mxu0 0.0
  %3905 = vmatprep.subr.mxu0 0.0
  %3906 = vmatpush1.msra.mxu0 0.0
  %3907 = vmatprep.subr.mxu0 0.0
  %3908 = vmatpush1.msra.mxu0 0.0
  %3909 = vmatprep.subr.mxu0 0.0
  %3910 = vmatpush1.msra.mxu0 0.0
  %3911 = vmatprep.subr.mxu0 0.0
  %3912 = vmatpush1.msra.mxu0 0.0
  %3913 = vmatprep.subr.mxu0 0.0
  %3914 = vmatpush1.msra.mxu0 0.0
  %3915 = vmatprep.subr.mxu0 0.0
  %3916 = vmatpush1.msra.mxu0 0.0
  %3917 = vmatprep.subr.mxu0 0.0
  %3918 = vmatpush1.msra.mxu0 0.0
  %3919 = vmatprep.subr.mxu0 0.0
  %3920 = vmatpush1.msra.mxu0 0.0
  %3921 = vmatprep.subr.mxu0 0.0
  %3922 = vmatpush1.msra.mxu0 0.0
  %3923 = vmatprep.subr.mxu0 0.0
  %3924 = vmatpush1.msra.mxu0 0.0
  %3925 = vmatprep.subr.mxu0 0.0
  %3926 = vmatpush1.msra.mxu0 0.0
  %3927 = vmatprep.subr.mxu0 0.0
  %3928 = vmatpush1.msra.mxu0 0.0
  %3929 = vmatprep.subr.mxu0 0.0
  %3930 = vmatpush1.msra.mxu0 0.0
  %3931 = vmatprep.subr.mxu0 0.0
  %3932 = vmatpush1.msra.mxu0 0.0
  %3933 = vmatprep.subr.mxu0 0.0
  %3934 = vmatpush1.msra.mxu0 0.0
  %3935 = vmatprep.subr.mxu0 0.0
  %3936 = vmatpush1.msra.mxu0 0.0
  %3937 = vmatprep.mubr.f32.mxu0 0.0
  %3938 = vmatmul.mubr.f32.gmra.mrb[0].mxu0 %v3868
  %v3939 = vpop.f32.mrb[0].mxu0
  %v3940 = vadd.f32 0.0, %v3939
  %v3941 = vpop.f32.mrb[0].mxu0
  %3942 = vmatprep.mubr.f32.mxu0 0.0
  %3943 = vmatmul.mubr.f32.gmra.mrb[0].mxu0 %v3871
  %v3944 = vpop.f32.mrb[0].mxu0
  %v3945 = vadd.f32 0.0, %v3944
  %v3946 = vpop.f32.mrb[0].mxu0
  %3947 = vdwg.mxu0
  %v3949 = vsel %vm1283, %v3458, 0
  %v3952 = vsel %vm1283, %v3459, 0
  %3954 = vmatprep.subr.mxu0 0.0
  %3955 = vmatpush1.msra.mxu0 %v2540
  %3956 = vmatprep.subr.mxu0 0.0
  %3957 = vmatpush1.msra.mxu0 %v2545
  %3958 = vmatprep.subr.mxu0 0.0
  %3959 = vmatpush1.msra.mxu0 0.0
  %3960 = vmatprep.subr.mxu0 0.0
  %3961 = vmatpush1.msra.mxu0 0.0
  %3962 = vmatprep.subr.mxu0 0.0
  %3963 = vmatpush1.msra.mxu0 0.0
  %3964 = vmatprep.subr.mxu0 0.0
  %3965 = vmatpush1.msra.mxu0 0.0
  %3966 = vmatprep.subr.mxu0 0.0
  %3967 = vmatpush1.msra.mxu0 0.0
  %3968 = vmatprep.subr.mxu0 0.0
  %3969 = vmatpush1.msra.mxu0 0.0
  %3970 = vmatprep.subr.mxu0 0.0
  %3971 = vmatpush1.msra.mxu0 0.0
  %3972 = vmatprep.subr.mxu0 0.0
  %3973 = vmatpush1.msra.mxu0 0.0
  %3974 = vmatprep.subr.mxu0 0.0
  %3975 = vmatpush1.msra.mxu0 0.0
  %3976 = vmatprep.subr.mxu0 0.0
  %3977 = vmatpush1.msra.mxu0 0.0
  %3978 = vmatprep.subr.mxu0 0.0
  %3979 = vmatpush1.msra.mxu0 0.0
  %3980 = vmatprep.subr.mxu0 0.0
  %3981 = vmatpush1.msra.mxu0 0.0
  %3982 = vmatprep.subr.mxu0 0.0
  %3983 = vmatpush1.msra.mxu0 0.0
  %3984 = vmatprep.subr.mxu0 0.0
  %3985 = vmatpush1.msra.mxu0 0.0
  %3986 = vmatprep.subr.mxu0 0.0
  %3987 = vmatpush1.msra.mxu0 0.0
  %3988 = vmatprep.subr.mxu0 0.0
  %3989 = vmatpush1.msra.mxu0 0.0
  %3990 = vmatprep.subr.mxu0 0.0
  %3991 = vmatpush1.msra.mxu0 0.0
  %3992 = vmatprep.subr.mxu0 0.0
  %3993 = vmatpush1.msra.mxu0 0.0
  %3994 = vmatprep.subr.mxu0 0.0
  %3995 = vmatpush1.msra.mxu0 0.0
  %3996 = vmatprep.subr.mxu0 0.0
  %3997 = vmatpush1.msra.mxu0 0.0
  %3998 = vmatprep.subr.mxu0 0.0
  %3999 = vmatpush1.msra.mxu0 0.0
  %4000 = vmatprep.subr.mxu0 0.0
  %4001 = vmatpush1.msra.mxu0 0.0
  %4002 = vmatprep.subr.mxu0 0.0
  %4003 = vmatpush1.msra.mxu0 0.0
  %4004 = vmatprep.subr.mxu0 0.0
  %4005 = vmatpush1.msra.mxu0 0.0
  %4006 = vmatprep.subr.mxu0 0.0
  %4007 = vmatpush1.msra.mxu0 0.0
  %4008 = vmatprep.subr.mxu0 0.0
  %4009 = vmatpush1.msra.mxu0 0.0
  %4010 = vmatprep.subr.mxu0 0.0
  %4011 = vmatpush1.msra.mxu0 0.0
  %4012 = vmatprep.subr.mxu0 0.0
  %4013 = vmatpush1.msra.mxu0 0.0
  %4014 = vmatprep.subr.mxu0 0.0
  %4015 = vmatpush1.msra.mxu0 0.0
  %4016 = vmatprep.subr.mxu0 0.0
  %4017 = vmatpush1.msra.mxu0 0.0
  %4018 = vmatprep.mubr.f32.mxu0 0.0
  %4019 = vmatmul.mubr.f32.gmra.mrb[0].mxu0 %v3949
  %v4020 = vpop.f32.mrb[0].mxu0
  %v4021 = vadd.f32 0.0, %v4020
  %v4022 = vpop.f32.mrb[0].mxu0
  %4023 = vmatprep.mubr.f32.mxu0 0.0
  %4024 = vmatmul.mubr.f32.gmra.mrb[0].mxu0 %v3952
  %v4025 = vpop.f32.mrb[0].mxu0
  %v4026 = vadd.f32 0.0, %v4025
  %v4027 = vpop.f32.mrb[0].mxu0
  %4028 = vdwg.mxu0
  %v4030 = vsel %vm1283, %v3460, 0
  %v4033 = vsel %vm1283, %v3461, 0
  %4035 = vmatprep.subr.mxu0 0.0
  %4036 = vmatpush1.msra.mxu0 %v2550
  %4037 = vmatprep.subr.mxu0 0.0
  %4038 = vmatpush1.msra.mxu0 %v2555
  %4039 = vmatprep.subr.mxu0 0.0
  %4040 = vmatpush1.msra.mxu0 0.0
  %4041 = vmatprep.subr.mxu0 0.0
  %4042 = vmatpush1.msra.mxu0 0.0
  %4043 = vmatprep.subr.mxu0 0.0
  %4044 = vmatpush1.msra.mxu0 0.0
  %4045 = vmatprep.subr.mxu0 0.0
  %4046 = vmatpush1.msra.mxu0 0.0
  %4047 = vmatprep.subr.mxu0 0.0
  %4048 = vmatpush1.msra.mxu0 0.0
  %4049 = vmatprep.subr.mxu0 0.0
  %4050 = vmatpush1.msra.mxu0 0.0
  %4051 = vmatprep.subr.mxu0 0.0
  %4052 = vmatpush1.msra.mxu0 0.0
  %4053 = vmatprep.subr.mxu0 0.0
  %4054 = vmatpush1.msra.mxu0 0.0
  %4055 = vmatprep.subr.mxu0 0.0
  %4056 = vmatpush1.msra.mxu0 0.0
  %4057 = vmatprep.subr.mxu0 0.0
  %4058 = vmatpush1.msra.mxu0 0.0
  %4059 = vmatprep.subr.mxu0 0.0
  %4060 = vmatpush1.msra.mxu0 0.0
  %4061 = vmatprep.subr.mxu0 0.0
  %4062 = vmatpush1.msra.mxu0 0.0
  %4063 = vmatprep.subr.mxu0 0.0
  %4064 = vmatpush1.msra.mxu0 0.0
  %4065 = vmatprep.subr.mxu0 0.0
  %4066 = vmatpush1.msra.mxu0 0.0
  %4067 = vmatprep.subr.mxu0 0.0
  %4068 = vmatpush1.msra.mxu0 0.0
  %4069 = vmatprep.subr.mxu0 0.0
  %4070 = vmatpush1.msra.mxu0 0.0
  %4071 = vmatprep.subr.mxu0 0.0
  %4072 = vmatpush1.msra.mxu0 0.0
  %4073 = vmatprep.subr.mxu0 0.0
  %4074 = vmatpush1.msra.mxu0 0.0
  %4075 = vmatprep.subr.mxu0 0.0
  %4076 = vmatpush1.msra.mxu0 0.0
  %4077 = vmatprep.subr.mxu0 0.0
  %4078 = vmatpush1.msra.mxu0 0.0
  %4079 = vmatprep.subr.mxu0 0.0
  %4080 = vmatpush1.msra.mxu0 0.0
  %4081 = vmatprep.subr.mxu0 0.0
  %4082 = vmatpush1.msra.mxu0 0.0
  %4083 = vmatprep.subr.mxu0 0.0
  %4084 = vmatpush1.msra.mxu0 0.0
  %4085 = vmatprep.subr.mxu0 0.0
  %4086 = vmatpush1.msra.mxu0 0.0
  %4087 = vmatprep.subr.mxu0 0.0
  %4088 = vmatpush1.msra.mxu0 0.0
  %4089 = vmatprep.subr.mxu0 0.0
  %4090 = vmatpush1.msra.mxu0 0.0
  %4091 = vmatprep.subr.mxu0 0.0
  %4092 = vmatpush1.msra.mxu0 0.0
  %4093 = vmatprep.subr.mxu0 0.0
  %4094 = vmatpush1.msra.mxu0 0.0
  %4095 = vmatprep.subr.mxu0 0.0
  %4096 = vmatpush1.msra.mxu0 0.0
  %4097 = vmatprep.subr.mxu0 0.0
  %4098 = vmatpush1.msra.mxu0 0.0
  %4099 = vmatprep.mubr.f32.mxu0 0.0
  %4100 = vmatmul.mubr.f32.gmra.mrb[0].mxu0 %v4030
  %v4101 = vpop.f32.mrb[0].mxu0
  %v4102 = vadd.f32 0.0, %v4101
  %v4103 = vpop.f32.mrb[0].mxu0
  %4104 = vmatprep.mubr.f32.mxu0 0.0
  %4105 = vmatmul.mubr.f32.gmra.mrb[0].mxu0 %v4033
  %v4106 = vpop.f32.mrb[0].mxu0
  %v4107 = vadd.f32 0.0, %v4106
  %v4108 = vpop.f32.mrb[0].mxu0
  %4109 = vdwg.mxu0
  %4126 = vrot.lane.b32.xlu0 %v3535, 8
  %v4127 = vpop.permute.xlu0 %4126
  %4128 = vrot.lane.b32.xlu0 %v3540, 8
  %v4129 = vpop.permute.xlu0 %4128
  %4130 = vrot.lane.b32.xlu0 %v3616, 8
  %v4131 = vpop.permute.xlu0 %4130
  %4132 = vrot.lane.b32.xlu0 %v3621, 8
  %v4133 = vpop.permute.xlu0 %4132
  %4134 = vrot.lane.b32.xlu0 %v3697, 8
  %v4135 = vpop.permute.xlu0 %4134
  %4136 = vrot.lane.b32.xlu0 %v3702, 8
  %v4137 = vpop.permute.xlu0 %4136
  %4138 = vrot.lane.b32.xlu0 %v3778, 8
  %v4139 = vpop.permute.xlu0 %4138
  %4140 = vrot.lane.b32.xlu0 %v3783, 8
  %v4141 = vpop.permute.xlu0 %4140
  %4142 = vrot.lane.b32.xlu0 %v3859, 8
  %v4143 = vpop.permute.xlu0 %4142
  %4144 = vrot.lane.b32.xlu0 %v3864, 8
  %v4145 = vpop.permute.xlu0 %4144
  %4146 = vrot.lane.b32.xlu0 %v3940, 8
  %v4147 = vpop.permute.xlu0 %4146
  %4148 = vrot.lane.b32.xlu0 %v3945, 8
  %v4149 = vpop.permute.xlu0 %4148
  %4150 = vrot.lane.b32.xlu0 %v4021, 8
  %v4151 = vpop.permute.xlu0 %4150
  %4152 = vrot.lane.b32.xlu0 %v4026, 8
  %v4153 = vpop.permute.xlu0 %4152
  %4154 = vrot.lane.b32.xlu0 %v4102, 8
  %v4155 = vpop.permute.xlu0 %4154
  %4156 = vrot.lane.b32.xlu0 %v4107, 8
  %v4157 = vpop.permute.xlu0 %4156
  %v4174 = vsel %vm554, %v1533, %v4127
  %v4175 = vsel %vm554, %v1538, %v4129
  %v4176 = vsel %vm554, %v1614, %v4131
  %v4177 = vsel %vm554, %v1619, %v4133
  %v4178 = vsel %vm554, %v1695, %v4135
  %v4179 = vsel %vm554, %v1700, %v4137
  %v4180 = vsel %vm554, %v1776, %v4139
  %v4181 = vsel %vm554, %v1781, %v4141
  %v4182 = vsel %vm554, %v1857, %v4143
  %v4183 = vsel %vm554, %v1862, %v4145
  %v4184 = vsel %vm554, %v1938, %v4147
  %v4185 = vsel %vm554, %v1943, %v4149
  %v4186 = vsel %vm554, %v2019, %v4151
  %v4187 = vsel %vm554, %v2024, %v4153
  %v4188 = vsel %vm554, %v2100, %v4155
  %v4189 = vsel %vm554, %v2105, %v4157
  %v4190 = vld [vmem:[%s4] sm:$0xff]
  %v4191 = vld [vmem:[%s4 + $0x8] sm:$0xff]
  %v4192 = vld [vmem:[%s5] sm:$0x1]
  %v4194 = vlaneseq
  %v4195 = vshrl.u32 %v4194, 7
  %v4196 = vsub.s32 0, %v4195
  %v4197 = vrot.slane %v4192, %v4196
  %v4200 = vsel %vm1283, %v4174, 0
  %v4203 = vsel %vm1283, %v4175, 0
  %v4206 = vsel %vm1283, %v4176, 0
  %v4209 = vsel %vm1283, %v4177, 0
  %v4212 = vsel %vm1283, %v4178, 0
  %v4215 = vsel %vm1283, %v4179, 0
  %v4218 = vsel %vm1283, %v4180, 0
  %v4221 = vsel %vm1283, %v4181, 0
  %v4224 = vsel %vm1283, %v4182, 0
  %v4227 = vsel %vm1283, %v4183, 0
  %v4230 = vsel %vm1283, %v4184, 0
  %v4233 = vsel %vm1283, %v4185, 0
  %v4236 = vsel %vm1283, %v4186, 0
  %v4239 = vsel %vm1283, %v4187, 0
  %v4242 = vsel %vm1283, %v4188, 0
  %v4245 = vsel %vm1283, %v4189, 0
  %4247 = vmatprep.subr.mxu0 0.0
  %4248 = vmatpush1.msra.mxu0 %v4190
  %4249 = vmatprep.subr.mxu0 0.0
  %4250 = vmatpush1.msra.mxu0 %v4191
  %4251 = vmatprep.subr.mxu0 0.0
  %4252 = vmatpush1.msra.mxu0 0.0
  %4253 = vmatprep.subr.mxu0 0.0
  %4254 = vmatpush1.msra.mxu0 0.0
  %4255 = vmatprep.subr.mxu0 0.0
  %4256 = vmatpush1.msra.mxu0 0.0
  %4257 = vmatprep.subr.mxu0 0.0
  %4258 = vmatpush1.msra.mxu0 0.0
  %4259 = vmatprep.subr.mxu0 0.0
  %4260 = vmatpush1.msra.mxu0 0.0
  %4261 = vmatprep.subr.mxu0 0.0
  %4262 = vmatpush1.msra.mxu0 0.0
  %4263 = vmatprep.subr.mxu0 0.0
  %4264 = vmatpush1.msra.mxu0 0.0
  %4265 = vmatprep.subr.mxu0 0.0
  %4266 = vmatpush1.msra.mxu0 0.0
  %4267 = vmatprep.subr.mxu0 0.0
  %4268 = vmatpush1.msra.mxu0 0.0
  %4269 = vmatprep.subr.mxu0 0.0
  %4270 = vmatpush1.msra.mxu0 0.0
  %4271 = vmatprep.subr.mxu0 0.0
  %4272 = vmatpush1.msra.mxu0 0.0
  %4273 = vmatprep.subr.mxu0 0.0
  %4274 = vmatpush1.msra.mxu0 0.0
  %4275 = vmatprep.subr.mxu0 0.0
  %4276 = vmatpush1.msra.mxu0 0.0
  %4277 = vmatprep.subr.mxu0 0.0
  %4278 = vmatpush1.msra.mxu0 0.0
  %4279 = vmatprep.subr.mxu0 0.0
  %4280 = vmatpush1.msra.mxu0 0.0
  %4281 = vmatprep.subr.mxu0 0.0
  %4282 = vmatpush1.msra.mxu0 0.0
  %4283 = vmatprep.subr.mxu0 0.0
  %4284 = vmatpush1.msra.mxu0 0.0
  %4285 = vmatprep.subr.mxu0 0.0
  %4286 = vmatpush1.msra.mxu0 0.0
  %4287 = vmatprep.subr.mxu0 0.0
  %4288 = vmatpush1.msra.mxu0 0.0
  %4289 = vmatprep.subr.mxu0 0.0
  %4290 = vmatpush1.msra.mxu0 0.0
  %4291 = vmatprep.subr.mxu0 0.0
  %4292 = vmatpush1.msra.mxu0 0.0
  %4293 = vmatprep.subr.mxu0 0.0
  %4294 = vmatpush1.msra.mxu0 0.0
  %4295 = vmatprep.subr.mxu0 0.0
  %4296 = vmatpush1.msra.mxu0 0.0
  %4297 = vmatprep.subr.mxu0 0.0
  %4298 = vmatpush1.msra.mxu0 0.0
  %4299 = vmatprep.subr.mxu0 0.0
  %4300 = vmatpush1.msra.mxu0 0.0
  %4301 = vmatprep.subr.mxu0 0.0
  %4302 = vmatpush1.msra.mxu0 0.0
  %4303 = vmatprep.subr.mxu0 0.0
  %4304 = vmatpush1.msra.mxu0 0.0
  %4305 = vmatprep.subr.mxu0 0.0
  %4306 = vmatpush1.msra.mxu0 0.0
  %4307 = vmatprep.subr.mxu0 0.0
  %4308 = vmatpush1.msra.mxu0 0.0
  %4309 = vmatprep.subr.mxu0 0.0
  %4310 = vmatpush1.msra.mxu0 0.0
  %4311 = vmatprep.mubr.f32.mxu0 0.0
  %4312 = vmatmul.mubr.f32.gmra.mrb[0].mxu0 %v4200
  %v4313 = vpop.f32.mrb[0].mxu0
  %v4314 = vadd.f32 %v4197, %v4313
  %v4315 = vpop.f32.mrb[0].mxu0
  %4316 = vmatprep.mubr.f32.mxu0 0.0
  %4317 = vmatmul.mubr.f32.gmra.mrb[0].mxu0 %v4203
  %v4318 = vpop.f32.mrb[0].mxu0
  %v4319 = vadd.f32 %v4197, %v4318
  %v4320 = vpop.f32.mrb[0].mxu0
  %4321 = vmatprep.mubr.f32.mxu0 0.0
  %4322 = vmatmul.mubr.f32.gmra.mrb[0].mxu0 %v4206
  %v4323 = vpop.f32.mrb[0].mxu0
  %v4324 = vadd.f32 %v4197, %v4323
  %v4325 = vpop.f32.mrb[0].mxu0
  %4326 = vmatprep.mubr.f32.mxu0 0.0
  %4327 = vmatmul.mubr.f32.gmra.mrb[0].mxu0 %v4209
  %v4328 = vpop.f32.mrb[0].mxu0
  %v4329 = vadd.f32 %v4197, %v4328
  %v4330 = vpop.f32.mrb[0].mxu0
  %4331 = vmatprep.mubr.f32.mxu0 0.0
  %4332 = vmatmul.mubr.f32.gmra.mrb[0].mxu0 %v4212
  %v4333 = vpop.f32.mrb[0].mxu0
  %v4334 = vadd.f32 %v4197, %v4333
  %v4335 = vpop.f32.mrb[0].mxu0
  %4336 = vmatprep.mubr.f32.mxu0 0.0
  %4337 = vmatmul.mubr.f32.gmra.mrb[0].mxu0 %v4215
  %v4338 = vpop.f32.mrb[0].mxu0
  %v4339 = vadd.f32 %v4197, %v4338
  %v4340 = vpop.f32.mrb[0].mxu0
  %4341 = vmatprep.mubr.f32.mxu0 0.0
  %4342 = vmatmul.mubr.f32.gmra.mrb[0].mxu0 %v4218
  %v4343 = vpop.f32.mrb[0].mxu0
  %v4344 = vadd.f32 %v4197, %v4343
  %v4345 = vpop.f32.mrb[0].mxu0
  %4346 = vmatprep.mubr.f32.mxu0 0.0
  %4347 = vmatmul.mubr.f32.gmra.mrb[0].mxu0 %v4221
  %v4348 = vpop.f32.mrb[0].mxu0
  %v4349 = vadd.f32 %v4197, %v4348
  %v4350 = vpop.f32.mrb[0].mxu0
  %4351 = vmatprep.mubr.f32.mxu0 0.0
  %4352 = vmatmul.mubr.f32.gmra.mrb[0].mxu0 %v4224
  %v4353 = vpop.f32.mrb[0].mxu0
  %v4354 = vadd.f32 %v4197, %v4353
  %v4355 = vpop.f32.mrb[0].mxu0
  %4356 = vmatprep.mubr.f32.mxu0 0.0
  %4357 = vmatmul.mubr.f32.gmra.mrb[0].mxu0 %v4227
  %v4358 = vpop.f32.mrb[0].mxu0
  %v4359 = vadd.f32 %v4197, %v4358
  %v4360 = vpop.f32.mrb[0].mxu0
  %4361 = vmatprep.mubr.f32.mxu0 0.0
  %4362 = vmatmul.mubr.f32.gmra.mrb[0].mxu0 %v4230
  %v4363 = vpop.f32.mrb[0].mxu0
  %v4364 = vadd.f32 %v4197, %v4363
  %v4365 = vpop.f32.mrb[0].mxu0
  %4366 = vmatprep.mubr.f32.mxu0 0.0
  %4367 = vmatmul.mubr.f32.gmra.mrb[0].mxu0 %v4233
  %v4368 = vpop.f32.mrb[0].mxu0
  %v4369 = vadd.f32 %v4197, %v4368
  %v4370 = vpop.f32.mrb[0].mxu0
  %4371 = vmatprep.mubr.f32.mxu0 0.0
  %4372 = vmatmul.mubr.f32.gmra.mrb[0].mxu0 %v4236
  %v4373 = vpop.f32.mrb[0].mxu0
  %v4374 = vadd.f32 %v4197, %v4373
  %v4375 = vpop.f32.mrb[0].mxu0
  %4376 = vmatprep.mubr.f32.mxu0 0.0
  %4377 = vmatmul.mubr.f32.gmra.mrb[0].mxu0 %v4239
  %v4378 = vpop.f32.mrb[0].mxu0
  %v4379 = vadd.f32 %v4197, %v4378
  %v4380 = vpop.f32.mrb[0].mxu0
  %4381 = vmatprep.mubr.f32.mxu0 0.0
  %4382 = vmatmul.mubr.f32.gmra.mrb[0].mxu0 %v4242
  %v4383 = vpop.f32.mrb[0].mxu0
  %v4384 = vadd.f32 %v4197, %v4383
  %v4385 = vpop.f32.mrb[0].mxu0
  %4386 = vmatprep.mubr.f32.mxu0 0.0
  %4387 = vmatmul.mubr.f32.gmra.mrb[0].mxu0 %v4245
  %v4388 = vpop.f32.mrb[0].mxu0
  %v4389 = vadd.f32 %v4197, %v4388
  %v4390 = vpop.f32.mrb[0].mxu0
  %4391 = vdwg.mxu0
  %4392 = vst.msk [vmem:[%s7] sm:$0xff] %vm62, %v4314
  %4393 = vst.msk [vmem:[%s7 + $0x8] sm:$0xff] %vm62, %v4319
  %4394 = vst.msk [vmem:[%s7 + $0x10] sm:$0xff] %vm62, %v4324
  %4395 = vst.msk [vmem:[%s7 + $0x18] sm:$0xff] %vm62, %v4329
  %4396 = vst.msk [vmem:[%s7 + $0x20] sm:$0xff] %vm62, %v4334
  %4397 = vst.msk [vmem:[%s7 + $0x28] sm:$0xff] %vm62, %v4339
  %4398 = vst.msk [vmem:[%s7 + $0x30] sm:$0xff] %vm62, %v4344
  %4399 = vst.msk [vmem:[%s7 + $0x38] sm:$0xff] %vm62, %v4349
  %4400 = vst.msk [vmem:[%s7 + $0x40] sm:$0xff] %vm62, %v4354
  %4401 = vst.msk [vmem:[%s7 + $0x48] sm:$0xff] %vm62, %v4359
  %4402 = vst.msk [vmem:[%s7 + $0x50] sm:$0xff] %vm62, %v4364
  %4403 = vst.msk [vmem:[%s7 + $0x58] sm:$0xff] %vm62, %v4369
  %4404 = vst.msk [vmem:[%s7 + $0x60] sm:$0xff] %vm62, %v4374
  %4405 = vst.msk [vmem:[%s7 + $0x68] sm:$0xff] %vm62, %v4379
  %4406 = vst.msk [vmem:[%s7 + $0x70] sm:$0xff] %vm62, %v4384
  %4407 = vst.msk [vmem:[%s7 + $0x78] sm:$0xff] %vm62, %v4389
  // Predicated region
  $region30: #{window_attention_forward.1} parent=0 // pred_check
    _
  $region31: #{window_attention_forward.1} parent=0 // pred_check_branch
    %4409 = sbr.rel (0) target = $region33
  $region32: #{window_attention_forward.1} parent=0 // pred_region
    _
  $region33: #{window_attention_forward.1} parent=0 // pred_fallthru
    _
  // Predicated region
  $region34: #{window_attention_forward.1} parent=0 // pred_check
    _
  $region35: #{window_attention_forward.1} parent=0 // pred_check_branch
    %4411 = sbr.rel (0) target = $region37
  $region36: #{window_attention_forward.1} parent=0 // pred_region
    _
  $region37: #{window_attention_forward.1} parent=0 // pred_fallthru
    _

</llo_original>
